<compile_context>
chip_gen: v7x
topology: tpu7x:2x2x1
jax: 0.10.0
libtpu: 0.0.40
codegen_flags: <defaults>
</compile_context>

<pallas_src>
import math

import jax
import jax.numpy as jnp
from jax import lax
from jax.experimental import pallas as pl
from jax.experimental.pallas import tpu as pltpu


# ----------------------------- config (small, synthetic) -----------------------------
class Config:
    num_layers = 2
    n_head = 4
    d_model = 32
    vocab_size = 50
    max_enc_len = 16
    d_affine = 64
    embedding_dropout = 0.0
    att_dropout = 0.0
    fc_dorpout = 0.0


config = Config()
d_q = config.d_model // config.n_head
d_k = d_q
d_v = d_q
PAD_ID = 0
LN_EPS = 1e-5
ATTN_SCALE = 1.0 / math.sqrt(d_k)


# --------------------------------- fused Pallas kernel --------------------------------
def _layer_norm(y, g, b):
    mean = jnp.mean(y, axis=-1, keepdims=True)
    var = jnp.mean((y - mean) ** 2, axis=-1, keepdims=True)
    return (y - mean) * lax.rsqrt(var + LN_EPS) * g + b


def _encoder_kernel(x_ref, bias_ref,
                    wqkv_ref, bqkv_ref, wo_ref, bo_ref,
                    ln1g_ref, ln1b_ref,
                    w1_ref, b1_ref, w2_ref, b2_ref,
                    ln2g_ref, ln2b_ref, wh_ref,
                    out_ref, feat_ref):
    L = wqkv_ref.shape[0]
    H = config.n_head
    S = x_ref.shape[1]
    D = x_ref.shape[2]
    HK = H * d_k

    x = x_ref[0]                  # (S, D) activations for this batch row
    bias = bias_ref[0]            # (1, S) additive key-padding mask

    for l in range(L):            # static unroll over layers (L = 2)
        # --- fused QKV projection: one lane-dense MXU pass (D -> 3*H*d_k) ---
        qkv = jnp.dot(x, wqkv_ref[l], preferred_element_type=jnp.float32) + bqkv_ref[l]
        q = qkv[:, :HK] * ATTN_SCALE          # fold 1/sqrt(d_k) into q
        k = qkv[:, HK:2 * HK]
        v = qkv[:, 2 * HK:]

        wo = wo_ref[l]                        # (H*d_v, D)
        attn = jnp.zeros((S, D), jnp.float32)
        for h in range(H):                    # static unroll over heads (H = 4)
            qh = q[:, h * d_k:(h + 1) * d_k]  # (S, d_k)
            kh = k[:, h * d_k:(h + 1) * d_k]  # (S, d_k)
            vh = v[:, h * d_v:(h + 1) * d_v]  # (S, d_v)
            # Q @ K^T without an explicit transpose: contract on the last dims.
            s = lax.dot_general(qh, kh, (((1,), (1,)), ((), ())),
                                preferred_element_type=jnp.float32)      # (S, S)
            s = s + bias                                                 # key-padding mask
            s = s - jnp.max(s, axis=-1, keepdims=True)
            p = jnp.exp(s)
            p = p * pl.reciprocal(jnp.sum(p, axis=-1, keepdims=True), approx=True)
            ctx_h = jnp.dot(p, vh, preferred_element_type=jnp.float32)   # (S, d_v)
            # Fuse the per-head slice of the output projection (== concat(ctx) @ wo).
            attn = attn + jnp.dot(ctx_h, wo[h * d_v:(h + 1) * d_v, :],
                                  preferred_element_type=jnp.float32)
        attn = attn + bo_ref[l]

        x = _layer_norm(attn + x, ln1g_ref[l], ln1b_ref[l])

        # --- position-wise feed-forward (matmul + bias + ReLU fused epilogue) ---
        hdn = jnp.maximum(
            jnp.dot(x, w1_ref[l], preferred_element_type=jnp.float32) + b1_ref[l], 0.0)
        ff = jnp.dot(hdn, w2_ref[l], preferred_element_type=jnp.float32) + b2_ref[l]
        x = _layer_norm(ff + x, ln2g_ref[l], ln2b_ref[l])

    out_ref[0] = x
    # W_h: Linear(d_model, d_model, bias=False)
    feat_ref[0] = jnp.dot(x, wh_ref[...], preferred_element_type=jnp.float32)


def _full_spec(arr):
    """BlockSpec covering the whole array, constant across the batch grid (DMA dedup)."""
    nd = arr.ndim
    return pl.BlockSpec(arr.shape, lambda b, _nd=nd: (0,) * _nd)


def pointer_encoder_pallas(x_emb, bias, fp):
    """x_emb: [B, S, D] f32, bias: [B, 1, S] f32, fp: fused/stacked params."""
    B, S, D = x_emb.shape
    weight_args = (fp["wqkv"], fp["bqkv"], fp["wo"], fp["bo"],
                   fp["ln1_g"], fp["ln1_b"], fp["w1"], fp["b1"],
                   fp["w2"], fp["b2"], fp["ln2_g"], fp["ln2_b"], fp["W_h"])

    in_specs = [
        pl.BlockSpec((1, S, D), lambda b: (b, 0, 0)),   # activations for batch b
        pl.BlockSpec((1, 1, S), lambda b: (b, 0, 0)),   # key-padding bias for batch b
    ] + [_full_spec(w) for w in weight_args]

    out_specs = (
        pl.BlockSpec((1, S, D), lambda b: (b, 0, 0)),
        pl.BlockSpec((1, S, D), lambda b: (b, 0, 0)),
    )
    out_shape = (
        jax.ShapeDtypeStruct((B, S, D), jnp.float32),
        jax.ShapeDtypeStruct((B, S, D), jnp.float32),
    )

    return pl.pallas_call(
        _encoder_kernel,
        out_shape=out_shape,
        grid=(B,),
        in_specs=in_specs,
        out_specs=out_specs,
        compiler_params=pltpu.CompilerParams(dimension_semantics=("parallel",)),
    )(x_emb, bias, *weight_args)


# ------------------------------ parameters / embeddings --------------------------------
def sinusoidal_pos_enc(max_len, d_model):
    pos = jnp.arange(max_len, dtype=jnp.float32)[:, None]
    i = jnp.arange(d_model, dtype=jnp.float32)[None, :]
    angle_rates = 1.0 / jnp.power(10000.0, (2.0 * jnp.floor(i / 2.0)) / d_model)
    angles = pos * angle_rates
    even = (jnp.arange(d_model) % 2 == 0)[None, :]
    return jnp.where(even, jnp.sin(angles), jnp.cos(angles)).astype(jnp.float32)


def init_params(key):
    D, H, A, V = config.d_model, config.n_head, config.d_affine, config.vocab_size
    scale = 0.02

    def nrm(k, shape):
        return jax.random.normal(k, shape, dtype=jnp.float32) * scale

    keys = jax.random.split(key, 2 + config.num_layers)
    params = {
        "tok_emb": nrm(keys[0], (V, D)),
        "pos_enc": sinusoidal_pos_enc(config.max_enc_len, D),
        "W_h": nrm(keys[1], (D, D)),  # [in, out]; bias=False matches the PyTorch module
        "layers": [],
    }
    for l in range(config.num_layers):
        lk = jax.random.split(keys[2 + l], 6)
        params["layers"].append(
            {
                "wq": nrm(lk[0], (D, H * d_k)), "bq": jnp.zeros((H * d_k,), jnp.float32),
                "wk": nrm(lk[1], (D, H * d_k)), "bk": jnp.zeros((H * d_k,), jnp.float32),
                "wv": nrm(lk[2], (D, H * d_v)), "bv": jnp.zeros((H * d_v,), jnp.float32),
                "wo": nrm(lk[3], (H * d_v, D)), "bo": jnp.zeros((D,), jnp.float32),
                "ln1_g": jnp.ones((D,), jnp.float32), "ln1_b": jnp.zeros((D,), jnp.float32),
                "w1": nrm(lk[4], (D, A)), "b1": jnp.zeros((A,), jnp.float32),
                "w2": nrm(lk[5], (A, D)), "b2": jnp.zeros((D,), jnp.float32),
                "ln2_g": jnp.ones((D,), jnp.float32), "ln2_b": jnp.zeros((D,), jnp.float32),
            }
        )
    return params


def pack_params(params):
    """Stack per-layer weights into [L, ...] arrays and fuse QKV. Done once, outside forward."""
    layers = params["layers"]
    row = lambda v: v[None, :]   # [N] -> [1, N] so the kernel gets broadcastable (1, N) tiles
    return {
        "wqkv": jnp.stack([jnp.concatenate([lp["wq"], lp["wk"], lp["wv"]], axis=1)
                           for lp in layers]),                                  # (L, D, 3*H*d_k)
        "bqkv": jnp.stack([row(jnp.concatenate([lp["bq"], lp["bk"], lp["bv"]]))
                           for lp in layers]),                                  # (L, 1, 3*H*d_k)
        "wo": jnp.stack([lp["wo"] for lp in layers]),                           # (L, H*d_v, D)
        "bo": jnp.stack([row(lp["bo"]) for lp in layers]),                      # (L, 1, D)
        "ln1_g": jnp.stack([row(lp["ln1_g"]) for lp in layers]),
        "ln1_b": jnp.stack([row(lp["ln1_b"]) for lp in layers]),
        "w1": jnp.stack([lp["w1"] for lp in layers]),                           # (L, D, A)
        "b1": jnp.stack([row(lp["b1"]) for lp in layers]),                      # (L, 1, A)
        "w2": jnp.stack([lp["w2"] for lp in layers]),                           # (L, A, D)
        "b2": jnp.stack([row(lp["b2"]) for lp in layers]),
        "ln2_g": jnp.stack([row(lp["ln2_g"]) for lp in layers]),
        "ln2_b": jnp.stack([row(lp["ln2_b"]) for lp in layers]),
        "W_h": params["W_h"],
        "tok_emb": params["tok_emb"],
        "pos_enc": params["pos_enc"],
    }


# ------------------------------------ forward ------------------------------------------
@jax.jit
def pointer_encoder_forward(fp, inputs):
    """inputs: [B, S] int32 token ids. Returns (enc_output, enc_feature), both [B, S, D]."""
    B, S = inputs.shape
    D = config.d_model

    # Embedding gather + positional encoding (plain-JAX glue; data-dependent gather).
    # TODO(synk): embedding lookup stays in XLA — an in-kernel gather would need scalar-prefetch
    # Element index maps, which is overkill at this size.
    x = fp["tok_emb"][inputs] * math.sqrt(D) + fp["pos_enc"][:S][None, :, :]
    x = x.astype(jnp.float32)
    # dropout(embedding_dropout / att_dropout / fc_dropout) are identity in eval mode.

    # Key-padding mask as additive bias on attention scores; no per-head repeat.
    pad = inputs == PAD_ID                                              # [B, S]
    bias = jnp.where(pad, -1e9, 0.0).astype(jnp.float32)[:, None, :]    # [B, 1, S]

    return pointer_encoder_pallas(x, bias, fp)


# -------------------------------------- main --------------------------------------------
if __name__ == "__main__":
    key = jax.random.PRNGKey(0)
    pkey, ikey = jax.random.split(key)
    params = init_params(pkey)
    fused_params = pack_params(params)

    B, S = 2, 8
    inputs = jax.random.randint(ikey, (B, S), 1, config.vocab_size, dtype=jnp.int32)
    inputs = inputs.at[1, -2:].set(PAD_ID)  # include some padding to exercise the mask

    enc_output, enc_feature = pointer_encoder_forward(fused_params, inputs)
    jax.block_until_ready((enc_output, enc_feature))

    assert enc_output.shape == (B, S, config.d_model)
    assert enc_feature.shape == (B, S, config.d_model)
    assert bool(jnp.all(jnp.isfinite(enc_output))) and bool(jnp.all(jnp.isfinite(enc_feature)))
    print("KERNEL_OK")
</pallas_src>

<mosaic_0001>
module attributes {stable_mosaic.version = 11 : i64} {
  func.func @_encoder_kernel(%arg0: i32, %arg1: memref<1x8x32xf32, #tpu.memory_space<vmem>>, %arg2: memref<1x1x8xf32, #tpu.memory_space<vmem>>, %arg3: memref<2x32x96xf32, #tpu.memory_space<vmem>>, %arg4: memref<2x1x96xf32, #tpu.memory_space<vmem>>, %arg5: memref<2x32x32xf32, #tpu.memory_space<vmem>>, %arg6: memref<2x1x32xf32, #tpu.memory_space<vmem>>, %arg7: memref<2x1x32xf32, #tpu.memory_space<vmem>>, %arg8: memref<2x1x32xf32, #tpu.memory_space<vmem>>, %arg9: memref<2x32x64xf32, #tpu.memory_space<vmem>>, %arg10: memref<2x1x64xf32, #tpu.memory_space<vmem>>, %arg11: memref<2x64x32xf32, #tpu.memory_space<vmem>>, %arg12: memref<2x1x32xf32, #tpu.memory_space<vmem>>, %arg13: memref<2x1x32xf32, #tpu.memory_space<vmem>>, %arg14: memref<2x1x32xf32, #tpu.memory_space<vmem>>, %arg15: memref<32x32xf32, #tpu.memory_space<vmem>>, %arg16: memref<1x8x32xf32, #tpu.memory_space<vmem>>, %arg17: memref<1x8x32xf32, #tpu.memory_space<vmem>>) attributes {dimension_semantics = [#tpu.dimension_semantics<parallel>], iteration_bounds = array<i64: 2>, scalar_prefetch = 0 : i64, scratch_operands = 0 : i64, tpu.core_type = #tpu.core_type<tc>, window_params = [{transform_indices = @transform_0, window_bounds = array<i64: 1, 8, 32>}, {transform_indices = @transform_1, window_bounds = array<i64: 1, 1, 8>}, {pipeline_mode = #tpu.pipeline_mode<synchronous>, transform_indices = @transform_2, window_bounds = array<i64: 2, 32, 96>}, {pipeline_mode = #tpu.pipeline_mode<synchronous>, transform_indices = @transform_3, window_bounds = array<i64: 2, 1, 96>}, {pipeline_mode = #tpu.pipeline_mode<synchronous>, transform_indices = @transform_4, window_bounds = array<i64: 2, 32, 32>}, {pipeline_mode = #tpu.pipeline_mode<synchronous>, transform_indices = @transform_5, window_bounds = array<i64: 2, 1, 32>}, {pipeline_mode = #tpu.pipeline_mode<synchronous>, transform_indices = @transform_6, window_bounds = array<i64: 2, 1, 32>}, {pipeline_mode = #tpu.pipeline_mode<synchronous>, transform_indices = @transform_7, window_bounds = array<i64: 2, 1, 32>}, {pipeline_mode = #tpu.pipeline_mode<synchronous>, transform_indices = @transform_8, window_bounds = array<i64: 2, 32, 64>}, {pipeline_mode = #tpu.pipeline_mode<synchronous>, transform_indices = @transform_9, window_bounds = array<i64: 2, 1, 64>}, {pipeline_mode = #tpu.pipeline_mode<synchronous>, transform_indices = @transform_10, window_bounds = array<i64: 2, 64, 32>}, {pipeline_mode = #tpu.pipeline_mode<synchronous>, transform_indices = @transform_11, window_bounds = array<i64: 2, 1, 32>}, {pipeline_mode = #tpu.pipeline_mode<synchronous>, transform_indices = @transform_12, window_bounds = array<i64: 2, 1, 32>}, {pipeline_mode = #tpu.pipeline_mode<synchronous>, transform_indices = @transform_13, window_bounds = array<i64: 2, 1, 32>}, {pipeline_mode = #tpu.pipeline_mode<synchronous>, transform_indices = @transform_14, window_bounds = array<i64: 32, 32>}, {transform_indices = @transform_15, window_bounds = array<i64: 1, 8, 32>}, {transform_indices = @transform_16, window_bounds = array<i64: 1, 8, 32>}]} {
    %c0 = arith.constant 0 : index
    %c0_0 = arith.constant 0 : index
    %c0_1 = arith.constant 0 : index
    %0 = vector.load %arg1[%c0, %c0_0, %c0_1] : memref<1x8x32xf32, #tpu.memory_space<vmem>>, vector<1x8x32xf32>
    %1 = vector.shape_cast %0 : vector<1x8x32xf32> to vector<8x32xf32>
    %c0_2 = arith.constant 0 : index
    %c0_3 = arith.constant 0 : index
    %c0_4 = arith.constant 0 : index
    %2 = vector.load %arg2[%c0_2, %c0_3, %c0_4] : memref<1x1x8xf32, #tpu.memory_space<vmem>>, vector<1x1x8xf32>
    %3 = vector.shape_cast %2 : vector<1x1x8xf32> to vector<1x8xf32>
    %c0_5 = arith.constant 0 : index
    %c0_6 = arith.constant 0 : index
    %c0_7 = arith.constant 0 : index
    %4 = vector.load %arg3[%c0_5, %c0_6, %c0_7] : memref<2x32x96xf32, #tpu.memory_space<vmem>>, vector<1x32x96xf32>
    %5 = vector.shape_cast %4 : vector<1x32x96xf32> to vector<32x96xf32>
    %cst = arith.constant dense<0.000000e+00> : vector<8x96xf32>
    %6 = tpu.matmul %1, %5, %cst {dimension_numbers = #tpu.dot_dimension_numbers<[1], [0], [0], [1], [0, 0, 1, 1], [], []>} : vector<8x32xf32>, vector<32x96xf32>, vector<8x96xf32> -> vector<8x96xf32>
    %c0_8 = arith.constant 0 : index
    %c0_9 = arith.constant 0 : index
    %c0_10 = arith.constant 0 : index
    %7 = vector.load %arg4[%c0_8, %c0_9, %c0_10] : memref<2x1x96xf32, #tpu.memory_space<vmem>>, vector<1x1x96xf32>
    %8 = vector.shape_cast %7 : vector<1x1x96xf32> to vector<1x96xf32>
    %9 = vector.broadcast %8 : vector<1x96xf32> to vector<8x96xf32>
    %10 = arith.addf %6, %9 : vector<8x96xf32>
    %11 = vector.extract_strided_slice %10 {offsets = [0, 0], sizes = [8, 32], strides = [1, 1]} : vector<8x96xf32> to vector<8x32xf32>
    %cst_11 = arith.constant 0.353553385 : f32
    %12 = vector.broadcast %cst_11 : f32 to vector<8x32xf32>
    %13 = arith.mulf %11, %12 : vector<8x32xf32>
    %14 = vector.extract_strided_slice %10 {offsets = [0, 32], sizes = [8, 32], strides = [1, 1]} : vector<8x96xf32> to vector<8x32xf32>
    %15 = vector.extract_strided_slice %10 {offsets = [0, 64], sizes = [8, 32], strides = [1, 1]} : vector<8x96xf32> to vector<8x32xf32>
    %c0_12 = arith.constant 0 : index
    %c0_13 = arith.constant 0 : index
    %c0_14 = arith.constant 0 : index
    %16 = vector.load %arg5[%c0_12, %c0_13, %c0_14] : memref<2x32x32xf32, #tpu.memory_space<vmem>>, vector<1x32x32xf32>
    %17 = vector.shape_cast %16 : vector<1x32x32xf32> to vector<32x32xf32>
    %cst_15 = arith.constant 0.000000e+00 : f32
    %18 = vector.broadcast %cst_15 : f32 to vector<8x32xf32>
    %19 = vector.extract_strided_slice %13 {offsets = [0, 0], sizes = [8, 8], strides = [1, 1]} : vector<8x32xf32> to vector<8x8xf32>
    %20 = vector.extract_strided_slice %14 {offsets = [0, 0], sizes = [8, 8], strides = [1, 1]} : vector<8x32xf32> to vector<8x8xf32>
    %21 = vector.extract_strided_slice %15 {offsets = [0, 0], sizes = [8, 8], strides = [1, 1]} : vector<8x32xf32> to vector<8x8xf32>
    %cst_16 = arith.constant dense<0.000000e+00> : vector<8x8xf32>
    %22 = tpu.matmul %19, %20, %cst_16 {dimension_numbers = #tpu.dot_dimension_numbers<[1], [1], [0], [0], [0, 0, 1, 0], [], []>} : vector<8x8xf32>, vector<8x8xf32>, vector<8x8xf32> -> vector<8x8xf32>
    %23 = vector.broadcast %3 : vector<1x8xf32> to vector<8x8xf32>
    %24 = arith.addf %22, %23 : vector<8x8xf32>
    %cst_17 = arith.constant dense<0xFF800000> : vector<8xf32>
    %25 = vector.multi_reduction <maximumf>, %24, %cst_17 [1] : vector<8x8xf32> to vector<8xf32>
    %26 = vector.shape_cast %25 : vector<8xf32> to vector<8x1xf32>
    %27 = vector.broadcast %26 : vector<8x1xf32> to vector<8x8xf32>
    %28 = arith.subf %24, %27 : vector<8x8xf32>
    %29 = math.exp %28 : vector<8x8xf32>
    %cst_18 = arith.constant dense<0.000000e+00> : vector<8xf32>
    %30 = vector.multi_reduction <add>, %29, %cst_18 [1] : vector<8x8xf32> to vector<8xf32>
    %31 = vector.shape_cast %30 : vector<8xf32> to vector<8x1xf32>
    %32 = tpu.reciprocal %31 {approx = true} : vector<8x1xf32> -> vector<8x1xf32>
    %33 = vector.broadcast %32 : vector<8x1xf32> to vector<8x8xf32>
    %34 = arith.mulf %29, %33 : vector<8x8xf32>
    %cst_19 = arith.constant dense<0.000000e+00> : vector<8x8xf32>
    %35 = tpu.matmul %34, %21, %cst_19 {dimension_numbers = #tpu.dot_dimension_numbers<[1], [0], [0], [1], [0, 0, 1, 1], [], []>} : vector<8x8xf32>, vector<8x8xf32>, vector<8x8xf32> -> vector<8x8xf32>
    %36 = vector.extract_strided_slice %17 {offsets = [0, 0], sizes = [8, 32], strides = [1, 1]} : vector<32x32xf32> to vector<8x32xf32>
    %cst_20 = arith.constant dense<0.000000e+00> : vector<8x32xf32>
    %37 = tpu.matmul %35, %36, %cst_20 {dimension_numbers = #tpu.dot_dimension_numbers<[1], [0], [0], [1], [0, 0, 1, 1], [], []>} : vector<8x8xf32>, vector<8x32xf32>, vector<8x32xf32> -> vector<8x32xf32>
    %38 = arith.addf %18, %37 : vector<8x32xf32>
    %39 = vector.extract_strided_slice %13 {offsets = [0, 8], sizes = [8, 8], strides = [1, 1]} : vector<8x32xf32> to vector<8x8xf32>
    %40 = vector.extract_strided_slice %14 {offsets = [0, 8], sizes = [8, 8], strides = [1, 1]} : vector<8x32xf32> to vector<8x8xf32>
    %41 = vector.extract_strided_slice %15 {offsets = [0, 8], sizes = [8, 8], strides = [1, 1]} : vector<8x32xf32> to vector<8x8xf32>
    %cst_21 = arith.constant dense<0.000000e+00> : vector<8x8xf32>
    %42 = tpu.matmul %39, %40, %cst_21 {dimension_numbers = #tpu.dot_dimension_numbers<[1], [1], [0], [0], [0, 0, 1, 0], [], []>} : vector<8x8xf32>, vector<8x8xf32>, vector<8x8xf32> -> vector<8x8xf32>
    %43 = vector.broadcast %3 : vector<1x8xf32> to vector<8x8xf32>
    %44 = arith.addf %42, %43 : vector<8x8xf32>
    %cst_22 = arith.constant dense<0xFF800000> : vector<8xf32>
    %45 = vector.multi_reduction <maximumf>, %44, %cst_22 [1] : vector<8x8xf32> to vector<8xf32>
    %46 = vector.shape_cast %45 : vector<8xf32> to vector<8x1xf32>
    %47 = vector.broadcast %46 : vector<8x1xf32> to vector<8x8xf32>
    %48 = arith.subf %44, %47 : vector<8x8xf32>
    %49 = math.exp %48 : vector<8x8xf32>
    %cst_23 = arith.constant dense<0.000000e+00> : vector<8xf32>
    %50 = vector.multi_reduction <add>, %49, %cst_23 [1] : vector<8x8xf32> to vector<8xf32>
    %51 = vector.shape_cast %50 : vector<8xf32> to vector<8x1xf32>
    %52 = tpu.reciprocal %51 {approx = true} : vector<8x1xf32> -> vector<8x1xf32>
    %53 = vector.broadcast %52 : vector<8x1xf32> to vector<8x8xf32>
    %54 = arith.mulf %49, %53 : vector<8x8xf32>
    %cst_24 = arith.constant dense<0.000000e+00> : vector<8x8xf32>
    %55 = tpu.matmul %54, %41, %cst_24 {dimension_numbers = #tpu.dot_dimension_numbers<[1], [0], [0], [1], [0, 0, 1, 1], [], []>} : vector<8x8xf32>, vector<8x8xf32>, vector<8x8xf32> -> vector<8x8xf32>
    %56 = vector.extract_strided_slice %17 {offsets = [8, 0], sizes = [8, 32], strides = [1, 1]} : vector<32x32xf32> to vector<8x32xf32>
    %cst_25 = arith.constant dense<0.000000e+00> : vector<8x32xf32>
    %57 = tpu.matmul %55, %56, %cst_25 {dimension_numbers = #tpu.dot_dimension_numbers<[1], [0], [0], [1], [0, 0, 1, 1], [], []>} : vector<8x8xf32>, vector<8x32xf32>, vector<8x32xf32> -> vector<8x32xf32>
    %58 = arith.addf %38, %57 : vector<8x32xf32>
    %59 = vector.extract_strided_slice %13 {offsets = [0, 16], sizes = [8, 8], strides = [1, 1]} : vector<8x32xf32> to vector<8x8xf32>
    %60 = vector.extract_strided_slice %14 {offsets = [0, 16], sizes = [8, 8], strides = [1, 1]} : vector<8x32xf32> to vector<8x8xf32>
    %61 = vector.extract_strided_slice %15 {offsets = [0, 16], sizes = [8, 8], strides = [1, 1]} : vector<8x32xf32> to vector<8x8xf32>
    %cst_26 = arith.constant dense<0.000000e+00> : vector<8x8xf32>
    %62 = tpu.matmul %59, %60, %cst_26 {dimension_numbers = #tpu.dot_dimension_numbers<[1], [1], [0], [0], [0, 0, 1, 0], [], []>} : vector<8x8xf32>, vector<8x8xf32>, vector<8x8xf32> -> vector<8x8xf32>
    %63 = vector.broadcast %3 : vector<1x8xf32> to vector<8x8xf32>
    %64 = arith.addf %62, %63 : vector<8x8xf32>
    %cst_27 = arith.constant dense<0xFF800000> : vector<8xf32>
    %65 = vector.multi_reduction <maximumf>, %64, %cst_27 [1] : vector<8x8xf32> to vector<8xf32>
    %66 = vector.shape_cast %65 : vector<8xf32> to vector<8x1xf32>
    %67 = vector.broadcast %66 : vector<8x1xf32> to vector<8x8xf32>
    %68 = arith.subf %64, %67 : vector<8x8xf32>
    %69 = math.exp %68 : vector<8x8xf32>
    %cst_28 = arith.constant dense<0.000000e+00> : vector<8xf32>
    %70 = vector.multi_reduction <add>, %69, %cst_28 [1] : vector<8x8xf32> to vector<8xf32>
    %71 = vector.shape_cast %70 : vector<8xf32> to vector<8x1xf32>
    %72 = tpu.reciprocal %71 {approx = true} : vector<8x1xf32> -> vector<8x1xf32>
    %73 = vector.broadcast %72 : vector<8x1xf32> to vector<8x8xf32>
    %74 = arith.mulf %69, %73 : vector<8x8xf32>
    %cst_29 = arith.constant dense<0.000000e+00> : vector<8x8xf32>
    %75 = tpu.matmul %74, %61, %cst_29 {dimension_numbers = #tpu.dot_dimension_numbers<[1], [0], [0], [1], [0, 0, 1, 1], [], []>} : vector<8x8xf32>, vector<8x8xf32>, vector<8x8xf32> -> vector<8x8xf32>
    %76 = vector.extract_strided_slice %17 {offsets = [16, 0], sizes = [8, 32], strides = [1, 1]} : vector<32x32xf32> to vector<8x32xf32>
    %cst_30 = arith.constant dense<0.000000e+00> : vector<8x32xf32>
    %77 = tpu.matmul %75, %76, %cst_30 {dimension_numbers = #tpu.dot_dimension_numbers<[1], [0], [0], [1], [0, 0, 1, 1], [], []>} : vector<8x8xf32>, vector<8x32xf32>, vector<8x32xf32> -> vector<8x32xf32>
    %78 = arith.addf %58, %77 : vector<8x32xf32>
    %79 = vector.extract_strided_slice %13 {offsets = [0, 24], sizes = [8, 8], strides = [1, 1]} : vector<8x32xf32> to vector<8x8xf32>
    %80 = vector.extract_strided_slice %14 {offsets = [0, 24], sizes = [8, 8], strides = [1, 1]} : vector<8x32xf32> to vector<8x8xf32>
    %81 = vector.extract_strided_slice %15 {offsets = [0, 24], sizes = [8, 8], strides = [1, 1]} : vector<8x32xf32> to vector<8x8xf32>
    %cst_31 = arith.constant dense<0.000000e+00> : vector<8x8xf32>
    %82 = tpu.matmul %79, %80, %cst_31 {dimension_numbers = #tpu.dot_dimension_numbers<[1], [1], [0], [0], [0, 0, 1, 0], [], []>} : vector<8x8xf32>, vector<8x8xf32>, vector<8x8xf32> -> vector<8x8xf32>
    %83 = vector.broadcast %3 : vector<1x8xf32> to vector<8x8xf32>
    %84 = arith.addf %82, %83 : vector<8x8xf32>
    %cst_32 = arith.constant dense<0xFF800000> : vector<8xf32>
    %85 = vector.multi_reduction <maximumf>, %84, %cst_32 [1] : vector<8x8xf32> to vector<8xf32>
    %86 = vector.shape_cast %85 : vector<8xf32> to vector<8x1xf32>
    %87 = vector.broadcast %86 : vector<8x1xf32> to vector<8x8xf32>
    %88 = arith.subf %84, %87 : vector<8x8xf32>
    %89 = math.exp %88 : vector<8x8xf32>
    %cst_33 = arith.constant dense<0.000000e+00> : vector<8xf32>
    %90 = vector.multi_reduction <add>, %89, %cst_33 [1] : vector<8x8xf32> to vector<8xf32>
    %91 = vector.shape_cast %90 : vector<8xf32> to vector<8x1xf32>
    %92 = tpu.reciprocal %91 {approx = true} : vector<8x1xf32> -> vector<8x1xf32>
    %93 = vector.broadcast %92 : vector<8x1xf32> to vector<8x8xf32>
    %94 = arith.mulf %89, %93 : vector<8x8xf32>
    %cst_34 = arith.constant dense<0.000000e+00> : vector<8x8xf32>
    %95 = tpu.matmul %94, %81, %cst_34 {dimension_numbers = #tpu.dot_dimension_numbers<[1], [0], [0], [1], [0, 0, 1, 1], [], []>} : vector<8x8xf32>, vector<8x8xf32>, vector<8x8xf32> -> vector<8x8xf32>
    %96 = vector.extract_strided_slice %17 {offsets = [24, 0], sizes = [8, 32], strides = [1, 1]} : vector<32x32xf32> to vector<8x32xf32>
    %cst_35 = arith.constant dense<0.000000e+00> : vector<8x32xf32>
    %97 = tpu.matmul %95, %96, %cst_35 {dimension_numbers = #tpu.dot_dimension_numbers<[1], [0], [0], [1], [0, 0, 1, 1], [], []>} : vector<8x8xf32>, vector<8x32xf32>, vector<8x32xf32> -> vector<8x32xf32>
    %98 = arith.addf %78, %97 : vector<8x32xf32>
    %c0_36 = arith.constant 0 : index
    %c0_37 = arith.constant 0 : index
    %c0_38 = arith.constant 0 : index
    %99 = vector.load %arg6[%c0_36, %c0_37, %c0_38] : memref<2x1x32xf32, #tpu.memory_space<vmem>>, vector<1x1x32xf32>
    %100 = vector.shape_cast %99 : vector<1x1x32xf32> to vector<1x32xf32>
    %101 = vector.broadcast %100 : vector<1x32xf32> to vector<8x32xf32>
    %102 = arith.addf %98, %101 : vector<8x32xf32>
    %103 = arith.addf %102, %1 : vector<8x32xf32>
    %c0_39 = arith.constant 0 : index
    %c0_40 = arith.constant 0 : index
    %c0_41 = arith.constant 0 : index
    %104 = vector.load %arg7[%c0_39, %c0_40, %c0_41] : memref<2x1x32xf32, #tpu.memory_space<vmem>>, vector<1x1x32xf32>
    %105 = vector.shape_cast %104 : vector<1x1x32xf32> to vector<1x32xf32>
    %c0_42 = arith.constant 0 : index
    %c0_43 = arith.constant 0 : index
    %c0_44 = arith.constant 0 : index
    %106 = vector.load %arg8[%c0_42, %c0_43, %c0_44] : memref<2x1x32xf32, #tpu.memory_space<vmem>>, vector<1x1x32xf32>
    %107 = vector.shape_cast %106 : vector<1x1x32xf32> to vector<1x32xf32>
    %cst_45 = arith.constant dense<0.000000e+00> : vector<8xf32>
    %108 = vector.multi_reduction <add>, %103, %cst_45 [1] : vector<8x32xf32> to vector<8xf32>
    %109 = vector.shape_cast %108 : vector<8xf32> to vector<8x1xf32>
    %cst_46 = arith.constant 3.200000e+01 : f32
    %110 = vector.broadcast %cst_46 : f32 to vector<8x1xf32>
    %111 = arith.divf %109, %110 : vector<8x1xf32>
    %112 = vector.broadcast %111 : vector<8x1xf32> to vector<8x32xf32>
    %113 = arith.subf %103, %112 : vector<8x32xf32>
    %114 = arith.mulf %113, %113 : vector<8x32xf32>
    %cst_47 = arith.constant dense<0.000000e+00> : vector<8xf32>
    %115 = vector.multi_reduction <add>, %114, %cst_47 [1] : vector<8x32xf32> to vector<8xf32>
    %116 = vector.shape_cast %115 : vector<8xf32> to vector<8x1xf32>
    %cst_48 = arith.constant 3.200000e+01 : f32
    %117 = vector.broadcast %cst_48 : f32 to vector<8x1xf32>
    %118 = arith.divf %116, %117 : vector<8x1xf32>
    %119 = vector.broadcast %111 : vector<8x1xf32> to vector<8x32xf32>
    %120 = arith.subf %103, %119 : vector<8x32xf32>
    %cst_49 = arith.constant 9.99999974E-6 : f32
    %121 = vector.broadcast %cst_49 : f32 to vector<8x1xf32>
    %122 = arith.addf %118, %121 : vector<8x1xf32>
    %123 = math.rsqrt %122 : vector<8x1xf32>
    %124 = vector.broadcast %123 : vector<8x1xf32> to vector<8x32xf32>
    %125 = arith.mulf %120, %124 : vector<8x32xf32>
    %126 = vector.broadcast %105 : vector<1x32xf32> to vector<8x32xf32>
    %127 = arith.mulf %125, %126 : vector<8x32xf32>
    %128 = vector.broadcast %107 : vector<1x32xf32> to vector<8x32xf32>
    %129 = arith.addf %127, %128 : vector<8x32xf32>
    %c0_50 = arith.constant 0 : index
    %c0_51 = arith.constant 0 : index
    %c0_52 = arith.constant 0 : index
    %130 = vector.load %arg9[%c0_50, %c0_51, %c0_52] : memref<2x32x64xf32, #tpu.memory_space<vmem>>, vector<1x32x64xf32>
    %131 = vector.shape_cast %130 : vector<1x32x64xf32> to vector<32x64xf32>
    %cst_53 = arith.constant dense<0.000000e+00> : vector<8x64xf32>
    %132 = tpu.matmul %129, %131, %cst_53 {dimension_numbers = #tpu.dot_dimension_numbers<[1], [0], [0], [1], [0, 0, 1, 1], [], []>} : vector<8x32xf32>, vector<32x64xf32>, vector<8x64xf32> -> vector<8x64xf32>
    %c0_54 = arith.constant 0 : index
    %c0_55 = arith.constant 0 : index
    %c0_56 = arith.constant 0 : index
    %133 = vector.load %arg10[%c0_54, %c0_55, %c0_56] : memref<2x1x64xf32, #tpu.memory_space<vmem>>, vector<1x1x64xf32>
    %134 = vector.shape_cast %133 : vector<1x1x64xf32> to vector<1x64xf32>
    %135 = vector.broadcast %134 : vector<1x64xf32> to vector<8x64xf32>
    %136 = arith.addf %132, %135 : vector<8x64xf32>
    %cst_57 = arith.constant 0.000000e+00 : f32
    %137 = vector.broadcast %cst_57 : f32 to vector<8x64xf32>
    %138 = arith.maximumf %136, %137 : vector<8x64xf32>
    %c0_58 = arith.constant 0 : index
    %c0_59 = arith.constant 0 : index
    %c0_60 = arith.constant 0 : index
    %139 = vector.load %arg11[%c0_58, %c0_59, %c0_60] : memref<2x64x32xf32, #tpu.memory_space<vmem>>, vector<1x64x32xf32>
    %140 = vector.shape_cast %139 : vector<1x64x32xf32> to vector<64x32xf32>
    %cst_61 = arith.constant dense<0.000000e+00> : vector<8x32xf32>
    %141 = tpu.matmul %138, %140, %cst_61 {dimension_numbers = #tpu.dot_dimension_numbers<[1], [0], [0], [1], [0, 0, 1, 1], [], []>} : vector<8x64xf32>, vector<64x32xf32>, vector<8x32xf32> -> vector<8x32xf32>
    %c0_62 = arith.constant 0 : index
    %c0_63 = arith.constant 0 : index
    %c0_64 = arith.constant 0 : index
    %142 = vector.load %arg12[%c0_62, %c0_63, %c0_64] : memref<2x1x32xf32, #tpu.memory_space<vmem>>, vector<1x1x32xf32>
    %143 = vector.shape_cast %142 : vector<1x1x32xf32> to vector<1x32xf32>
    %144 = vector.broadcast %143 : vector<1x32xf32> to vector<8x32xf32>
    %145 = arith.addf %141, %144 : vector<8x32xf32>
    %146 = arith.addf %145, %129 : vector<8x32xf32>
    %c0_65 = arith.constant 0 : index
    %c0_66 = arith.constant 0 : index
    %c0_67 = arith.constant 0 : index
    %147 = vector.load %arg13[%c0_65, %c0_66, %c0_67] : memref<2x1x32xf32, #tpu.memory_space<vmem>>, vector<1x1x32xf32>
    %148 = vector.shape_cast %147 : vector<1x1x32xf32> to vector<1x32xf32>
    %c0_68 = arith.constant 0 : index
    %c0_69 = arith.constant 0 : index
    %c0_70 = arith.constant 0 : index
    %149 = vector.load %arg14[%c0_68, %c0_69, %c0_70] : memref<2x1x32xf32, #tpu.memory_space<vmem>>, vector<1x1x32xf32>
    %150 = vector.shape_cast %149 : vector<1x1x32xf32> to vector<1x32xf32>
    %cst_71 = arith.constant dense<0.000000e+00> : vector<8xf32>
    %151 = vector.multi_reduction <add>, %146, %cst_71 [1] : vector<8x32xf32> to vector<8xf32>
    %152 = vector.shape_cast %151 : vector<8xf32> to vector<8x1xf32>
    %cst_72 = arith.constant 3.200000e+01 : f32
    %153 = vector.broadcast %cst_72 : f32 to vector<8x1xf32>
    %154 = arith.divf %152, %153 : vector<8x1xf32>
    %155 = vector.broadcast %154 : vector<8x1xf32> to vector<8x32xf32>
    %156 = arith.subf %146, %155 : vector<8x32xf32>
    %157 = arith.mulf %156, %156 : vector<8x32xf32>
    %cst_73 = arith.constant dense<0.000000e+00> : vector<8xf32>
    %158 = vector.multi_reduction <add>, %157, %cst_73 [1] : vector<8x32xf32> to vector<8xf32>
    %159 = vector.shape_cast %158 : vector<8xf32> to vector<8x1xf32>
    %cst_74 = arith.constant 3.200000e+01 : f32
    %160 = vector.broadcast %cst_74 : f32 to vector<8x1xf32>
    %161 = arith.divf %159, %160 : vector<8x1xf32>
    %162 = vector.broadcast %154 : vector<8x1xf32> to vector<8x32xf32>
    %163 = arith.subf %146, %162 : vector<8x32xf32>
    %cst_75 = arith.constant 9.99999974E-6 : f32
    %164 = vector.broadcast %cst_75 : f32 to vector<8x1xf32>
    %165 = arith.addf %161, %164 : vector<8x1xf32>
    %166 = math.rsqrt %165 : vector<8x1xf32>
    %167 = vector.broadcast %166 : vector<8x1xf32> to vector<8x32xf32>
    %168 = arith.mulf %163, %167 : vector<8x32xf32>
    %169 = vector.broadcast %148 : vector<1x32xf32> to vector<8x32xf32>
    %170 = arith.mulf %168, %169 : vector<8x32xf32>
    %171 = vector.broadcast %150 : vector<1x32xf32> to vector<8x32xf32>
    %172 = arith.addf %170, %171 : vector<8x32xf32>
    %c1 = arith.constant 1 : index
    %c0_76 = arith.constant 0 : index
    %c0_77 = arith.constant 0 : index
    %173 = vector.load %arg3[%c1, %c0_76, %c0_77] : memref<2x32x96xf32, #tpu.memory_space<vmem>>, vector<1x32x96xf32>
    %174 = vector.shape_cast %173 : vector<1x32x96xf32> to vector<32x96xf32>
    %cst_78 = arith.constant dense<0.000000e+00> : vector<8x96xf32>
    %175 = tpu.matmul %172, %174, %cst_78 {dimension_numbers = #tpu.dot_dimension_numbers<[1], [0], [0], [1], [0, 0, 1, 1], [], []>} : vector<8x32xf32>, vector<32x96xf32>, vector<8x96xf32> -> vector<8x96xf32>
    %c1_79 = arith.constant 1 : index
    %c0_80 = arith.constant 0 : index
    %c0_81 = arith.constant 0 : index
    %176 = vector.load %arg4[%c1_79, %c0_80, %c0_81] : memref<2x1x96xf32, #tpu.memory_space<vmem>>, vector<1x1x96xf32>
    %177 = vector.shape_cast %176 : vector<1x1x96xf32> to vector<1x96xf32>
    %178 = vector.broadcast %177 : vector<1x96xf32> to vector<8x96xf32>
    %179 = arith.addf %175, %178 : vector<8x96xf32>
    %180 = vector.extract_strided_slice %179 {offsets = [0, 0], sizes = [8, 32], strides = [1, 1]} : vector<8x96xf32> to vector<8x32xf32>
    %cst_82 = arith.constant 0.353553385 : f32
    %181 = vector.broadcast %cst_82 : f32 to vector<8x32xf32>
    %182 = arith.mulf %180, %181 : vector<8x32xf32>
    %183 = vector.extract_strided_slice %179 {offsets = [0, 32], sizes = [8, 32], strides = [1, 1]} : vector<8x96xf32> to vector<8x32xf32>
    %184 = vector.extract_strided_slice %179 {offsets = [0, 64], sizes = [8, 32], strides = [1, 1]} : vector<8x96xf32> to vector<8x32xf32>
    %c1_83 = arith.constant 1 : index
    %c0_84 = arith.constant 0 : index
    %c0_85 = arith.constant 0 : index
    %185 = vector.load %arg5[%c1_83, %c0_84, %c0_85] : memref<2x32x32xf32, #tpu.memory_space<vmem>>, vector<1x32x32xf32>
    %186 = vector.shape_cast %185 : vector<1x32x32xf32> to vector<32x32xf32>
    %cst_86 = arith.constant 0.000000e+00 : f32
    %187 = vector.broadcast %cst_86 : f32 to vector<8x32xf32>
    %188 = vector.extract_strided_slice %182 {offsets = [0, 0], sizes = [8, 8], strides = [1, 1]} : vector<8x32xf32> to vector<8x8xf32>
    %189 = vector.extract_strided_slice %183 {offsets = [0, 0], sizes = [8, 8], strides = [1, 1]} : vector<8x32xf32> to vector<8x8xf32>
    %190 = vector.extract_strided_slice %184 {offsets = [0, 0], sizes = [8, 8], strides = [1, 1]} : vector<8x32xf32> to vector<8x8xf32>
    %cst_87 = arith.constant dense<0.000000e+00> : vector<8x8xf32>
    %191 = tpu.matmul %188, %189, %cst_87 {dimension_numbers = #tpu.dot_dimension_numbers<[1], [1], [0], [0], [0, 0, 1, 0], [], []>} : vector<8x8xf32>, vector<8x8xf32>, vector<8x8xf32> -> vector<8x8xf32>
    %192 = vector.broadcast %3 : vector<1x8xf32> to vector<8x8xf32>
    %193 = arith.addf %191, %192 : vector<8x8xf32>
    %cst_88 = arith.constant dense<0xFF800000> : vector<8xf32>
    %194 = vector.multi_reduction <maximumf>, %193, %cst_88 [1] : vector<8x8xf32> to vector<8xf32>
    %195 = vector.shape_cast %194 : vector<8xf32> to vector<8x1xf32>
    %196 = vector.broadcast %195 : vector<8x1xf32> to vector<8x8xf32>
    %197 = arith.subf %193, %196 : vector<8x8xf32>
    %198 = math.exp %197 : vector<8x8xf32>
    %cst_89 = arith.constant dense<0.000000e+00> : vector<8xf32>
    %199 = vector.multi_reduction <add>, %198, %cst_89 [1] : vector<8x8xf32> to vector<8xf32>
    %200 = vector.shape_cast %199 : vector<8xf32> to vector<8x1xf32>
    %201 = tpu.reciprocal %200 {approx = true} : vector<8x1xf32> -> vector<8x1xf32>
    %202 = vector.broadcast %201 : vector<8x1xf32> to vector<8x8xf32>
    %203 = arith.mulf %198, %202 : vector<8x8xf32>
    %cst_90 = arith.constant dense<0.000000e+00> : vector<8x8xf32>
    %204 = tpu.matmul %203, %190, %cst_90 {dimension_numbers = #tpu.dot_dimension_numbers<[1], [0], [0], [1], [0, 0, 1, 1], [], []>} : vector<8x8xf32>, vector<8x8xf32>, vector<8x8xf32> -> vector<8x8xf32>
    %205 = vector.extract_strided_slice %186 {offsets = [0, 0], sizes = [8, 32], strides = [1, 1]} : vector<32x32xf32> to vector<8x32xf32>
    %cst_91 = arith.constant dense<0.000000e+00> : vector<8x32xf32>
    %206 = tpu.matmul %204, %205, %cst_91 {dimension_numbers = #tpu.dot_dimension_numbers<[1], [0], [0], [1], [0, 0, 1, 1], [], []>} : vector<8x8xf32>, vector<8x32xf32>, vector<8x32xf32> -> vector<8x32xf32>
    %207 = arith.addf %187, %206 : vector<8x32xf32>
    %208 = vector.extract_strided_slice %182 {offsets = [0, 8], sizes = [8, 8], strides = [1, 1]} : vector<8x32xf32> to vector<8x8xf32>
    %209 = vector.extract_strided_slice %183 {offsets = [0, 8], sizes = [8, 8], strides = [1, 1]} : vector<8x32xf32> to vector<8x8xf32>
    %210 = vector.extract_strided_slice %184 {offsets = [0, 8], sizes = [8, 8], strides = [1, 1]} : vector<8x32xf32> to vector<8x8xf32>
    %cst_92 = arith.constant dense<0.000000e+00> : vector<8x8xf32>
    %211 = tpu.matmul %208, %209, %cst_92 {dimension_numbers = #tpu.dot_dimension_numbers<[1], [1], [0], [0], [0, 0, 1, 0], [], []>} : vector<8x8xf32>, vector<8x8xf32>, vector<8x8xf32> -> vector<8x8xf32>
    %212 = vector.broadcast %3 : vector<1x8xf32> to vector<8x8xf32>
    %213 = arith.addf %211, %212 : vector<8x8xf32>
    %cst_93 = arith.constant dense<0xFF800000> : vector<8xf32>
    %214 = vector.multi_reduction <maximumf>, %213, %cst_93 [1] : vector<8x8xf32> to vector<8xf32>
    %215 = vector.shape_cast %214 : vector<8xf32> to vector<8x1xf32>
    %216 = vector.broadcast %215 : vector<8x1xf32> to vector<8x8xf32>
    %217 = arith.subf %213, %216 : vector<8x8xf32>
    %218 = math.exp %217 : vector<8x8xf32>
    %cst_94 = arith.constant dense<0.000000e+00> : vector<8xf32>
    %219 = vector.multi_reduction <add>, %218, %cst_94 [1] : vector<8x8xf32> to vector<8xf32>
    %220 = vector.shape_cast %219 : vector<8xf32> to vector<8x1xf32>
    %221 = tpu.reciprocal %220 {approx = true} : vector<8x1xf32> -> vector<8x1xf32>
    %222 = vector.broadcast %221 : vector<8x1xf32> to vector<8x8xf32>
    %223 = arith.mulf %218, %222 : vector<8x8xf32>
    %cst_95 = arith.constant dense<0.000000e+00> : vector<8x8xf32>
    %224 = tpu.matmul %223, %210, %cst_95 {dimension_numbers = #tpu.dot_dimension_numbers<[1], [0], [0], [1], [0, 0, 1, 1], [], []>} : vector<8x8xf32>, vector<8x8xf32>, vector<8x8xf32> -> vector<8x8xf32>
    %225 = vector.extract_strided_slice %186 {offsets = [8, 0], sizes = [8, 32], strides = [1, 1]} : vector<32x32xf32> to vector<8x32xf32>
    %cst_96 = arith.constant dense<0.000000e+00> : vector<8x32xf32>
    %226 = tpu.matmul %224, %225, %cst_96 {dimension_numbers = #tpu.dot_dimension_numbers<[1], [0], [0], [1], [0, 0, 1, 1], [], []>} : vector<8x8xf32>, vector<8x32xf32>, vector<8x32xf32> -> vector<8x32xf32>
    %227 = arith.addf %207, %226 : vector<8x32xf32>
    %228 = vector.extract_strided_slice %182 {offsets = [0, 16], sizes = [8, 8], strides = [1, 1]} : vector<8x32xf32> to vector<8x8xf32>
    %229 = vector.extract_strided_slice %183 {offsets = [0, 16], sizes = [8, 8], strides = [1, 1]} : vector<8x32xf32> to vector<8x8xf32>
    %230 = vector.extract_strided_slice %184 {offsets = [0, 16], sizes = [8, 8], strides = [1, 1]} : vector<8x32xf32> to vector<8x8xf32>
    %cst_97 = arith.constant dense<0.000000e+00> : vector<8x8xf32>
    %231 = tpu.matmul %228, %229, %cst_97 {dimension_numbers = #tpu.dot_dimension_numbers<[1], [1], [0], [0], [0, 0, 1, 0], [], []>} : vector<8x8xf32>, vector<8x8xf32>, vector<8x8xf32> -> vector<8x8xf32>
    %232 = vector.broadcast %3 : vector<1x8xf32> to vector<8x8xf32>
    %233 = arith.addf %231, %232 : vector<8x8xf32>
    %cst_98 = arith.constant dense<0xFF800000> : vector<8xf32>
    %234 = vector.multi_reduction <maximumf>, %233, %cst_98 [1] : vector<8x8xf32> to vector<8xf32>
    %235 = vector.shape_cast %234 : vector<8xf32> to vector<8x1xf32>
    %236 = vector.broadcast %235 : vector<8x1xf32> to vector<8x8xf32>
    %237 = arith.subf %233, %236 : vector<8x8xf32>
    %238 = math.exp %237 : vector<8x8xf32>
    %cst_99 = arith.constant dense<0.000000e+00> : vector<8xf32>
    %239 = vector.multi_reduction <add>, %238, %cst_99 [1] : vector<8x8xf32> to vector<8xf32>
    %240 = vector.shape_cast %239 : vector<8xf32> to vector<8x1xf32>
    %241 = tpu.reciprocal %240 {approx = true} : vector<8x1xf32> -> vector<8x1xf32>
    %242 = vector.broadcast %241 : vector<8x1xf32> to vector<8x8xf32>
    %243 = arith.mulf %238, %242 : vector<8x8xf32>
    %cst_100 = arith.constant dense<0.000000e+00> : vector<8x8xf32>
    %244 = tpu.matmul %243, %230, %cst_100 {dimension_numbers = #tpu.dot_dimension_numbers<[1], [0], [0], [1], [0, 0, 1, 1], [], []>} : vector<8x8xf32>, vector<8x8xf32>, vector<8x8xf32> -> vector<8x8xf32>
    %245 = vector.extract_strided_slice %186 {offsets = [16, 0], sizes = [8, 32], strides = [1, 1]} : vector<32x32xf32> to vector<8x32xf32>
    %cst_101 = arith.constant dense<0.000000e+00> : vector<8x32xf32>
    %246 = tpu.matmul %244, %245, %cst_101 {dimension_numbers = #tpu.dot_dimension_numbers<[1], [0], [0], [1], [0, 0, 1, 1], [], []>} : vector<8x8xf32>, vector<8x32xf32>, vector<8x32xf32> -> vector<8x32xf32>
    %247 = arith.addf %227, %246 : vector<8x32xf32>
    %248 = vector.extract_strided_slice %182 {offsets = [0, 24], sizes = [8, 8], strides = [1, 1]} : vector<8x32xf32> to vector<8x8xf32>
    %249 = vector.extract_strided_slice %183 {offsets = [0, 24], sizes = [8, 8], strides = [1, 1]} : vector<8x32xf32> to vector<8x8xf32>
    %250 = vector.extract_strided_slice %184 {offsets = [0, 24], sizes = [8, 8], strides = [1, 1]} : vector<8x32xf32> to vector<8x8xf32>
    %cst_102 = arith.constant dense<0.000000e+00> : vector<8x8xf32>
    %251 = tpu.matmul %248, %249, %cst_102 {dimension_numbers = #tpu.dot_dimension_numbers<[1], [1], [0], [0], [0, 0, 1, 0], [], []>} : vector<8x8xf32>, vector<8x8xf32>, vector<8x8xf32> -> vector<8x8xf32>
    %252 = vector.broadcast %3 : vector<1x8xf32> to vector<8x8xf32>
    %253 = arith.addf %251, %252 : vector<8x8xf32>
    %cst_103 = arith.constant dense<0xFF800000> : vector<8xf32>
    %254 = vector.multi_reduction <maximumf>, %253, %cst_103 [1] : vector<8x8xf32> to vector<8xf32>
    %255 = vector.shape_cast %254 : vector<8xf32> to vector<8x1xf32>
    %256 = vector.broadcast %255 : vector<8x1xf32> to vector<8x8xf32>
    %257 = arith.subf %253, %256 : vector<8x8xf32>
    %258 = math.exp %257 : vector<8x8xf32>
    %cst_104 = arith.constant dense<0.000000e+00> : vector<8xf32>
    %259 = vector.multi_reduction <add>, %258, %cst_104 [1] : vector<8x8xf32> to vector<8xf32>
    %260 = vector.shape_cast %259 : vector<8xf32> to vector<8x1xf32>
    %261 = tpu.reciprocal %260 {approx = true} : vector<8x1xf32> -> vector<8x1xf32>
    %262 = vector.broadcast %261 : vector<8x1xf32> to vector<8x8xf32>
    %263 = arith.mulf %258, %262 : vector<8x8xf32>
    %cst_105 = arith.constant dense<0.000000e+00> : vector<8x8xf32>
    %264 = tpu.matmul %263, %250, %cst_105 {dimension_numbers = #tpu.dot_dimension_numbers<[1], [0], [0], [1], [0, 0, 1, 1], [], []>} : vector<8x8xf32>, vector<8x8xf32>, vector<8x8xf32> -> vector<8x8xf32>
    %265 = vector.extract_strided_slice %186 {offsets = [24, 0], sizes = [8, 32], strides = [1, 1]} : vector<32x32xf32> to vector<8x32xf32>
    %cst_106 = arith.constant dense<0.000000e+00> : vector<8x32xf32>
    %266 = tpu.matmul %264, %265, %cst_106 {dimension_numbers = #tpu.dot_dimension_numbers<[1], [0], [0], [1], [0, 0, 1, 1], [], []>} : vector<8x8xf32>, vector<8x32xf32>, vector<8x32xf32> -> vector<8x32xf32>
    %267 = arith.addf %247, %266 : vector<8x32xf32>
    %c1_107 = arith.constant 1 : index
    %c0_108 = arith.constant 0 : index
    %c0_109 = arith.constant 0 : index
    %268 = vector.load %arg6[%c1_107, %c0_108, %c0_109] : memref<2x1x32xf32, #tpu.memory_space<vmem>>, vector<1x1x32xf32>
    %269 = vector.shape_cast %268 : vector<1x1x32xf32> to vector<1x32xf32>
    %270 = vector.broadcast %269 : vector<1x32xf32> to vector<8x32xf32>
    %271 = arith.addf %267, %270 : vector<8x32xf32>
    %272 = arith.addf %271, %172 : vector<8x32xf32>
    %c1_110 = arith.constant 1 : index
    %c0_111 = arith.constant 0 : index
    %c0_112 = arith.constant 0 : index
    %273 = vector.load %arg7[%c1_110, %c0_111, %c0_112] : memref<2x1x32xf32, #tpu.memory_space<vmem>>, vector<1x1x32xf32>
    %274 = vector.shape_cast %273 : vector<1x1x32xf32> to vector<1x32xf32>
    %c1_113 = arith.constant 1 : index
    %c0_114 = arith.constant 0 : index
    %c0_115 = arith.constant 0 : index
    %275 = vector.load %arg8[%c1_113, %c0_114, %c0_115] : memref<2x1x32xf32, #tpu.memory_space<vmem>>, vector<1x1x32xf32>
    %276 = vector.shape_cast %275 : vector<1x1x32xf32> to vector<1x32xf32>
    %cst_116 = arith.constant dense<0.000000e+00> : vector<8xf32>
    %277 = vector.multi_reduction <add>, %272, %cst_116 [1] : vector<8x32xf32> to vector<8xf32>
    %278 = vector.shape_cast %277 : vector<8xf32> to vector<8x1xf32>
    %cst_117 = arith.constant 3.200000e+01 : f32
    %279 = vector.broadcast %cst_117 : f32 to vector<8x1xf32>
    %280 = arith.divf %278, %279 : vector<8x1xf32>
    %281 = vector.broadcast %280 : vector<8x1xf32> to vector<8x32xf32>
    %282 = arith.subf %272, %281 : vector<8x32xf32>
    %283 = arith.mulf %282, %282 : vector<8x32xf32>
    %cst_118 = arith.constant dense<0.000000e+00> : vector<8xf32>
    %284 = vector.multi_reduction <add>, %283, %cst_118 [1] : vector<8x32xf32> to vector<8xf32>
    %285 = vector.shape_cast %284 : vector<8xf32> to vector<8x1xf32>
    %cst_119 = arith.constant 3.200000e+01 : f32
    %286 = vector.broadcast %cst_119 : f32 to vector<8x1xf32>
    %287 = arith.divf %285, %286 : vector<8x1xf32>
    %288 = vector.broadcast %280 : vector<8x1xf32> to vector<8x32xf32>
    %289 = arith.subf %272, %288 : vector<8x32xf32>
    %cst_120 = arith.constant 9.99999974E-6 : f32
    %290 = vector.broadcast %cst_120 : f32 to vector<8x1xf32>
    %291 = arith.addf %287, %290 : vector<8x1xf32>
    %292 = math.rsqrt %291 : vector<8x1xf32>
    %293 = vector.broadcast %292 : vector<8x1xf32> to vector<8x32xf32>
    %294 = arith.mulf %289, %293 : vector<8x32xf32>
    %295 = vector.broadcast %274 : vector<1x32xf32> to vector<8x32xf32>
    %296 = arith.mulf %294, %295 : vector<8x32xf32>
    %297 = vector.broadcast %276 : vector<1x32xf32> to vector<8x32xf32>
    %298 = arith.addf %296, %297 : vector<8x32xf32>
    %c1_121 = arith.constant 1 : index
    %c0_122 = arith.constant 0 : index
    %c0_123 = arith.constant 0 : index
    %299 = vector.load %arg9[%c1_121, %c0_122, %c0_123] : memref<2x32x64xf32, #tpu.memory_space<vmem>>, vector<1x32x64xf32>
    %300 = vector.shape_cast %299 : vector<1x32x64xf32> to vector<32x64xf32>
    %cst_124 = arith.constant dense<0.000000e+00> : vector<8x64xf32>
    %301 = tpu.matmul %298, %300, %cst_124 {dimension_numbers = #tpu.dot_dimension_numbers<[1], [0], [0], [1], [0, 0, 1, 1], [], []>} : vector<8x32xf32>, vector<32x64xf32>, vector<8x64xf32> -> vector<8x64xf32>
    %c1_125 = arith.constant 1 : index
    %c0_126 = arith.constant 0 : index
    %c0_127 = arith.constant 0 : index
    %302 = vector.load %arg10[%c1_125, %c0_126, %c0_127] : memref<2x1x64xf32, #tpu.memory_space<vmem>>, vector<1x1x64xf32>
    %303 = vector.shape_cast %302 : vector<1x1x64xf32> to vector<1x64xf32>
    %304 = vector.broadcast %303 : vector<1x64xf32> to vector<8x64xf32>
    %305 = arith.addf %301, %304 : vector<8x64xf32>
    %cst_128 = arith.constant 0.000000e+00 : f32
    %306 = vector.broadcast %cst_128 : f32 to vector<8x64xf32>
    %307 = arith.maximumf %305, %306 : vector<8x64xf32>
    %c1_129 = arith.constant 1 : index
    %c0_130 = arith.constant 0 : index
    %c0_131 = arith.constant 0 : index
    %308 = vector.load %arg11[%c1_129, %c0_130, %c0_131] : memref<2x64x32xf32, #tpu.memory_space<vmem>>, vector<1x64x32xf32>
    %309 = vector.shape_cast %308 : vector<1x64x32xf32> to vector<64x32xf32>
    %cst_132 = arith.constant dense<0.000000e+00> : vector<8x32xf32>
    %310 = tpu.matmul %307, %309, %cst_132 {dimension_numbers = #tpu.dot_dimension_numbers<[1], [0], [0], [1], [0, 0, 1, 1], [], []>} : vector<8x64xf32>, vector<64x32xf32>, vector<8x32xf32> -> vector<8x32xf32>
    %c1_133 = arith.constant 1 : index
    %c0_134 = arith.constant 0 : index
    %c0_135 = arith.constant 0 : index
    %311 = vector.load %arg12[%c1_133, %c0_134, %c0_135] : memref<2x1x32xf32, #tpu.memory_space<vmem>>, vector<1x1x32xf32>
    %312 = vector.shape_cast %311 : vector<1x1x32xf32> to vector<1x32xf32>
    %313 = vector.broadcast %312 : vector<1x32xf32> to vector<8x32xf32>
    %314 = arith.addf %310, %313 : vector<8x32xf32>
    %315 = arith.addf %314, %298 : vector<8x32xf32>
    %c1_136 = arith.constant 1 : index
    %c0_137 = arith.constant 0 : index
    %c0_138 = arith.constant 0 : index
    %316 = vector.load %arg13[%c1_136, %c0_137, %c0_138] : memref<2x1x32xf32, #tpu.memory_space<vmem>>, vector<1x1x32xf32>
    %317 = vector.shape_cast %316 : vector<1x1x32xf32> to vector<1x32xf32>
    %c1_139 = arith.constant 1 : index
    %c0_140 = arith.constant 0 : index
    %c0_141 = arith.constant 0 : index
    %318 = vector.load %arg14[%c1_139, %c0_140, %c0_141] : memref<2x1x32xf32, #tpu.memory_space<vmem>>, vector<1x1x32xf32>
    %319 = vector.shape_cast %318 : vector<1x1x32xf32> to vector<1x32xf32>
    %cst_142 = arith.constant dense<0.000000e+00> : vector<8xf32>
    %320 = vector.multi_reduction <add>, %315, %cst_142 [1] : vector<8x32xf32> to vector<8xf32>
    %321 = vector.shape_cast %320 : vector<8xf32> to vector<8x1xf32>
    %cst_143 = arith.constant 3.200000e+01 : f32
    %322 = vector.broadcast %cst_143 : f32 to vector<8x1xf32>
    %323 = arith.divf %321, %322 : vector<8x1xf32>
    %324 = vector.broadcast %323 : vector<8x1xf32> to vector<8x32xf32>
    %325 = arith.subf %315, %324 : vector<8x32xf32>
    %326 = arith.mulf %325, %325 : vector<8x32xf32>
    %cst_144 = arith.constant dense<0.000000e+00> : vector<8xf32>
    %327 = vector.multi_reduction <add>, %326, %cst_144 [1] : vector<8x32xf32> to vector<8xf32>
    %328 = vector.shape_cast %327 : vector<8xf32> to vector<8x1xf32>
    %cst_145 = arith.constant 3.200000e+01 : f32
    %329 = vector.broadcast %cst_145 : f32 to vector<8x1xf32>
    %330 = arith.divf %328, %329 : vector<8x1xf32>
    %331 = vector.broadcast %323 : vector<8x1xf32> to vector<8x32xf32>
    %332 = arith.subf %315, %331 : vector<8x32xf32>
    %cst_146 = arith.constant 9.99999974E-6 : f32
    %333 = vector.broadcast %cst_146 : f32 to vector<8x1xf32>
    %334 = arith.addf %330, %333 : vector<8x1xf32>
    %335 = math.rsqrt %334 : vector<8x1xf32>
    %336 = vector.broadcast %335 : vector<8x1xf32> to vector<8x32xf32>
    %337 = arith.mulf %332, %336 : vector<8x32xf32>
    %338 = vector.broadcast %317 : vector<1x32xf32> to vector<8x32xf32>
    %339 = arith.mulf %337, %338 : vector<8x32xf32>
    %340 = vector.broadcast %319 : vector<1x32xf32> to vector<8x32xf32>
    %341 = arith.addf %339, %340 : vector<8x32xf32>
    %c0_147 = arith.constant 0 : index
    %c0_148 = arith.constant 0 : index
    %c0_149 = arith.constant 0 : index
    %342 = vector.load %arg16[%c0_147, %c0_148, %c0_149] : memref<1x8x32xf32, #tpu.memory_space<vmem>>, vector<1x8x32xf32>
    %343 = vector.shape_cast %342 : vector<1x8x32xf32> to vector<8x32xf32>
    %344 = vector.shape_cast %341 : vector<8x32xf32> to vector<1x8x32xf32>
    tpu.vector_store %arg16[%c0_147, %c0_148, %c0_149], %344 {strides = array<i32>} : memref<1x8x32xf32, #tpu.memory_space<vmem>>, vector<1x8x32xf32>,
    %c0_150 = arith.constant 0 : index
    %c0_151 = arith.constant 0 : index
    %345 = vector.load %arg15[%c0_150, %c0_151] : memref<32x32xf32, #tpu.memory_space<vmem>>, vector<32x32xf32>
    %cst_152 = arith.constant dense<0.000000e+00> : vector<8x32xf32>
    %346 = tpu.matmul %341, %345, %cst_152 {dimension_numbers = #tpu.dot_dimension_numbers<[1], [0], [0], [1], [0, 0, 1, 1], [], []>} : vector<8x32xf32>, vector<32x32xf32>, vector<8x32xf32> -> vector<8x32xf32>
    %c0_153 = arith.constant 0 : index
    %c0_154 = arith.constant 0 : index
    %c0_155 = arith.constant 0 : index
    %347 = vector.load %arg17[%c0_153, %c0_154, %c0_155] : memref<1x8x32xf32, #tpu.memory_space<vmem>>, vector<1x8x32xf32>
    %348 = vector.shape_cast %347 : vector<1x8x32xf32> to vector<8x32xf32>
    %349 = vector.shape_cast %346 : vector<8x32xf32> to vector<1x8x32xf32>
    tpu.vector_store %arg17[%c0_153, %c0_154, %c0_155], %349 {strides = array<i32>} : memref<1x8x32xf32, #tpu.memory_space<vmem>>, vector<1x8x32xf32>,
    return
  }
  func.func @transform_0(%arg0: i32) -> (i32, i32, i32) {
    %c0_i32 = arith.constant 0 : i32
    %c0_i32_0 = arith.constant 0 : i32
    %c0_i32_1 = arith.constant 0 : i32
    return %arg0, %c0_i32, %c0_i32_0 : i32, i32, i32
  }
  func.func @transform_1(%arg0: i32) -> (i32, i32, i32) {
    %c0_i32 = arith.constant 0 : i32
    %c0_i32_0 = arith.constant 0 : i32
    %c0_i32_1 = arith.constant 0 : i32
    return %arg0, %c0_i32, %c0_i32_0 : i32, i32, i32
  }
  func.func @transform_2(%arg0: i32) -> (i32, i32, i32) {
    %c0_i32 = arith.constant 0 : i32
    %c0_i32_0 = arith.constant 0 : i32
    %c0_i32_1 = arith.constant 0 : i32
    %c0_i32_2 = arith.constant 0 : i32
    return %c0_i32, %c0_i32_0, %c0_i32_1 : i32, i32, i32
  }
  func.func @transform_3(%arg0: i32) -> (i32, i32, i32) {
    %c0_i32 = arith.constant 0 : i32
    %c0_i32_0 = arith.constant 0 : i32
    %c0_i32_1 = arith.constant 0 : i32
    %c0_i32_2 = arith.constant 0 : i32
    return %c0_i32, %c0_i32_0, %c0_i32_1 : i32, i32, i32
  }
  func.func @transform_4(%arg0: i32) -> (i32, i32, i32) {
    %c0_i32 = arith.constant 0 : i32
    %c0_i32_0 = arith.constant 0 : i32
    %c0_i32_1 = arith.constant 0 : i32
    %c0_i32_2 = arith.constant 0 : i32
    return %c0_i32, %c0_i32_0, %c0_i32_1 : i32, i32, i32
  }
  func.func @transform_5(%arg0: i32) -> (i32, i32, i32) {
    %c0_i32 = arith.constant 0 : i32
    %c0_i32_0 = arith.constant 0 : i32
    %c0_i32_1 = arith.constant 0 : i32
    %c0_i32_2 = arith.constant 0 : i32
    return %c0_i32, %c0_i32_0, %c0_i32_1 : i32, i32, i32
  }
  func.func @transform_6(%arg0: i32) -> (i32, i32, i32) {
    %c0_i32 = arith.constant 0 : i32
    %c0_i32_0 = arith.constant 0 : i32
    %c0_i32_1 = arith.constant 0 : i32
    %c0_i32_2 = arith.constant 0 : i32
    return %c0_i32, %c0_i32_0, %c0_i32_1 : i32, i32, i32
  }
  func.func @transform_7(%arg0: i32) -> (i32, i32, i32) {
    %c0_i32 = arith.constant 0 : i32
    %c0_i32_0 = arith.constant 0 : i32
    %c0_i32_1 = arith.constant 0 : i32
    %c0_i32_2 = arith.constant 0 : i32
    return %c0_i32, %c0_i32_0, %c0_i32_1 : i32, i32, i32
  }
  func.func @transform_8(%arg0: i32) -> (i32, i32, i32) {
    %c0_i32 = arith.constant 0 : i32
    %c0_i32_0 = arith.constant 0 : i32
    %c0_i32_1 = arith.constant 0 : i32
    %c0_i32_2 = arith.constant 0 : i32
    return %c0_i32, %c0_i32_0, %c0_i32_1 : i32, i32, i32
  }
  func.func @transform_9(%arg0: i32) -> (i32, i32, i32) {
    %c0_i32 = arith.constant 0 : i32
    %c0_i32_0 = arith.constant 0 : i32
    %c0_i32_1 = arith.constant 0 : i32
    %c0_i32_2 = arith.constant 0 : i32
    return %c0_i32, %c0_i32_0, %c0_i32_1 : i32, i32, i32
  }
  func.func @transform_10(%arg0: i32) -> (i32, i32, i32) {
    %c0_i32 = arith.constant 0 : i32
    %c0_i32_0 = arith.constant 0 : i32
    %c0_i32_1 = arith.constant 0 : i32
    %c0_i32_2 = arith.constant 0 : i32
    return %c0_i32, %c0_i32_0, %c0_i32_1 : i32, i32, i32
  }
  func.func @transform_11(%arg0: i32) -> (i32, i32, i32) {
    %c0_i32 = arith.constant 0 : i32
    %c0_i32_0 = arith.constant 0 : i32
    %c0_i32_1 = arith.constant 0 : i32
    %c0_i32_2 = arith.constant 0 : i32
    return %c0_i32, %c0_i32_0, %c0_i32_1 : i32, i32, i32
  }
  func.func @transform_12(%arg0: i32) -> (i32, i32, i32) {
    %c0_i32 = arith.constant 0 : i32
    %c0_i32_0 = arith.constant 0 : i32
    %c0_i32_1 = arith.constant 0 : i32
    %c0_i32_2 = arith.constant 0 : i32
    return %c0_i32, %c0_i32_0, %c0_i32_1 : i32, i32, i32
  }
  func.func @transform_13(%arg0: i32) -> (i32, i32, i32) {
    %c0_i32 = arith.constant 0 : i32
    %c0_i32_0 = arith.constant 0 : i32
    %c0_i32_1 = arith.constant 0 : i32
    %c0_i32_2 = arith.constant 0 : i32
    return %c0_i32, %c0_i32_0, %c0_i32_1 : i32, i32, i32
  }
  func.func @transform_14(%arg0: i32) -> (i32, i32) {
    %c0_i32 = arith.constant 0 : i32
    %c0_i32_0 = arith.constant 0 : i32
    %c0_i32_1 = arith.constant 0 : i32
    return %c0_i32, %c0_i32_0 : i32, i32
  }
  func.func @transform_15(%arg0: i32) -> (i32, i32, i32) {
    %c0_i32 = arith.constant 0 : i32
    %c0_i32_0 = arith.constant 0 : i32
    %c0_i32_1 = arith.constant 0 : i32
    return %arg0, %c0_i32, %c0_i32_0 : i32, i32, i32
  }
  func.func @transform_16(%arg0: i32) -> (i32, i32, i32) {
    %c0_i32 = arith.constant 0 : i32
    %c0_i32_0 = arith.constant 0 : i32
    %c0_i32_1 = arith.constant 0 : i32
    return %arg0, %c0_i32, %c0_i32_0 : i32, i32, i32
  }
}

</mosaic_0001>

<llo_original>
// kernel: pointer_encoder_forward.1
$region0: #{pointer_encoder_forward.1}
  #allocation0 [shape = 'u32[]', space=smem, size = 0x4, offset = 0x4, fixed_abs, tag = 'smem constant byte address 0x4 - core index']
  #allocation1 [shape = 'u32[144,128]{1,0:T(1,128)}', space=vmem, size = 0x12000, scoped, tag = 'internal scratch']
  %s0 = inlined_call_operand.vmem [shape: f32[2,8,32], index: 0, kind: input, shape index: {}]
  %s1 = inlined_call_operand.vmem [shape: f32[2,1,8], index: 1, kind: input, shape index: {}]
  %s2 = inlined_call_operand.vmem [shape: f32[2,32,96], index: 2, kind: input, shape index: {}]
  %s3 = inlined_call_operand.vmem [shape: f32[2,1,96], index: 3, kind: input, shape index: {}]
  %s4 = inlined_call_operand.vmem [shape: f32[2,32,32], index: 4, kind: input, shape index: {}]
  %s5 = inlined_call_operand.vmem [shape: f32[2,1,32], index: 5, kind: input, shape index: {}]
  %s6 = inlined_call_operand.vmem [shape: f32[2,1,32], index: 6, kind: input, shape index: {}]
  %s7 = inlined_call_operand.vmem [shape: f32[2,1,32], index: 7, kind: input, shape index: {}]
  %s8 = inlined_call_operand.vmem [shape: f32[2,32,64], index: 8, kind: input, shape index: {}]
  %s9 = inlined_call_operand.vmem [shape: f32[2,1,64], index: 9, kind: input, shape index: {}]
  %s10 = inlined_call_operand.vmem [shape: f32[2,64,32], index: 10, kind: input, shape index: {}]
  %s11 = inlined_call_operand.vmem [shape: f32[2,1,32], index: 11, kind: input, shape index: {}]
  %s12 = inlined_call_operand.vmem [shape: f32[2,1,32], index: 12, kind: input, shape index: {}]
  %s13 = inlined_call_operand.vmem [shape: f32[2,1,32], index: 13, kind: input, shape index: {}]
  %s14 = inlined_call_operand.vmem [shape: f32[32,32], index: 14, kind: input, shape index: {}]
  %s15 = inlined_call_operand.hbm [shape: f32[2,8,32], index: 15, kind: output, shape index: {0}]
  %s16 = inlined_call_operand.hbm [shape: f32[2,8,32], index: 16, kind: output, shape index: {1}]
  %17 = xla_tuple %s15, %s16
  %s18 = sld [smem:[#allocation0]]
  $region101: #{pointer_encoder_forward.1} parent=0
    _
  %s20 = ssub.s32 1, %s18
  %s21 = scalar_select 0, %s20, %s18
  $region1: #{pointer_encoder_forward.1} parent=0
    #allocation2 [shape = 'u8[8192]{0}', space=vmem, size = 0x2000, scoped, tag = 'output window, operand 0']
    #allocation3 [shape = 's32[2]{0}', space=sflag, size = 0x8, scoped, tag = 'scoped memory for pointer_encoder_forward.1']
    #allocation4 [shape = 'u8[8192]{0}', space=vmem, size = 0x2000, scoped, tag = 'output window, operand 1']
    #allocation5 [shape = 's32[2]{0}', space=sflag, size = 0x8, scoped, tag = 'scoped memory for pointer_encoder_forward.1']
    %22 = vsyncpa [#allocation3], 0
    %s23 = scalar_lea.sflag [#allocation3], 1
    %24 = vsyncpa %s23, 0
    %25 = vsyncpa [#allocation5], 0
    %s26 = scalar_lea.sflag [#allocation5], 1
    %27 = vsyncpa %s26, 0
    loop: start=0, step=1, limit=4
    $region2: #{pointer_encoder_forward.1} parent=1 // loop_pre_header
      _
    $region3: #{pointer_encoder_forward.1} parent=1 // loop_header
      %s29 = sphi 0, %s33
      %p30 = scmp.ge.s32.totalorder %s29, 4
      %s39 = sphi 0, %s41
      %s42 = sphi 0, %s39
      %s43 = sphi 0, %s42
      %s59 = sphi 0, %s43
      %s65 = sphi 0, %s67
      %s68 = sphi 0, %s65
      %s69 = sphi 0, %s68
      %s85 = sphi 0, %s69
      %s89 = sphi 0, %s89
      %s91 = sphi 0, %s89
      %s92 = sphi 0, %s91
      %s106 = sphi 0, %s92
      %s110 = sphi 0, %s110
      %s112 = sphi 0, %s110
      %s113 = sphi 0, %s112
      %s127 = sphi 0, %s113
      %s131 = sphi 0, %s131
      %s133 = sphi 0, %s131
      %s134 = sphi 0, %s133
      %s148 = sphi 0, %s134
      %s152 = sphi 0, %s152
      %s154 = sphi 0, %s152
      %s155 = sphi 0, %s154
      %s169 = sphi 0, %s155
      %s173 = sphi 0, %s173
      %s175 = sphi 0, %s173
      %s176 = sphi 0, %s175
      %s190 = sphi 0, %s176
      %s194 = sphi 0, %s194
      %s196 = sphi 0, %s194
      %s197 = sphi 0, %s196
      %s211 = sphi 0, %s197
      %s215 = sphi 0, %s215
      %s217 = sphi 0, %s215
      %s218 = sphi 0, %s217
      %s232 = sphi 0, %s218
      %s236 = sphi 0, %s236
      %s238 = sphi 0, %s236
      %s239 = sphi 0, %s238
      %s253 = sphi 0, %s239
      %s257 = sphi 0, %s257
      %s259 = sphi 0, %s257
      %s260 = sphi 0, %s259
      %s274 = sphi 0, %s260
      %s278 = sphi 0, %s278
      %s280 = sphi 0, %s278
      %s281 = sphi 0, %s280
      %s295 = sphi 0, %s281
      %s299 = sphi 0, %s299
      %s301 = sphi 0, %s299
      %s302 = sphi 0, %s301
      %s316 = sphi 0, %s302
      %s320 = sphi 0, %s320
      %s322 = sphi 0, %s320
      %s323 = sphi 0, %s322
      %s337 = sphi 0, %s323
      %s341 = sphi 0, %s341
      %s343 = sphi 0, %s341
      %s344 = sphi 0, %s343
      %s358 = sphi 0, %s344
      %s364 = sphi 0, %s366
      %s367 = sphi 0, %s364
      %s368 = sphi 0, %s367
      %s384 = sphi 0, %s368
      %s390 = sphi 0, %s392
      %s393 = sphi 0, %s390
      %s394 = sphi 0, %s393
      %s410 = sphi 0, %s394
    $region4: #{pointer_encoder_forward.1} parent=1 // loop_header_branch
      %32 = sbr.rel (%p30) target = $region8
    $region5: #{pointer_encoder_forward.1} parent=1 // loop_body
      %s34 = ssub.s32 %s29, 1
      %s35 = ssub.s32 %s29, 2
      %s36 = sadd.s32 %s29, 1
      %s37 = ssub.s32 %s29, %s36
      %p38 = scmp.eq.s32.totalorder %s37, 0
      %s40 = sadd.s32 %s39, 1
      %s41 = scalar_select %p38, %s39, %s40
      %p44 = pneg %p38
      %p45 = scmp.eq.s32.totalorder %s29, 1
      %p46 = por %p44, %p45
      %p47 = scmp.ne.s32.totalorder %s39, %s42
      %p48 = scmp.eq.s32.totalorder %s29, 0
      %p49 = por %p47, %p48
      %p50 = scmp.ne.s32.totalorder %s39, %s42
      %p51 = scmp.eq.s32.totalorder %s34, 1
      %p52 = por %p50, %p51
      %p53 = scmp.ne.s32.totalorder %s42, %s43
      %p54 = scmp.eq.s32.totalorder %s34, 0
      %p55 = por %p53, %p54
      %p56 = scmp.ne.s32.totalorder %s42, %s43
      %p57 = scmp.eq.s32.totalorder %s35, 1
      %p58 = por %p56, %p57
      %p60 = scmp.ne.s32.totalorder %s43, %s59
      %p61 = scmp.eq.s32.totalorder %s35, 0
      %p62 = por %p60, %p61
      %s63 = ssub.s32 %s29, %s36
      %p64 = scmp.eq.s32.totalorder %s63, 0
      %s66 = sadd.s32 %s65, 1
      %s67 = scalar_select %p64, %s65, %s66
      %p70 = pneg %p64
      %p71 = scmp.eq.s32.totalorder %s29, 1
      %p72 = por %p70, %p71
      %p73 = scmp.ne.s32.totalorder %s65, %s68
      %p74 = scmp.eq.s32.totalorder %s29, 0
      %p75 = por %p73, %p74
      %p76 = scmp.ne.s32.totalorder %s65, %s68
      %p77 = scmp.eq.s32.totalorder %s34, 1
      %p78 = por %p76, %p77
      %p79 = scmp.ne.s32.totalorder %s68, %s69
      %p80 = scmp.eq.s32.totalorder %s34, 0
      %p81 = por %p79, %p80
      %p82 = scmp.ne.s32.totalorder %s68, %s69
      %p83 = scmp.eq.s32.totalorder %s35, 1
      %p84 = por %p82, %p83
      %p86 = scmp.ne.s32.totalorder %s69, %s85
      %p87 = scmp.eq.s32.totalorder %s35, 0
      %p88 = por %p86, %p87
      %s90 = sadd.s32 %s89, 1
      %p93 = scmp.eq.s32.totalorder %s29, 1
      %p94 = scmp.ne.s32.totalorder %s89, %s91
      %p95 = scmp.eq.s32.totalorder %s29, 0
      %p96 = por %p94, %p95
      %p97 = scmp.ne.s32.totalorder %s89, %s91
      %p98 = scmp.eq.s32.totalorder %s34, 1
      %p99 = por %p97, %p98
      %p100 = scmp.ne.s32.totalorder %s91, %s92
      %p101 = scmp.eq.s32.totalorder %s34, 0
      %p102 = por %p100, %p101
      %p103 = scmp.ne.s32.totalorder %s91, %s92
      %p104 = scmp.eq.s32.totalorder %s35, 1
      %p105 = por %p103, %p104
      %p107 = scmp.ne.s32.totalorder %s92, %s106
      %p108 = scmp.eq.s32.totalorder %s35, 0
      %p109 = por %p107, %p108
      %s111 = sadd.s32 %s110, 1
      %p114 = scmp.eq.s32.totalorder %s29, 1
      %p115 = scmp.ne.s32.totalorder %s110, %s112
      %p116 = scmp.eq.s32.totalorder %s29, 0
      %p117 = por %p115, %p116
      %p118 = scmp.ne.s32.totalorder %s110, %s112
      %p119 = scmp.eq.s32.totalorder %s34, 1
      %p120 = por %p118, %p119
      %p121 = scmp.ne.s32.totalorder %s112, %s113
      %p122 = scmp.eq.s32.totalorder %s34, 0
      %p123 = por %p121, %p122
      %p124 = scmp.ne.s32.totalorder %s112, %s113
      %p125 = scmp.eq.s32.totalorder %s35, 1
      %p126 = por %p124, %p125
      %p128 = scmp.ne.s32.totalorder %s113, %s127
      %p129 = scmp.eq.s32.totalorder %s35, 0
      %p130 = por %p128, %p129
      %s132 = sadd.s32 %s131, 1
      %p135 = scmp.eq.s32.totalorder %s29, 1
      %p136 = scmp.ne.s32.totalorder %s131, %s133
      %p137 = scmp.eq.s32.totalorder %s29, 0
      %p138 = por %p136, %p137
      %p139 = scmp.ne.s32.totalorder %s131, %s133
      %p140 = scmp.eq.s32.totalorder %s34, 1
      %p141 = por %p139, %p140
      %p142 = scmp.ne.s32.totalorder %s133, %s134
      %p143 = scmp.eq.s32.totalorder %s34, 0
      %p144 = por %p142, %p143
      %p145 = scmp.ne.s32.totalorder %s133, %s134
      %p146 = scmp.eq.s32.totalorder %s35, 1
      %p147 = por %p145, %p146
      %p149 = scmp.ne.s32.totalorder %s134, %s148
      %p150 = scmp.eq.s32.totalorder %s35, 0
      %p151 = por %p149, %p150
      %s153 = sadd.s32 %s152, 1
      %p156 = scmp.eq.s32.totalorder %s29, 1
      %p157 = scmp.ne.s32.totalorder %s152, %s154
      %p158 = scmp.eq.s32.totalorder %s29, 0
      %p159 = por %p157, %p158
      %p160 = scmp.ne.s32.totalorder %s152, %s154
      %p161 = scmp.eq.s32.totalorder %s34, 1
      %p162 = por %p160, %p161
      %p163 = scmp.ne.s32.totalorder %s154, %s155
      %p164 = scmp.eq.s32.totalorder %s34, 0
      %p165 = por %p163, %p164
      %p166 = scmp.ne.s32.totalorder %s154, %s155
      %p167 = scmp.eq.s32.totalorder %s35, 1
      %p168 = por %p166, %p167
      %p170 = scmp.ne.s32.totalorder %s155, %s169
      %p171 = scmp.eq.s32.totalorder %s35, 0
      %p172 = por %p170, %p171
      %s174 = sadd.s32 %s173, 1
      %p177 = scmp.eq.s32.totalorder %s29, 1
      %p178 = scmp.ne.s32.totalorder %s173, %s175
      %p179 = scmp.eq.s32.totalorder %s29, 0
      %p180 = por %p178, %p179
      %p181 = scmp.ne.s32.totalorder %s173, %s175
      %p182 = scmp.eq.s32.totalorder %s34, 1
      %p183 = por %p181, %p182
      %p184 = scmp.ne.s32.totalorder %s175, %s176
      %p185 = scmp.eq.s32.totalorder %s34, 0
      %p186 = por %p184, %p185
      %p187 = scmp.ne.s32.totalorder %s175, %s176
      %p188 = scmp.eq.s32.totalorder %s35, 1
      %p189 = por %p187, %p188
      %p191 = scmp.ne.s32.totalorder %s176, %s190
      %p192 = scmp.eq.s32.totalorder %s35, 0
      %p193 = por %p191, %p192
      %s195 = sadd.s32 %s194, 1
      %p198 = scmp.eq.s32.totalorder %s29, 1
      %p199 = scmp.ne.s32.totalorder %s194, %s196
      %p200 = scmp.eq.s32.totalorder %s29, 0
      %p201 = por %p199, %p200
      %p202 = scmp.ne.s32.totalorder %s194, %s196
      %p203 = scmp.eq.s32.totalorder %s34, 1
      %p204 = por %p202, %p203
      %p205 = scmp.ne.s32.totalorder %s196, %s197
      %p206 = scmp.eq.s32.totalorder %s34, 0
      %p207 = por %p205, %p206
      %p208 = scmp.ne.s32.totalorder %s196, %s197
      %p209 = scmp.eq.s32.totalorder %s35, 1
      %p210 = por %p208, %p209
      %p212 = scmp.ne.s32.totalorder %s197, %s211
      %p213 = scmp.eq.s32.totalorder %s35, 0
      %p214 = por %p212, %p213
      %s216 = sadd.s32 %s215, 1
      %p219 = scmp.eq.s32.totalorder %s29, 1
      %p220 = scmp.ne.s32.totalorder %s215, %s217
      %p221 = scmp.eq.s32.totalorder %s29, 0
      %p222 = por %p220, %p221
      %p223 = scmp.ne.s32.totalorder %s215, %s217
      %p224 = scmp.eq.s32.totalorder %s34, 1
      %p225 = por %p223, %p224
      %p226 = scmp.ne.s32.totalorder %s217, %s218
      %p227 = scmp.eq.s32.totalorder %s34, 0
      %p228 = por %p226, %p227
      %p229 = scmp.ne.s32.totalorder %s217, %s218
      %p230 = scmp.eq.s32.totalorder %s35, 1
      %p231 = por %p229, %p230
      %p233 = scmp.ne.s32.totalorder %s218, %s232
      %p234 = scmp.eq.s32.totalorder %s35, 0
      %p235 = por %p233, %p234
      %s237 = sadd.s32 %s236, 1
      %p240 = scmp.eq.s32.totalorder %s29, 1
      %p241 = scmp.ne.s32.totalorder %s236, %s238
      %p242 = scmp.eq.s32.totalorder %s29, 0
      %p243 = por %p241, %p242
      %p244 = scmp.ne.s32.totalorder %s236, %s238
      %p245 = scmp.eq.s32.totalorder %s34, 1
      %p246 = por %p244, %p245
      %p247 = scmp.ne.s32.totalorder %s238, %s239
      %p248 = scmp.eq.s32.totalorder %s34, 0
      %p249 = por %p247, %p248
      %p250 = scmp.ne.s32.totalorder %s238, %s239
      %p251 = scmp.eq.s32.totalorder %s35, 1
      %p252 = por %p250, %p251
      %p254 = scmp.ne.s32.totalorder %s239, %s253
      %p255 = scmp.eq.s32.totalorder %s35, 0
      %p256 = por %p254, %p255
      %s258 = sadd.s32 %s257, 1
      %p261 = scmp.eq.s32.totalorder %s29, 1
      %p262 = scmp.ne.s32.totalorder %s257, %s259
      %p263 = scmp.eq.s32.totalorder %s29, 0
      %p264 = por %p262, %p263
      %p265 = scmp.ne.s32.totalorder %s257, %s259
      %p266 = scmp.eq.s32.totalorder %s34, 1
      %p267 = por %p265, %p266
      %p268 = scmp.ne.s32.totalorder %s259, %s260
      %p269 = scmp.eq.s32.totalorder %s34, 0
      %p270 = por %p268, %p269
      %p271 = scmp.ne.s32.totalorder %s259, %s260
      %p272 = scmp.eq.s32.totalorder %s35, 1
      %p273 = por %p271, %p272
      %p275 = scmp.ne.s32.totalorder %s260, %s274
      %p276 = scmp.eq.s32.totalorder %s35, 0
      %p277 = por %p275, %p276
      %s279 = sadd.s32 %s278, 1
      %p282 = scmp.eq.s32.totalorder %s29, 1
      %p283 = scmp.ne.s32.totalorder %s278, %s280
      %p284 = scmp.eq.s32.totalorder %s29, 0
      %p285 = por %p283, %p284
      %p286 = scmp.ne.s32.totalorder %s278, %s280
      %p287 = scmp.eq.s32.totalorder %s34, 1
      %p288 = por %p286, %p287
      %p289 = scmp.ne.s32.totalorder %s280, %s281
      %p290 = scmp.eq.s32.totalorder %s34, 0
      %p291 = por %p289, %p290
      %p292 = scmp.ne.s32.totalorder %s280, %s281
      %p293 = scmp.eq.s32.totalorder %s35, 1
      %p294 = por %p292, %p293
      %p296 = scmp.ne.s32.totalorder %s281, %s295
      %p297 = scmp.eq.s32.totalorder %s35, 0
      %p298 = por %p296, %p297
      %s300 = sadd.s32 %s299, 1
      %p303 = scmp.eq.s32.totalorder %s29, 1
      %p304 = scmp.ne.s32.totalorder %s299, %s301
      %p305 = scmp.eq.s32.totalorder %s29, 0
      %p306 = por %p304, %p305
      %p307 = scmp.ne.s32.totalorder %s299, %s301
      %p308 = scmp.eq.s32.totalorder %s34, 1
      %p309 = por %p307, %p308
      %p310 = scmp.ne.s32.totalorder %s301, %s302
      %p311 = scmp.eq.s32.totalorder %s34, 0
      %p312 = por %p310, %p311
      %p313 = scmp.ne.s32.totalorder %s301, %s302
      %p314 = scmp.eq.s32.totalorder %s35, 1
      %p315 = por %p313, %p314
      %p317 = scmp.ne.s32.totalorder %s302, %s316
      %p318 = scmp.eq.s32.totalorder %s35, 0
      %p319 = por %p317, %p318
      %s321 = sadd.s32 %s320, 1
      %p324 = scmp.eq.s32.totalorder %s29, 1
      %p325 = scmp.ne.s32.totalorder %s320, %s322
      %p326 = scmp.eq.s32.totalorder %s29, 0
      %p327 = por %p325, %p326
      %p328 = scmp.ne.s32.totalorder %s320, %s322
      %p329 = scmp.eq.s32.totalorder %s34, 1
      %p330 = por %p328, %p329
      %p331 = scmp.ne.s32.totalorder %s322, %s323
      %p332 = scmp.eq.s32.totalorder %s34, 0
      %p333 = por %p331, %p332
      %p334 = scmp.ne.s32.totalorder %s322, %s323
      %p335 = scmp.eq.s32.totalorder %s35, 1
      %p336 = por %p334, %p335
      %p338 = scmp.ne.s32.totalorder %s323, %s337
      %p339 = scmp.eq.s32.totalorder %s35, 0
      %p340 = por %p338, %p339
      %s342 = sadd.s32 %s341, 1
      %p345 = scmp.eq.s32.totalorder %s29, 1
      %p346 = scmp.ne.s32.totalorder %s341, %s343
      %p347 = scmp.eq.s32.totalorder %s29, 0
      %p348 = por %p346, %p347
      %p349 = scmp.ne.s32.totalorder %s341, %s343
      %p350 = scmp.eq.s32.totalorder %s34, 1
      %p351 = por %p349, %p350
      %p352 = scmp.ne.s32.totalorder %s343, %s344
      %p353 = scmp.eq.s32.totalorder %s34, 0
      %p354 = por %p352, %p353
      %p355 = scmp.ne.s32.totalorder %s343, %s344
      %p356 = scmp.eq.s32.totalorder %s35, 1
      %p357 = por %p355, %p356
      %p359 = scmp.ne.s32.totalorder %s344, %s358
      %p360 = scmp.eq.s32.totalorder %s35, 0
      %p361 = por %p359, %p360
      %s362 = ssub.s32 %s29, %s36
      %p363 = scmp.eq.s32.totalorder %s362, 0
      %s365 = sadd.s32 %s364, 1
      %s366 = scalar_select %p363, %s364, %s365
      %p369 = pneg %p363
      %p370 = scmp.eq.s32.totalorder %s29, 1
      %p371 = por %p369, %p370
      %p372 = scmp.ne.s32.totalorder %s364, %s367
      %p373 = scmp.eq.s32.totalorder %s29, 0
      %p374 = por %p372, %p373
      %p375 = scmp.ne.s32.totalorder %s364, %s367
      %p376 = scmp.eq.s32.totalorder %s34, 1
      %p377 = por %p375, %p376
      %p378 = scmp.ne.s32.totalorder %s367, %s368
      %p379 = scmp.eq.s32.totalorder %s34, 0
      %p380 = por %p378, %p379
      %p381 = scmp.ne.s32.totalorder %s367, %s368
      %p382 = scmp.eq.s32.totalorder %s35, 1
      %p383 = por %p381, %p382
      %p385 = scmp.ne.s32.totalorder %s368, %s384
      %p386 = scmp.eq.s32.totalorder %s35, 0
      %p387 = por %p385, %p386
      %s388 = ssub.s32 %s29, %s36
      %p389 = scmp.eq.s32.totalorder %s388, 0
      %s391 = sadd.s32 %s390, 1
      %s392 = scalar_select %p389, %s390, %s391
      %p395 = pneg %p389
      %p396 = scmp.eq.s32.totalorder %s29, 1
      %p397 = por %p395, %p396
      %p398 = scmp.ne.s32.totalorder %s390, %s393
      %p399 = scmp.eq.s32.totalorder %s29, 0
      %p400 = por %p398, %p399
      %p401 = scmp.ne.s32.totalorder %s390, %s393
      %p402 = scmp.eq.s32.totalorder %s34, 1
      %p403 = por %p401, %p402
      %p404 = scmp.ne.s32.totalorder %s393, %s394
      %p405 = scmp.eq.s32.totalorder %s34, 0
      %p406 = por %p404, %p405
      %p407 = scmp.ne.s32.totalorder %s393, %s394
      %p408 = scmp.eq.s32.totalorder %s35, 1
      %p409 = por %p407, %p408
      %p411 = scmp.ne.s32.totalorder %s394, %s410
      %p412 = scmp.eq.s32.totalorder %s35, 0
      %p413 = por %p411, %p412
      %p414 = scmp.le.s32.totalorder 1, %s29
      %p415 = scmp.lt.s32.totalorder %s29, 3
      %p416 = pnand %p414, %p415
      %p417 = pneg %p416
      // Predicated region
      $region9: #{pointer_encoder_forward.1} parent=5 // pred_check
        _
      $region10: #{pointer_encoder_forward.1} parent=5 // pred_check_branch
        %419 = sbr.rel (%p416) target = $region12
      $region11: #{pointer_encoder_forward.1} parent=5 // pred_region
        %s420 = ssub.s32 %s29, 1
        // Predicated region
        $region13: #{pointer_encoder_forward.1} parent=11 // pred_check
          %p421 = pneg %p102
        $region14: #{pointer_encoder_forward.1} parent=11 // pred_check_branch
          %423 = sbr.rel (%p421) target = $region16
        $region15: #{pointer_encoder_forward.1} parent=11 // pred_region
          _
        $region16: #{pointer_encoder_forward.1} parent=11 // pred_fallthru
          _
        // Predicated region
        $region17: #{pointer_encoder_forward.1} parent=11 // pred_check
          %p424 = pneg %p123
        $region18: #{pointer_encoder_forward.1} parent=11 // pred_check_branch
          %426 = sbr.rel (%p424) target = $region20
        $region19: #{pointer_encoder_forward.1} parent=11 // pred_region
          _
        $region20: #{pointer_encoder_forward.1} parent=11 // pred_fallthru
          _
        // Predicated region
        $region21: #{pointer_encoder_forward.1} parent=11 // pred_check
          %p427 = pneg %p144
        $region22: #{pointer_encoder_forward.1} parent=11 // pred_check_branch
          %429 = sbr.rel (%p427) target = $region24
        $region23: #{pointer_encoder_forward.1} parent=11 // pred_region
          _
        $region24: #{pointer_encoder_forward.1} parent=11 // pred_fallthru
          _
        // Predicated region
        $region25: #{pointer_encoder_forward.1} parent=11 // pred_check
          %p430 = pneg %p165
        $region26: #{pointer_encoder_forward.1} parent=11 // pred_check_branch
          %432 = sbr.rel (%p430) target = $region28
        $region27: #{pointer_encoder_forward.1} parent=11 // pred_region
          _
        $region28: #{pointer_encoder_forward.1} parent=11 // pred_fallthru
          _
        // Predicated region
        $region29: #{pointer_encoder_forward.1} parent=11 // pred_check
          %p433 = pneg %p186
        $region30: #{pointer_encoder_forward.1} parent=11 // pred_check_branch
          %435 = sbr.rel (%p433) target = $region32
        $region31: #{pointer_encoder_forward.1} parent=11 // pred_region
          _
        $region32: #{pointer_encoder_forward.1} parent=11 // pred_fallthru
          _
        // Predicated region
        $region33: #{pointer_encoder_forward.1} parent=11 // pred_check
          %p436 = pneg %p207
        $region34: #{pointer_encoder_forward.1} parent=11 // pred_check_branch
          %438 = sbr.rel (%p436) target = $region36
        $region35: #{pointer_encoder_forward.1} parent=11 // pred_region
          _
        $region36: #{pointer_encoder_forward.1} parent=11 // pred_fallthru
          _
        // Predicated region
        $region37: #{pointer_encoder_forward.1} parent=11 // pred_check
          %p439 = pneg %p228
        $region38: #{pointer_encoder_forward.1} parent=11 // pred_check_branch
          %441 = sbr.rel (%p439) target = $region40
        $region39: #{pointer_encoder_forward.1} parent=11 // pred_region
          _
        $region40: #{pointer_encoder_forward.1} parent=11 // pred_fallthru
          _
        // Predicated region
        $region41: #{pointer_encoder_forward.1} parent=11 // pred_check
          %p442 = pneg %p249
        $region42: #{pointer_encoder_forward.1} parent=11 // pred_check_branch
          %444 = sbr.rel (%p442) target = $region44
        $region43: #{pointer_encoder_forward.1} parent=11 // pred_region
          _
        $region44: #{pointer_encoder_forward.1} parent=11 // pred_fallthru
          _
        // Predicated region
        $region45: #{pointer_encoder_forward.1} parent=11 // pred_check
          %p445 = pneg %p270
        $region46: #{pointer_encoder_forward.1} parent=11 // pred_check_branch
          %447 = sbr.rel (%p445) target = $region48
        $region47: #{pointer_encoder_forward.1} parent=11 // pred_region
          _
        $region48: #{pointer_encoder_forward.1} parent=11 // pred_fallthru
          _
        // Predicated region
        $region49: #{pointer_encoder_forward.1} parent=11 // pred_check
          %p448 = pneg %p291
        $region50: #{pointer_encoder_forward.1} parent=11 // pred_check_branch
          %450 = sbr.rel (%p448) target = $region52
        $region51: #{pointer_encoder_forward.1} parent=11 // pred_region
          _
        $region52: #{pointer_encoder_forward.1} parent=11 // pred_fallthru
          _
        // Predicated region
        $region53: #{pointer_encoder_forward.1} parent=11 // pred_check
          %p451 = pneg %p312
        $region54: #{pointer_encoder_forward.1} parent=11 // pred_check_branch
          %453 = sbr.rel (%p451) target = $region56
        $region55: #{pointer_encoder_forward.1} parent=11 // pred_region
          _
        $region56: #{pointer_encoder_forward.1} parent=11 // pred_fallthru
          _
        // Predicated region
        $region57: #{pointer_encoder_forward.1} parent=11 // pred_check
          %p454 = pneg %p333
        $region58: #{pointer_encoder_forward.1} parent=11 // pred_check_branch
          %456 = sbr.rel (%p454) target = $region60
        $region59: #{pointer_encoder_forward.1} parent=11 // pred_region
          _
        $region60: #{pointer_encoder_forward.1} parent=11 // pred_fallthru
          _
        // Predicated region
        $region61: #{pointer_encoder_forward.1} parent=11 // pred_check
          %p457 = pneg %p354
        $region62: #{pointer_encoder_forward.1} parent=11 // pred_check_branch
          %459 = sbr.rel (%p457) target = $region64
        $region63: #{pointer_encoder_forward.1} parent=11 // pred_region
          _
        $region64: #{pointer_encoder_forward.1} parent=11 // pred_fallthru
          _
      $region12: #{pointer_encoder_forward.1} parent=5 // pred_fallthru
        _
      %p460 = scmp.lt.s32.totalorder %s29, 2
      // Predicated region
      $region65: #{pointer_encoder_forward.1} parent=5 // pred_check
        %p461 = pneg %p460
      $region66: #{pointer_encoder_forward.1} parent=5 // pred_check_branch
        %463 = sbr.rel (%p461) target = $region68
      $region67: #{pointer_encoder_forward.1} parent=5 // pred_region
        // Predicated region
        $region69: #{pointer_encoder_forward.1} parent=67 // pred_check
          %p464 = pneg %p49
        $region70: #{pointer_encoder_forward.1} parent=67 // pred_check_branch
          %466 = sbr.rel (%p464) target = $region72
        $region71: #{pointer_encoder_forward.1} parent=67 // pred_region
          %p467 = scmp.lt.s32.totalorder %s29, 1
          %s468 = scalar_select %p467, %s29, 1
          %s469 = smul.addr %s468, 8
          %s470 = scalar_lea.vmem %s0, %s469
        $region72: #{pointer_encoder_forward.1} parent=67 // pred_fallthru
          _
        // Predicated region
        $region73: #{pointer_encoder_forward.1} parent=67 // pred_check
          %p471 = pneg %p75
        $region74: #{pointer_encoder_forward.1} parent=67 // pred_check_branch
          %473 = sbr.rel (%p471) target = $region76
        $region75: #{pointer_encoder_forward.1} parent=67 // pred_region
          %p474 = scmp.lt.s32.totalorder %s29, 1
          %s475 = scalar_select %p474, %s29, 1
          %s476 = scalar_lea.vmem %s1, %s475
        $region76: #{pointer_encoder_forward.1} parent=67 // pred_fallthru
          _
      $region68: #{pointer_encoder_forward.1} parent=5 // pred_fallthru
        _
      %p477 = scmp.le.s32.totalorder 1, %s29
      %p478 = scmp.lt.s32.totalorder %s29, 3
      %p479 = pnand %p477, %p478
      %p480 = pneg %p479
      // Predicated region
      $region77: #{pointer_encoder_forward.1} parent=5 // pred_check
        _
      $region78: #{pointer_encoder_forward.1} parent=5 // pred_check_branch
        %482 = sbr.rel (%p479) target = $region80
      $region79: #{pointer_encoder_forward.1} parent=5 // pred_region
        %s483 = ssub.s32 %s29, 1
        %p484 = scmp.lt.s32.totalorder %s34, 1
        %s485 = scalar_select %p484, %s34, 1
        %s486 = smul.addr %s485, 8
        %s487 = scalar_lea.vmem %s0, %s486
        %p488 = pneg %p55
        %p489 = pneg %p52
        %p490 = scmp.lt.s32.totalorder %s34, 1
        %s491 = scalar_select %p490, %s34, 1
        %s492 = scalar_lea.vmem %s1, %s491
        %p493 = pneg %p81
        %p494 = pneg %p78
        %p495 = pneg %p102
        %p496 = pneg %p99
        %p497 = pneg %p123
        %p498 = pneg %p120
        %p499 = pneg %p144
        %p500 = pneg %p141
        %p501 = pneg %p165
        %p502 = pneg %p162
        %p503 = pneg %p186
        %p504 = pneg %p183
        %p505 = pneg %p207
        %p506 = pneg %p204
        %p507 = pneg %p228
        %p508 = pneg %p225
        %p509 = pneg %p249
        %p510 = pneg %p246
        %p511 = pneg %p270
        %p512 = pneg %p267
        %p513 = pneg %p291
        %p514 = pneg %p288
        %p515 = pneg %p312
        %p516 = pneg %p309
        %p517 = pneg %p333
        %p518 = pneg %p330
        %p519 = pneg %p354
        %p520 = pneg %p351
        %p521 = pneg %p380
        %p522 = pneg %p377
        %s523 = sand.u32 %s367, 1
        %s524 = scalar_lea.sflag [#allocation3], %s523
        %s525 = sand.u32 %s367, 1
        %s526 = smul.addr %s525, 8
        %s527 = scalar_lea.vmem [#allocation2], %s526
        %p528 = pneg %p406
        %p529 = pneg %p403
        %s530 = sand.u32 %s393, 1
        %s531 = scalar_lea.sflag [#allocation5], %s530
        %s532 = sand.u32 %s393, 1
        %s533 = smul.addr %s532, 8
        %s534 = scalar_lea.vmem [#allocation4], %s533
        %p535 = scmp.lt.s32.totalorder %s34, 1
        %s536 = scalar_select %p535, %s34, 1
        %s537 = smul.addr %s536, 8
        %s538 = scalar_lea.vmem %s0, %s537
        %p539 = scmp.lt.s32.totalorder %s34, 1
        %s540 = scalar_select %p539, %s34, 1
        %s541 = scalar_lea.vmem %s1, %s540
        %v542 = vld [vmem:[%s538] sm:$0xff]
        %v543 = vld [vmem:[%s541] sm:$0x1]
        %v544 = vld [vmem:[%s2] sm:$0xff]
        %v545 = vld [vmem:[%s2 + $0x8] sm:$0xff]
        %v546 = vld [vmem:[%s2 + $0x10] sm:$0xff]
        %v547 = vld [vmem:[%s2 + $0x18] sm:$0xff]
        %v548 = vld [vmem:[%s3] sm:$0x1]
        %v550 = vlaneseq
        %v551 = vshrl.u32 %v550, 7
        %v552 = vsub.s32 0, %v551
        %v553 = vrot.slane %v548, %v552
        %vm555 = vcmask 261120
        %v557 = vsel %vm555, %v542, 0
        %559 = vmatprep.subr.mxu0 0.0
        %560 = vmatpush1.msra.mxu0 %v544
        %561 = vmatprep.subr.mxu0 0.0
        %562 = vmatpush1.msra.mxu0 %v545
        %563 = vmatprep.subr.mxu0 0.0
        %564 = vmatpush1.msra.mxu0 %v546
        %565 = vmatprep.subr.mxu0 0.0
        %566 = vmatpush1.msra.mxu0 %v547
        %567 = vmatprep.subr.mxu0 0.0
        %568 = vmatpush1.msra.mxu0 0.0
        %569 = vmatprep.subr.mxu0 0.0
        %570 = vmatpush1.msra.mxu0 0.0
        %571 = vmatprep.subr.mxu0 0.0
        %572 = vmatpush1.msra.mxu0 0.0
        %573 = vmatprep.subr.mxu0 0.0
        %574 = vmatpush1.msra.mxu0 0.0
        %575 = vmatprep.subr.mxu0 0.0
        %576 = vmatpush1.msra.mxu0 0.0
        %577 = vmatprep.subr.mxu0 0.0
        %578 = vmatpush1.msra.mxu0 0.0
        %579 = vmatprep.subr.mxu0 0.0
        %580 = vmatpush1.msra.mxu0 0.0
        %581 = vmatprep.subr.mxu0 0.0
        %582 = vmatpush1.msra.mxu0 0.0
        %583 = vmatprep.subr.mxu0 0.0
        %584 = vmatpush1.msra.mxu0 0.0
        %585 = vmatprep.subr.mxu0 0.0
        %586 = vmatpush1.msra.mxu0 0.0
        %587 = vmatprep.subr.mxu0 0.0
        %588 = vmatpush1.msra.mxu0 0.0
        %589 = vmatprep.subr.mxu0 0.0
        %590 = vmatpush1.msra.mxu0 0.0
        %591 = vmatprep.subr.mxu0 0.0
        %592 = vmatpush1.msra.mxu0 0.0
        %593 = vmatprep.subr.mxu0 0.0
        %594 = vmatpush1.msra.mxu0 0.0
        %595 = vmatprep.subr.mxu0 0.0
        %596 = vmatpush1.msra.mxu0 0.0
        %597 = vmatprep.subr.mxu0 0.0
        %598 = vmatpush1.msra.mxu0 0.0
        %599 = vmatprep.subr.mxu0 0.0
        %600 = vmatpush1.msra.mxu0 0.0
        %601 = vmatprep.subr.mxu0 0.0
        %602 = vmatpush1.msra.mxu0 0.0
        %603 = vmatprep.subr.mxu0 0.0
        %604 = vmatpush1.msra.mxu0 0.0
        %605 = vmatprep.subr.mxu0 0.0
        %606 = vmatpush1.msra.mxu0 0.0
        %607 = vmatprep.subr.mxu0 0.0
        %608 = vmatpush1.msra.mxu0 0.0
        %609 = vmatprep.subr.mxu0 0.0
        %610 = vmatpush1.msra.mxu0 0.0
        %611 = vmatprep.subr.mxu0 0.0
        %612 = vmatpush1.msra.mxu0 0.0
        %613 = vmatprep.subr.mxu0 0.0
        %614 = vmatpush1.msra.mxu0 0.0
        %615 = vmatprep.subr.mxu0 0.0
        %616 = vmatpush1.msra.mxu0 0.0
        %617 = vmatprep.subr.mxu0 0.0
        %618 = vmatpush1.msra.mxu0 0.0
        %619 = vmatprep.subr.mxu0 0.0
        %620 = vmatpush1.msra.mxu0 0.0
        %621 = vmatprep.subr.mxu0 0.0
        %622 = vmatpush1.msra.mxu0 0.0
        %623 = vmatprep.mubr.f32.mxu0 0.0
        %624 = vmatmul.mubr.f32.gmra.mrb[0].mxu0 %v557
        %v625 = vpop.f32.mrb[0].mxu0
        %v626 = vadd.f32 %v553, %v625
        %v627 = vpop.f32.mrb[0].mxu0
        %628 = vdwg.mxu0
        %v629 = vmul.f32 %v626, 0.35355338
        %v630 = vld [vmem:[%s4] sm:$0xff]
        %v631 = vld [vmem:[%s4 + $0x8] sm:$0xff]
        %v632 = vld [vmem:[%s4 + $0x10] sm:$0xff]
        %v633 = vld [vmem:[%s4 + $0x18] sm:$0xff]
        %v635 = vlaneseq
        %v636 = vshrl.u32 %v635, 7
        %v637 = vsub.s32 0, %v636
        %v638 = vrot.slane %v543, %v637
        %641 = vrot.lane.b32.xlu0 %v626, 96
        %v642 = vpop.permute.xlu0 %641
        %vm643 = vcmask 64512
        %v645 = vsel %vm643, %v629, 0
        %v647 = vsel %vm643, %v642, 0
        %649 = vmatprep.subr.mxu0 0.0
        %650 = vmatpush1.xpose.msra.mxu0 %v647
        %651 = vmatprep.subr.mxu0 0.0
        %652 = vmatpush1.xpose.msra.mxu0 0.0
        %653 = vmatprep.subr.mxu0 0.0
        %654 = vmatpush1.xpose.msra.mxu0 0.0
        %655 = vmatprep.subr.mxu0 0.0
        %656 = vmatpush1.xpose.msra.mxu0 0.0
        %657 = vmatprep.subr.mxu0 0.0
        %658 = vmatpush1.xpose.msra.mxu0 0.0
        %659 = vmatprep.subr.mxu0 0.0
        %660 = vmatpush1.xpose.msra.mxu0 0.0
        %661 = vmatprep.subr.mxu0 0.0
        %662 = vmatpush1.xpose.msra.mxu0 0.0
        %663 = vmatprep.subr.mxu0 0.0
        %664 = vmatpush1.xpose.msra.mxu0 0.0
        %665 = vmatprep.subr.mxu0 0.0
        %666 = vmatpush1.xpose.msra.mxu0 0.0
        %667 = vmatprep.subr.mxu0 0.0
        %668 = vmatpush1.xpose.msra.mxu0 0.0
        %669 = vmatprep.subr.mxu0 0.0
        %670 = vmatpush1.xpose.msra.mxu0 0.0
        %671 = vmatprep.subr.mxu0 0.0
        %672 = vmatpush1.xpose.msra.mxu0 0.0
        %673 = vmatprep.subr.mxu0 0.0
        %674 = vmatpush1.xpose.msra.mxu0 0.0
        %675 = vmatprep.subr.mxu0 0.0
        %676 = vmatpush1.xpose.msra.mxu0 0.0
        %677 = vmatprep.subr.mxu0 0.0
        %678 = vmatpush1.xpose.msra.mxu0 0.0
        %679 = vmatprep.subr.mxu0 0.0
        %680 = vmatpush1.xpose.msra.mxu0 0.0
        %681 = vmatprep.subr.mxu0 0.0
        %682 = vmatpush1.xpose.msra.mxu0 0.0
        %683 = vmatprep.subr.mxu0 0.0
        %684 = vmatpush1.xpose.msra.mxu0 0.0
        %685 = vmatprep.subr.mxu0 0.0
        %686 = vmatpush1.xpose.msra.mxu0 0.0
        %687 = vmatprep.subr.mxu0 0.0
        %688 = vmatpush1.xpose.msra.mxu0 0.0
        %689 = vmatprep.subr.mxu0 0.0
        %690 = vmatpush1.xpose.msra.mxu0 0.0
        %691 = vmatprep.subr.mxu0 0.0
        %692 = vmatpush1.xpose.msra.mxu0 0.0
        %693 = vmatprep.subr.mxu0 0.0
        %694 = vmatpush1.xpose.msra.mxu0 0.0
        %695 = vmatprep.subr.mxu0 0.0
        %696 = vmatpush1.xpose.msra.mxu0 0.0
        %697 = vmatprep.subr.mxu0 0.0
        %698 = vmatpush1.xpose.msra.mxu0 0.0
        %699 = vmatprep.subr.mxu0 0.0
        %700 = vmatpush1.xpose.msra.mxu0 0.0
        %701 = vmatprep.subr.mxu0 0.0
        %702 = vmatpush1.xpose.msra.mxu0 0.0
        %703 = vmatprep.subr.mxu0 0.0
        %704 = vmatpush1.xpose.msra.mxu0 0.0
        %705 = vmatprep.subr.mxu0 0.0
        %706 = vmatpush1.xpose.msra.mxu0 0.0
        %707 = vmatprep.subr.mxu0 0.0
        %708 = vmatpush1.xpose.msra.mxu0 0.0
        %709 = vmatprep.subr.mxu0 0.0
        %710 = vmatpush1.xpose.msra.mxu0 0.0
        %711 = vmatprep.subr.mxu0 0.0
        %712 = vmatpush1.xpose.msra.mxu0 0.0
        %713 = vmatprep.mubr.f32.mxu0 0.0
        %714 = vmatmul.mubr.f32.gmra.mrb[0].mxu0 %v645
        %v715 = vpop.f32.mrb[0].mxu0
        %v716 = vadd.f32 %v638, %v715
        %v717 = vpop.f32.mrb[0].mxu0
        %718 = vdwg.mxu0
        %v719 = vsel %vm643, %v716, -inf
        %720 = vmax.xlane.f32.xlu0 %v719
        %v721 = vpop.xlane.xlu0 %720
        %v722 = vsub.f32 %v716, %v721
        %v723 = vmul.f32 %v722, 1.442695
        %v724 = vpow.pop %v723
        %v725 = vsel %vm643, %v724, 0.0
        %726 = vadd.xlane.f32.xlu0 %v725
        %v727 = vpop.xlane.xlu0 %726
        %v728 = vrcp.pop %v727
        %v729 = vmul.f32 %v724, %v728
        %730 = vrot.lane.b32.xlu0 %v626, 64
        %v731 = vpop.permute.xlu0 %730
        %v734 = vsel %vm643, %v729, 0
        %736 = vmatprep.subr.mxu0 0.0
        %737 = vmatpush1.msra.mxu0 %v731
        %738 = vmatprep.subr.mxu0 0.0
        %739 = vmatpush1.msra.mxu0 0.0
        %740 = vmatprep.subr.mxu0 0.0
        %741 = vmatpush1.msra.mxu0 0.0
        %742 = vmatprep.subr.mxu0 0.0
        %743 = vmatpush1.msra.mxu0 0.0
        %744 = vmatprep.subr.mxu0 0.0
        %745 = vmatpush1.msra.mxu0 0.0
        %746 = vmatprep.subr.mxu0 0.0
        %747 = vmatpush1.msra.mxu0 0.0
        %748 = vmatprep.subr.mxu0 0.0
        %749 = vmatpush1.msra.mxu0 0.0
        %750 = vmatprep.subr.mxu0 0.0
        %751 = vmatpush1.msra.mxu0 0.0
        %752 = vmatprep.subr.mxu0 0.0
        %753 = vmatpush1.msra.mxu0 0.0
        %754 = vmatprep.subr.mxu0 0.0
        %755 = vmatpush1.msra.mxu0 0.0
        %756 = vmatprep.subr.mxu0 0.0
        %757 = vmatpush1.msra.mxu0 0.0
        %758 = vmatprep.subr.mxu0 0.0
        %759 = vmatpush1.msra.mxu0 0.0
        %760 = vmatprep.subr.mxu0 0.0
        %761 = vmatpush1.msra.mxu0 0.0
        %762 = vmatprep.subr.mxu0 0.0
        %763 = vmatpush1.msra.mxu0 0.0
        %764 = vmatprep.subr.mxu0 0.0
        %765 = vmatpush1.msra.mxu0 0.0
        %766 = vmatprep.subr.mxu0 0.0
        %767 = vmatpush1.msra.mxu0 0.0
        %768 = vmatprep.subr.mxu0 0.0
        %769 = vmatpush1.msra.mxu0 0.0
        %770 = vmatprep.subr.mxu0 0.0
        %771 = vmatpush1.msra.mxu0 0.0
        %772 = vmatprep.subr.mxu0 0.0
        %773 = vmatpush1.msra.mxu0 0.0
        %774 = vmatprep.subr.mxu0 0.0
        %775 = vmatpush1.msra.mxu0 0.0
        %776 = vmatprep.subr.mxu0 0.0
        %777 = vmatpush1.msra.mxu0 0.0
        %778 = vmatprep.subr.mxu0 0.0
        %779 = vmatpush1.msra.mxu0 0.0
        %780 = vmatprep.subr.mxu0 0.0
        %781 = vmatpush1.msra.mxu0 0.0
        %782 = vmatprep.subr.mxu0 0.0
        %783 = vmatpush1.msra.mxu0 0.0
        %784 = vmatprep.subr.mxu0 0.0
        %785 = vmatpush1.msra.mxu0 0.0
        %786 = vmatprep.subr.mxu0 0.0
        %787 = vmatpush1.msra.mxu0 0.0
        %788 = vmatprep.subr.mxu0 0.0
        %789 = vmatpush1.msra.mxu0 0.0
        %790 = vmatprep.subr.mxu0 0.0
        %791 = vmatpush1.msra.mxu0 0.0
        %792 = vmatprep.subr.mxu0 0.0
        %793 = vmatpush1.msra.mxu0 0.0
        %794 = vmatprep.subr.mxu0 0.0
        %795 = vmatpush1.msra.mxu0 0.0
        %796 = vmatprep.subr.mxu0 0.0
        %797 = vmatpush1.msra.mxu0 0.0
        %798 = vmatprep.subr.mxu0 0.0
        %799 = vmatpush1.msra.mxu0 0.0
        %800 = vmatprep.mubr.f32.mxu0 0.0
        %801 = vmatmul.mubr.f32.gmra.mrb[0].mxu0 %v734
        %v802 = vpop.f32.mrb[0].mxu0
        %v803 = vadd.f32 0.0, %v802
        %v804 = vpop.f32.mrb[0].mxu0
        %805 = vdwg.mxu0
        %806 = vrot.lane.b32.xlu0 %v629, 120
        %v807 = vpop.permute.xlu0 %806
        %808 = vrot.lane.b32.xlu0 %v626, 88
        %v809 = vpop.permute.xlu0 %808
        %v810 = vsel %vm643, %v807, 0
        %v812 = vsel %vm643, %v809, 0
        %814 = vmatprep.subr.mxu0 0.0
        %815 = vmatpush1.xpose.msra.mxu0 %v812
        %816 = vmatprep.subr.mxu0 0.0
        %817 = vmatpush1.xpose.msra.mxu0 0.0
        %818 = vmatprep.subr.mxu0 0.0
        %819 = vmatpush1.xpose.msra.mxu0 0.0
        %820 = vmatprep.subr.mxu0 0.0
        %821 = vmatpush1.xpose.msra.mxu0 0.0
        %822 = vmatprep.subr.mxu0 0.0
        %823 = vmatpush1.xpose.msra.mxu0 0.0
        %824 = vmatprep.subr.mxu0 0.0
        %825 = vmatpush1.xpose.msra.mxu0 0.0
        %826 = vmatprep.subr.mxu0 0.0
        %827 = vmatpush1.xpose.msra.mxu0 0.0
        %828 = vmatprep.subr.mxu0 0.0
        %829 = vmatpush1.xpose.msra.mxu0 0.0
        %830 = vmatprep.subr.mxu0 0.0
        %831 = vmatpush1.xpose.msra.mxu0 0.0
        %832 = vmatprep.subr.mxu0 0.0
        %833 = vmatpush1.xpose.msra.mxu0 0.0
        %834 = vmatprep.subr.mxu0 0.0
        %835 = vmatpush1.xpose.msra.mxu0 0.0
        %836 = vmatprep.subr.mxu0 0.0
        %837 = vmatpush1.xpose.msra.mxu0 0.0
        %838 = vmatprep.subr.mxu0 0.0
        %839 = vmatpush1.xpose.msra.mxu0 0.0
        %840 = vmatprep.subr.mxu0 0.0
        %841 = vmatpush1.xpose.msra.mxu0 0.0
        %842 = vmatprep.subr.mxu0 0.0
        %843 = vmatpush1.xpose.msra.mxu0 0.0
        %844 = vmatprep.subr.mxu0 0.0
        %845 = vmatpush1.xpose.msra.mxu0 0.0
        %846 = vmatprep.subr.mxu0 0.0
        %847 = vmatpush1.xpose.msra.mxu0 0.0
        %848 = vmatprep.subr.mxu0 0.0
        %849 = vmatpush1.xpose.msra.mxu0 0.0
        %850 = vmatprep.subr.mxu0 0.0
        %851 = vmatpush1.xpose.msra.mxu0 0.0
        %852 = vmatprep.subr.mxu0 0.0
        %853 = vmatpush1.xpose.msra.mxu0 0.0
        %854 = vmatprep.subr.mxu0 0.0
        %855 = vmatpush1.xpose.msra.mxu0 0.0
        %856 = vmatprep.subr.mxu0 0.0
        %857 = vmatpush1.xpose.msra.mxu0 0.0
        %858 = vmatprep.subr.mxu0 0.0
        %859 = vmatpush1.xpose.msra.mxu0 0.0
        %860 = vmatprep.subr.mxu0 0.0
        %861 = vmatpush1.xpose.msra.mxu0 0.0
        %862 = vmatprep.subr.mxu0 0.0
        %863 = vmatpush1.xpose.msra.mxu0 0.0
        %864 = vmatprep.subr.mxu0 0.0
        %865 = vmatpush1.xpose.msra.mxu0 0.0
        %866 = vmatprep.subr.mxu0 0.0
        %867 = vmatpush1.xpose.msra.mxu0 0.0
        %868 = vmatprep.subr.mxu0 0.0
        %869 = vmatpush1.xpose.msra.mxu0 0.0
        %870 = vmatprep.subr.mxu0 0.0
        %871 = vmatpush1.xpose.msra.mxu0 0.0
        %872 = vmatprep.subr.mxu0 0.0
        %873 = vmatpush1.xpose.msra.mxu0 0.0
        %874 = vmatprep.subr.mxu0 0.0
        %875 = vmatpush1.xpose.msra.mxu0 0.0
        %876 = vmatprep.subr.mxu0 0.0
        %877 = vmatpush1.xpose.msra.mxu0 0.0
        %878 = vmatprep.mubr.f32.mxu0 0.0
        %879 = vmatmul.mubr.f32.gmra.mrb[0].mxu0 %v810
        %v880 = vpop.f32.mrb[0].mxu0
        %v881 = vadd.f32 %v638, %v880
        %v882 = vpop.f32.mrb[0].mxu0
        %883 = vdwg.mxu0
        %v884 = vsel %vm643, %v881, -inf
        %885 = vmax.xlane.f32.xlu0 %v884
        %v886 = vpop.xlane.xlu0 %885
        %v887 = vsub.f32 %v881, %v886
        %v888 = vmul.f32 %v887, 1.442695
        %v889 = vpow.pop %v888
        %v890 = vsel %vm643, %v889, 0.0
        %891 = vadd.xlane.f32.xlu0 %v890
        %v892 = vpop.xlane.xlu0 %891
        %v893 = vrcp.pop %v892
        %v894 = vmul.f32 %v889, %v893
        %895 = vrot.lane.b32.xlu0 %v626, 56
        %v896 = vpop.permute.xlu0 %895
        %v899 = vsel %vm643, %v894, 0
        %901 = vmatprep.subr.mxu0 0.0
        %902 = vmatpush1.msra.mxu0 %v896
        %903 = vmatprep.subr.mxu0 0.0
        %904 = vmatpush1.msra.mxu0 0.0
        %905 = vmatprep.subr.mxu0 0.0
        %906 = vmatpush1.msra.mxu0 0.0
        %907 = vmatprep.subr.mxu0 0.0
        %908 = vmatpush1.msra.mxu0 0.0
        %909 = vmatprep.subr.mxu0 0.0
        %910 = vmatpush1.msra.mxu0 0.0
        %911 = vmatprep.subr.mxu0 0.0
        %912 = vmatpush1.msra.mxu0 0.0
        %913 = vmatprep.subr.mxu0 0.0
        %914 = vmatpush1.msra.mxu0 0.0
        %915 = vmatprep.subr.mxu0 0.0
        %916 = vmatpush1.msra.mxu0 0.0
        %917 = vmatprep.subr.mxu0 0.0
        %918 = vmatpush1.msra.mxu0 0.0
        %919 = vmatprep.subr.mxu0 0.0
        %920 = vmatpush1.msra.mxu0 0.0
        %921 = vmatprep.subr.mxu0 0.0
        %922 = vmatpush1.msra.mxu0 0.0
        %923 = vmatprep.subr.mxu0 0.0
        %924 = vmatpush1.msra.mxu0 0.0
        %925 = vmatprep.subr.mxu0 0.0
        %926 = vmatpush1.msra.mxu0 0.0
        %927 = vmatprep.subr.mxu0 0.0
        %928 = vmatpush1.msra.mxu0 0.0
        %929 = vmatprep.subr.mxu0 0.0
        %930 = vmatpush1.msra.mxu0 0.0
        %931 = vmatprep.subr.mxu0 0.0
        %932 = vmatpush1.msra.mxu0 0.0
        %933 = vmatprep.subr.mxu0 0.0
        %934 = vmatpush1.msra.mxu0 0.0
        %935 = vmatprep.subr.mxu0 0.0
        %936 = vmatpush1.msra.mxu0 0.0
        %937 = vmatprep.subr.mxu0 0.0
        %938 = vmatpush1.msra.mxu0 0.0
        %939 = vmatprep.subr.mxu0 0.0
        %940 = vmatpush1.msra.mxu0 0.0
        %941 = vmatprep.subr.mxu0 0.0
        %942 = vmatpush1.msra.mxu0 0.0
        %943 = vmatprep.subr.mxu0 0.0
        %944 = vmatpush1.msra.mxu0 0.0
        %945 = vmatprep.subr.mxu0 0.0
        %946 = vmatpush1.msra.mxu0 0.0
        %947 = vmatprep.subr.mxu0 0.0
        %948 = vmatpush1.msra.mxu0 0.0
        %949 = vmatprep.subr.mxu0 0.0
        %950 = vmatpush1.msra.mxu0 0.0
        %951 = vmatprep.subr.mxu0 0.0
        %952 = vmatpush1.msra.mxu0 0.0
        %953 = vmatprep.subr.mxu0 0.0
        %954 = vmatpush1.msra.mxu0 0.0
        %955 = vmatprep.subr.mxu0 0.0
        %956 = vmatpush1.msra.mxu0 0.0
        %957 = vmatprep.subr.mxu0 0.0
        %958 = vmatpush1.msra.mxu0 0.0
        %959 = vmatprep.subr.mxu0 0.0
        %960 = vmatpush1.msra.mxu0 0.0
        %961 = vmatprep.subr.mxu0 0.0
        %962 = vmatpush1.msra.mxu0 0.0
        %963 = vmatprep.subr.mxu0 0.0
        %964 = vmatpush1.msra.mxu0 0.0
        %965 = vmatprep.mubr.f32.mxu0 0.0
        %966 = vmatmul.mubr.f32.gmra.mrb[0].mxu0 %v899
        %v967 = vpop.f32.mrb[0].mxu0
        %v968 = vadd.f32 0.0, %v967
        %v969 = vpop.f32.mrb[0].mxu0
        %970 = vdwg.mxu0
        %v972 = vsel %vm643, %v968, 0
        %974 = vmatprep.subr.mxu0 0.0
        %975 = vmatpush1.msra.mxu0 %v631
        %976 = vmatprep.subr.mxu0 0.0
        %977 = vmatpush1.msra.mxu0 0.0
        %978 = vmatprep.subr.mxu0 0.0
        %979 = vmatpush1.msra.mxu0 0.0
        %980 = vmatprep.subr.mxu0 0.0
        %981 = vmatpush1.msra.mxu0 0.0
        %982 = vmatprep.subr.mxu0 0.0
        %983 = vmatpush1.msra.mxu0 0.0
        %984 = vmatprep.subr.mxu0 0.0
        %985 = vmatpush1.msra.mxu0 0.0
        %986 = vmatprep.subr.mxu0 0.0
        %987 = vmatpush1.msra.mxu0 0.0
        %988 = vmatprep.subr.mxu0 0.0
        %989 = vmatpush1.msra.mxu0 0.0
        %990 = vmatprep.subr.mxu0 0.0
        %991 = vmatpush1.msra.mxu0 0.0
        %992 = vmatprep.subr.mxu0 0.0
        %993 = vmatpush1.msra.mxu0 0.0
        %994 = vmatprep.subr.mxu0 0.0
        %995 = vmatpush1.msra.mxu0 0.0
        %996 = vmatprep.subr.mxu0 0.0
        %997 = vmatpush1.msra.mxu0 0.0
        %998 = vmatprep.subr.mxu0 0.0
        %999 = vmatpush1.msra.mxu0 0.0
        %1000 = vmatprep.subr.mxu0 0.0
        %1001 = vmatpush1.msra.mxu0 0.0
        %1002 = vmatprep.subr.mxu0 0.0
        %1003 = vmatpush1.msra.mxu0 0.0
        %1004 = vmatprep.subr.mxu0 0.0
        %1005 = vmatpush1.msra.mxu0 0.0
        %1006 = vmatprep.subr.mxu0 0.0
        %1007 = vmatpush1.msra.mxu0 0.0
        %1008 = vmatprep.subr.mxu0 0.0
        %1009 = vmatpush1.msra.mxu0 0.0
        %1010 = vmatprep.subr.mxu0 0.0
        %1011 = vmatpush1.msra.mxu0 0.0
        %1012 = vmatprep.subr.mxu0 0.0
        %1013 = vmatpush1.msra.mxu0 0.0
        %1014 = vmatprep.subr.mxu0 0.0
        %1015 = vmatpush1.msra.mxu0 0.0
        %1016 = vmatprep.subr.mxu0 0.0
        %1017 = vmatpush1.msra.mxu0 0.0
        %1018 = vmatprep.subr.mxu0 0.0
        %1019 = vmatpush1.msra.mxu0 0.0
        %1020 = vmatprep.subr.mxu0 0.0
        %1021 = vmatpush1.msra.mxu0 0.0
        %1022 = vmatprep.subr.mxu0 0.0
        %1023 = vmatpush1.msra.mxu0 0.0
        %1024 = vmatprep.subr.mxu0 0.0
        %1025 = vmatpush1.msra.mxu0 0.0
        %1026 = vmatprep.subr.mxu0 0.0
        %1027 = vmatpush1.msra.mxu0 0.0
        %1028 = vmatprep.subr.mxu0 0.0
        %1029 = vmatpush1.msra.mxu0 0.0
        %1030 = vmatprep.subr.mxu0 0.0
        %1031 = vmatpush1.msra.mxu0 0.0
        %1032 = vmatprep.subr.mxu0 0.0
        %1033 = vmatpush1.msra.mxu0 0.0
        %1034 = vmatprep.subr.mxu0 0.0
        %1035 = vmatpush1.msra.mxu0 0.0
        %1036 = vmatprep.subr.mxu0 0.0
        %1037 = vmatpush1.msra.mxu0 0.0
        %1038 = vmatprep.mubr.f32.mxu0 0.0
        %1039 = vmatmul.mubr.f32.gmra.mrb[0].mxu0 %v972
        %v1040 = vpop.f32.mrb[0].mxu0
        %v1041 = vadd.f32 0.0, %v1040
        %v1042 = vpop.f32.mrb[0].mxu0
        %1043 = vdwg.mxu0
        %v1045 = vsel %vm643, %v803, 0
        %1047 = vmatprep.subr.mxu0 0.0
        %1048 = vmatpush1.msra.mxu0 %v630
        %1049 = vmatprep.subr.mxu0 0.0
        %1050 = vmatpush1.msra.mxu0 0.0
        %1051 = vmatprep.subr.mxu0 0.0
        %1052 = vmatpush1.msra.mxu0 0.0
        %1053 = vmatprep.subr.mxu0 0.0
        %1054 = vmatpush1.msra.mxu0 0.0
        %1055 = vmatprep.subr.mxu0 0.0
        %1056 = vmatpush1.msra.mxu0 0.0
        %1057 = vmatprep.subr.mxu0 0.0
        %1058 = vmatpush1.msra.mxu0 0.0
        %1059 = vmatprep.subr.mxu0 0.0
        %1060 = vmatpush1.msra.mxu0 0.0
        %1061 = vmatprep.subr.mxu0 0.0
        %1062 = vmatpush1.msra.mxu0 0.0
        %1063 = vmatprep.subr.mxu0 0.0
        %1064 = vmatpush1.msra.mxu0 0.0
        %1065 = vmatprep.subr.mxu0 0.0
        %1066 = vmatpush1.msra.mxu0 0.0
        %1067 = vmatprep.subr.mxu0 0.0
        %1068 = vmatpush1.msra.mxu0 0.0
        %1069 = vmatprep.subr.mxu0 0.0
        %1070 = vmatpush1.msra.mxu0 0.0
        %1071 = vmatprep.subr.mxu0 0.0
        %1072 = vmatpush1.msra.mxu0 0.0
        %1073 = vmatprep.subr.mxu0 0.0
        %1074 = vmatpush1.msra.mxu0 0.0
        %1075 = vmatprep.subr.mxu0 0.0
        %1076 = vmatpush1.msra.mxu0 0.0
        %1077 = vmatprep.subr.mxu0 0.0
        %1078 = vmatpush1.msra.mxu0 0.0
        %1079 = vmatprep.subr.mxu0 0.0
        %1080 = vmatpush1.msra.mxu0 0.0
        %1081 = vmatprep.subr.mxu0 0.0
        %1082 = vmatpush1.msra.mxu0 0.0
        %1083 = vmatprep.subr.mxu0 0.0
        %1084 = vmatpush1.msra.mxu0 0.0
        %1085 = vmatprep.subr.mxu0 0.0
        %1086 = vmatpush1.msra.mxu0 0.0
        %1087 = vmatprep.subr.mxu0 0.0
        %1088 = vmatpush1.msra.mxu0 0.0
        %1089 = vmatprep.subr.mxu0 0.0
        %1090 = vmatpush1.msra.mxu0 0.0
        %1091 = vmatprep.subr.mxu0 0.0
        %1092 = vmatpush1.msra.mxu0 0.0
        %1093 = vmatprep.subr.mxu0 0.0
        %1094 = vmatpush1.msra.mxu0 0.0
        %1095 = vmatprep.subr.mxu0 0.0
        %1096 = vmatpush1.msra.mxu0 0.0
        %1097 = vmatprep.subr.mxu0 0.0
        %1098 = vmatpush1.msra.mxu0 0.0
        %1099 = vmatprep.subr.mxu0 0.0
        %1100 = vmatpush1.msra.mxu0 0.0
        %1101 = vmatprep.subr.mxu0 0.0
        %1102 = vmatpush1.msra.mxu0 0.0
        %1103 = vmatprep.subr.mxu0 0.0
        %1104 = vmatpush1.msra.mxu0 0.0
        %1105 = vmatprep.subr.mxu0 0.0
        %1106 = vmatpush1.msra.mxu0 0.0
        %1107 = vmatprep.subr.mxu0 0.0
        %1108 = vmatpush1.msra.mxu0 0.0
        %1109 = vmatprep.subr.mxu0 0.0
        %1110 = vmatpush1.msra.mxu0 0.0
        %1111 = vmatprep.mubr.f32.mxu0 0.0
        %1112 = vmatmul.mubr.f32.gmra.mrb[0].mxu0 %v1045
        %v1113 = vpop.f32.mrb[0].mxu0
        %v1114 = vadd.f32 %v1041, %v1113
        %v1115 = vpop.f32.mrb[0].mxu0
        %1116 = vdwg.mxu0
        %1117 = vrot.lane.b32.xlu0 %v629, 112
        %v1118 = vpop.permute.xlu0 %1117
        %1119 = vrot.lane.b32.xlu0 %v626, 80
        %v1120 = vpop.permute.xlu0 %1119
        %v1121 = vsel %vm643, %v1118, 0
        %v1123 = vsel %vm643, %v1120, 0
        %1125 = vmatprep.subr.mxu0 0.0
        %1126 = vmatpush1.xpose.msra.mxu0 %v1123
        %1127 = vmatprep.subr.mxu0 0.0
        %1128 = vmatpush1.xpose.msra.mxu0 0.0
        %1129 = vmatprep.subr.mxu0 0.0
        %1130 = vmatpush1.xpose.msra.mxu0 0.0
        %1131 = vmatprep.subr.mxu0 0.0
        %1132 = vmatpush1.xpose.msra.mxu0 0.0
        %1133 = vmatprep.subr.mxu0 0.0
        %1134 = vmatpush1.xpose.msra.mxu0 0.0
        %1135 = vmatprep.subr.mxu0 0.0
        %1136 = vmatpush1.xpose.msra.mxu0 0.0
        %1137 = vmatprep.subr.mxu0 0.0
        %1138 = vmatpush1.xpose.msra.mxu0 0.0
        %1139 = vmatprep.subr.mxu0 0.0
        %1140 = vmatpush1.xpose.msra.mxu0 0.0
        %1141 = vmatprep.subr.mxu0 0.0
        %1142 = vmatpush1.xpose.msra.mxu0 0.0
        %1143 = vmatprep.subr.mxu0 0.0
        %1144 = vmatpush1.xpose.msra.mxu0 0.0
        %1145 = vmatprep.subr.mxu0 0.0
        %1146 = vmatpush1.xpose.msra.mxu0 0.0
        %1147 = vmatprep.subr.mxu0 0.0
        %1148 = vmatpush1.xpose.msra.mxu0 0.0
        %1149 = vmatprep.subr.mxu0 0.0
        %1150 = vmatpush1.xpose.msra.mxu0 0.0
        %1151 = vmatprep.subr.mxu0 0.0
        %1152 = vmatpush1.xpose.msra.mxu0 0.0
        %1153 = vmatprep.subr.mxu0 0.0
        %1154 = vmatpush1.xpose.msra.mxu0 0.0
        %1155 = vmatprep.subr.mxu0 0.0
        %1156 = vmatpush1.xpose.msra.mxu0 0.0
        %1157 = vmatprep.subr.mxu0 0.0
        %1158 = vmatpush1.xpose.msra.mxu0 0.0
        %1159 = vmatprep.subr.mxu0 0.0
        %1160 = vmatpush1.xpose.msra.mxu0 0.0
        %1161 = vmatprep.subr.mxu0 0.0
        %1162 = vmatpush1.xpose.msra.mxu0 0.0
        %1163 = vmatprep.subr.mxu0 0.0
        %1164 = vmatpush1.xpose.msra.mxu0 0.0
        %1165 = vmatprep.subr.mxu0 0.0
        %1166 = vmatpush1.xpose.msra.mxu0 0.0
        %1167 = vmatprep.subr.mxu0 0.0
        %1168 = vmatpush1.xpose.msra.mxu0 0.0
        %1169 = vmatprep.subr.mxu0 0.0
        %1170 = vmatpush1.xpose.msra.mxu0 0.0
        %1171 = vmatprep.subr.mxu0 0.0
        %1172 = vmatpush1.xpose.msra.mxu0 0.0
        %1173 = vmatprep.subr.mxu0 0.0
        %1174 = vmatpush1.xpose.msra.mxu0 0.0
        %1175 = vmatprep.subr.mxu0 0.0
        %1176 = vmatpush1.xpose.msra.mxu0 0.0
        %1177 = vmatprep.subr.mxu0 0.0
        %1178 = vmatpush1.xpose.msra.mxu0 0.0
        %1179 = vmatprep.subr.mxu0 0.0
        %1180 = vmatpush1.xpose.msra.mxu0 0.0
        %1181 = vmatprep.subr.mxu0 0.0
        %1182 = vmatpush1.xpose.msra.mxu0 0.0
        %1183 = vmatprep.subr.mxu0 0.0
        %1184 = vmatpush1.xpose.msra.mxu0 0.0
        %1185 = vmatprep.subr.mxu0 0.0
        %1186 = vmatpush1.xpose.msra.mxu0 0.0
        %1187 = vmatprep.subr.mxu0 0.0
        %1188 = vmatpush1.xpose.msra.mxu0 0.0
        %1189 = vmatprep.mubr.f32.mxu0 0.0
        %1190 = vmatmul.mubr.f32.gmra.mrb[0].mxu0 %v1121
        %v1191 = vpop.f32.mrb[0].mxu0
        %v1192 = vadd.f32 %v638, %v1191
        %v1193 = vpop.f32.mrb[0].mxu0
        %1194 = vdwg.mxu0
        %v1195 = vsel %vm643, %v1192, -inf
        %1196 = vmax.xlane.f32.xlu0 %v1195
        %v1197 = vpop.xlane.xlu0 %1196
        %v1198 = vsub.f32 %v1192, %v1197
        %v1199 = vmul.f32 %v1198, 1.442695
        %v1200 = vpow.pop %v1199
        %v1201 = vsel %vm643, %v1200, 0.0
        %1202 = vadd.xlane.f32.xlu0 %v1201
        %v1203 = vpop.xlane.xlu0 %1202
        %v1204 = vrcp.pop %v1203
        %v1205 = vmul.f32 %v1200, %v1204
        %1206 = vrot.lane.b32.xlu0 %v626, 48
        %v1207 = vpop.permute.xlu0 %1206
        %v1210 = vsel %vm643, %v1205, 0
        %1212 = vmatprep.subr.mxu0 0.0
        %1213 = vmatpush1.msra.mxu0 %v1207
        %1214 = vmatprep.subr.mxu0 0.0
        %1215 = vmatpush1.msra.mxu0 0.0
        %1216 = vmatprep.subr.mxu0 0.0
        %1217 = vmatpush1.msra.mxu0 0.0
        %1218 = vmatprep.subr.mxu0 0.0
        %1219 = vmatpush1.msra.mxu0 0.0
        %1220 = vmatprep.subr.mxu0 0.0
        %1221 = vmatpush1.msra.mxu0 0.0
        %1222 = vmatprep.subr.mxu0 0.0
        %1223 = vmatpush1.msra.mxu0 0.0
        %1224 = vmatprep.subr.mxu0 0.0
        %1225 = vmatpush1.msra.mxu0 0.0
        %1226 = vmatprep.subr.mxu0 0.0
        %1227 = vmatpush1.msra.mxu0 0.0
        %1228 = vmatprep.subr.mxu0 0.0
        %1229 = vmatpush1.msra.mxu0 0.0
        %1230 = vmatprep.subr.mxu0 0.0
        %1231 = vmatpush1.msra.mxu0 0.0
        %1232 = vmatprep.subr.mxu0 0.0
        %1233 = vmatpush1.msra.mxu0 0.0
        %1234 = vmatprep.subr.mxu0 0.0
        %1235 = vmatpush1.msra.mxu0 0.0
        %1236 = vmatprep.subr.mxu0 0.0
        %1237 = vmatpush1.msra.mxu0 0.0
        %1238 = vmatprep.subr.mxu0 0.0
        %1239 = vmatpush1.msra.mxu0 0.0
        %1240 = vmatprep.subr.mxu0 0.0
        %1241 = vmatpush1.msra.mxu0 0.0
        %1242 = vmatprep.subr.mxu0 0.0
        %1243 = vmatpush1.msra.mxu0 0.0
        %1244 = vmatprep.subr.mxu0 0.0
        %1245 = vmatpush1.msra.mxu0 0.0
        %1246 = vmatprep.subr.mxu0 0.0
        %1247 = vmatpush1.msra.mxu0 0.0
        %1248 = vmatprep.subr.mxu0 0.0
        %1249 = vmatpush1.msra.mxu0 0.0
        %1250 = vmatprep.subr.mxu0 0.0
        %1251 = vmatpush1.msra.mxu0 0.0
        %1252 = vmatprep.subr.mxu0 0.0
        %1253 = vmatpush1.msra.mxu0 0.0
        %1254 = vmatprep.subr.mxu0 0.0
        %1255 = vmatpush1.msra.mxu0 0.0
        %1256 = vmatprep.subr.mxu0 0.0
        %1257 = vmatpush1.msra.mxu0 0.0
        %1258 = vmatprep.subr.mxu0 0.0
        %1259 = vmatpush1.msra.mxu0 0.0
        %1260 = vmatprep.subr.mxu0 0.0
        %1261 = vmatpush1.msra.mxu0 0.0
        %1262 = vmatprep.subr.mxu0 0.0
        %1263 = vmatpush1.msra.mxu0 0.0
        %1264 = vmatprep.subr.mxu0 0.0
        %1265 = vmatpush1.msra.mxu0 0.0
        %1266 = vmatprep.subr.mxu0 0.0
        %1267 = vmatpush1.msra.mxu0 0.0
        %1268 = vmatprep.subr.mxu0 0.0
        %1269 = vmatpush1.msra.mxu0 0.0
        %1270 = vmatprep.subr.mxu0 0.0
        %1271 = vmatpush1.msra.mxu0 0.0
        %1272 = vmatprep.subr.mxu0 0.0
        %1273 = vmatpush1.msra.mxu0 0.0
        %1274 = vmatprep.subr.mxu0 0.0
        %1275 = vmatpush1.msra.mxu0 0.0
        %1276 = vmatprep.mubr.f32.mxu0 0.0
        %1277 = vmatmul.mubr.f32.gmra.mrb[0].mxu0 %v1210
        %v1278 = vpop.f32.mrb[0].mxu0
        %v1279 = vadd.f32 0.0, %v1278
        %v1280 = vpop.f32.mrb[0].mxu0
        %1281 = vdwg.mxu0
        %v1283 = vsel %vm643, %v1279, 0
        %1285 = vmatprep.subr.mxu0 0.0
        %1286 = vmatpush1.msra.mxu0 %v632
        %1287 = vmatprep.subr.mxu0 0.0
        %1288 = vmatpush1.msra.mxu0 0.0
        %1289 = vmatprep.subr.mxu0 0.0
        %1290 = vmatpush1.msra.mxu0 0.0
        %1291 = vmatprep.subr.mxu0 0.0
        %1292 = vmatpush1.msra.mxu0 0.0
        %1293 = vmatprep.subr.mxu0 0.0
        %1294 = vmatpush1.msra.mxu0 0.0
        %1295 = vmatprep.subr.mxu0 0.0
        %1296 = vmatpush1.msra.mxu0 0.0
        %1297 = vmatprep.subr.mxu0 0.0
        %1298 = vmatpush1.msra.mxu0 0.0
        %1299 = vmatprep.subr.mxu0 0.0
        %1300 = vmatpush1.msra.mxu0 0.0
        %1301 = vmatprep.subr.mxu0 0.0
        %1302 = vmatpush1.msra.mxu0 0.0
        %1303 = vmatprep.subr.mxu0 0.0
        %1304 = vmatpush1.msra.mxu0 0.0
        %1305 = vmatprep.subr.mxu0 0.0
        %1306 = vmatpush1.msra.mxu0 0.0
        %1307 = vmatprep.subr.mxu0 0.0
        %1308 = vmatpush1.msra.mxu0 0.0
        %1309 = vmatprep.subr.mxu0 0.0
        %1310 = vmatpush1.msra.mxu0 0.0
        %1311 = vmatprep.subr.mxu0 0.0
        %1312 = vmatpush1.msra.mxu0 0.0
        %1313 = vmatprep.subr.mxu0 0.0
        %1314 = vmatpush1.msra.mxu0 0.0
        %1315 = vmatprep.subr.mxu0 0.0
        %1316 = vmatpush1.msra.mxu0 0.0
        %1317 = vmatprep.subr.mxu0 0.0
        %1318 = vmatpush1.msra.mxu0 0.0
        %1319 = vmatprep.subr.mxu0 0.0
        %1320 = vmatpush1.msra.mxu0 0.0
        %1321 = vmatprep.subr.mxu0 0.0
        %1322 = vmatpush1.msra.mxu0 0.0
        %1323 = vmatprep.subr.mxu0 0.0
        %1324 = vmatpush1.msra.mxu0 0.0
        %1325 = vmatprep.subr.mxu0 0.0
        %1326 = vmatpush1.msra.mxu0 0.0
        %1327 = vmatprep.subr.mxu0 0.0
        %1328 = vmatpush1.msra.mxu0 0.0
        %1329 = vmatprep.subr.mxu0 0.0
        %1330 = vmatpush1.msra.mxu0 0.0
        %1331 = vmatprep.subr.mxu0 0.0
        %1332 = vmatpush1.msra.mxu0 0.0
        %1333 = vmatprep.subr.mxu0 0.0
        %1334 = vmatpush1.msra.mxu0 0.0
        %1335 = vmatprep.subr.mxu0 0.0
        %1336 = vmatpush1.msra.mxu0 0.0
        %1337 = vmatprep.subr.mxu0 0.0
        %1338 = vmatpush1.msra.mxu0 0.0
        %1339 = vmatprep.subr.mxu0 0.0
        %1340 = vmatpush1.msra.mxu0 0.0
        %1341 = vmatprep.subr.mxu0 0.0
        %1342 = vmatpush1.msra.mxu0 0.0
        %1343 = vmatprep.subr.mxu0 0.0
        %1344 = vmatpush1.msra.mxu0 0.0
        %1345 = vmatprep.subr.mxu0 0.0
        %1346 = vmatpush1.msra.mxu0 0.0
        %1347 = vmatprep.subr.mxu0 0.0
        %1348 = vmatpush1.msra.mxu0 0.0
        %1349 = vmatprep.mubr.f32.mxu0 0.0
        %1350 = vmatmul.mubr.f32.gmra.mrb[0].mxu0 %v1283
        %v1351 = vpop.f32.mrb[0].mxu0
        %v1352 = vadd.f32 0.0, %v1351
        %v1353 = vpop.f32.mrb[0].mxu0
        %1354 = vdwg.mxu0
        %v1355 = vadd.f32 %v1114, %v1352
        %1356 = vrot.lane.b32.xlu0 %v629, 104
        %v1357 = vpop.permute.xlu0 %1356
        %1358 = vrot.lane.b32.xlu0 %v626, 72
        %v1359 = vpop.permute.xlu0 %1358
        %v1360 = vsel %vm643, %v1357, 0
        %v1362 = vsel %vm643, %v1359, 0
        %1364 = vmatprep.subr.mxu0 0.0
        %1365 = vmatpush1.xpose.msra.mxu0 %v1362
        %1366 = vmatprep.subr.mxu0 0.0
        %1367 = vmatpush1.xpose.msra.mxu0 0.0
        %1368 = vmatprep.subr.mxu0 0.0
        %1369 = vmatpush1.xpose.msra.mxu0 0.0
        %1370 = vmatprep.subr.mxu0 0.0
        %1371 = vmatpush1.xpose.msra.mxu0 0.0
        %1372 = vmatprep.subr.mxu0 0.0
        %1373 = vmatpush1.xpose.msra.mxu0 0.0
        %1374 = vmatprep.subr.mxu0 0.0
        %1375 = vmatpush1.xpose.msra.mxu0 0.0
        %1376 = vmatprep.subr.mxu0 0.0
        %1377 = vmatpush1.xpose.msra.mxu0 0.0
        %1378 = vmatprep.subr.mxu0 0.0
        %1379 = vmatpush1.xpose.msra.mxu0 0.0
        %1380 = vmatprep.subr.mxu0 0.0
        %1381 = vmatpush1.xpose.msra.mxu0 0.0
        %1382 = vmatprep.subr.mxu0 0.0
        %1383 = vmatpush1.xpose.msra.mxu0 0.0
        %1384 = vmatprep.subr.mxu0 0.0
        %1385 = vmatpush1.xpose.msra.mxu0 0.0
        %1386 = vmatprep.subr.mxu0 0.0
        %1387 = vmatpush1.xpose.msra.mxu0 0.0
        %1388 = vmatprep.subr.mxu0 0.0
        %1389 = vmatpush1.xpose.msra.mxu0 0.0
        %1390 = vmatprep.subr.mxu0 0.0
        %1391 = vmatpush1.xpose.msra.mxu0 0.0
        %1392 = vmatprep.subr.mxu0 0.0
        %1393 = vmatpush1.xpose.msra.mxu0 0.0
        %1394 = vmatprep.subr.mxu0 0.0
        %1395 = vmatpush1.xpose.msra.mxu0 0.0
        %1396 = vmatprep.subr.mxu0 0.0
        %1397 = vmatpush1.xpose.msra.mxu0 0.0
        %1398 = vmatprep.subr.mxu0 0.0
        %1399 = vmatpush1.xpose.msra.mxu0 0.0
        %1400 = vmatprep.subr.mxu0 0.0
        %1401 = vmatpush1.xpose.msra.mxu0 0.0
        %1402 = vmatprep.subr.mxu0 0.0
        %1403 = vmatpush1.xpose.msra.mxu0 0.0
        %1404 = vmatprep.subr.mxu0 0.0
        %1405 = vmatpush1.xpose.msra.mxu0 0.0
        %1406 = vmatprep.subr.mxu0 0.0
        %1407 = vmatpush1.xpose.msra.mxu0 0.0
        %1408 = vmatprep.subr.mxu0 0.0
        %1409 = vmatpush1.xpose.msra.mxu0 0.0
        %1410 = vmatprep.subr.mxu0 0.0
        %1411 = vmatpush1.xpose.msra.mxu0 0.0
        %1412 = vmatprep.subr.mxu0 0.0
        %1413 = vmatpush1.xpose.msra.mxu0 0.0
        %1414 = vmatprep.subr.mxu0 0.0
        %1415 = vmatpush1.xpose.msra.mxu0 0.0
        %1416 = vmatprep.subr.mxu0 0.0
        %1417 = vmatpush1.xpose.msra.mxu0 0.0
        %1418 = vmatprep.subr.mxu0 0.0
        %1419 = vmatpush1.xpose.msra.mxu0 0.0
        %1420 = vmatprep.subr.mxu0 0.0
        %1421 = vmatpush1.xpose.msra.mxu0 0.0
        %1422 = vmatprep.subr.mxu0 0.0
        %1423 = vmatpush1.xpose.msra.mxu0 0.0
        %1424 = vmatprep.subr.mxu0 0.0
        %1425 = vmatpush1.xpose.msra.mxu0 0.0
        %1426 = vmatprep.subr.mxu0 0.0
        %1427 = vmatpush1.xpose.msra.mxu0 0.0
        %1428 = vmatprep.mubr.f32.mxu0 0.0
        %1429 = vmatmul.mubr.f32.gmra.mrb[0].mxu0 %v1360
        %v1430 = vpop.f32.mrb[0].mxu0
        %v1431 = vadd.f32 %v638, %v1430
        %v1432 = vpop.f32.mrb[0].mxu0
        %1433 = vdwg.mxu0
        %v1434 = vsel %vm643, %v1431, -inf
        %1435 = vmax.xlane.f32.xlu0 %v1434
        %v1436 = vpop.xlane.xlu0 %1435
        %v1437 = vsub.f32 %v1431, %v1436
        %v1438 = vmul.f32 %v1437, 1.442695
        %v1439 = vpow.pop %v1438
        %v1440 = vsel %vm643, %v1439, 0.0
        %1441 = vadd.xlane.f32.xlu0 %v1440
        %v1442 = vpop.xlane.xlu0 %1441
        %v1443 = vrcp.pop %v1442
        %v1444 = vmul.f32 %v1439, %v1443
        %1445 = vrot.lane.b32.xlu0 %v626, 40
        %v1446 = vpop.permute.xlu0 %1445
        %v1449 = vsel %vm643, %v1444, 0
        %1451 = vmatprep.subr.mxu0 0.0
        %1452 = vmatpush1.msra.mxu0 %v1446
        %1453 = vmatprep.subr.mxu0 0.0
        %1454 = vmatpush1.msra.mxu0 0.0
        %1455 = vmatprep.subr.mxu0 0.0
        %1456 = vmatpush1.msra.mxu0 0.0
        %1457 = vmatprep.subr.mxu0 0.0
        %1458 = vmatpush1.msra.mxu0 0.0
        %1459 = vmatprep.subr.mxu0 0.0
        %1460 = vmatpush1.msra.mxu0 0.0
        %1461 = vmatprep.subr.mxu0 0.0
        %1462 = vmatpush1.msra.mxu0 0.0
        %1463 = vmatprep.subr.mxu0 0.0
        %1464 = vmatpush1.msra.mxu0 0.0
        %1465 = vmatprep.subr.mxu0 0.0
        %1466 = vmatpush1.msra.mxu0 0.0
        %1467 = vmatprep.subr.mxu0 0.0
        %1468 = vmatpush1.msra.mxu0 0.0
        %1469 = vmatprep.subr.mxu0 0.0
        %1470 = vmatpush1.msra.mxu0 0.0
        %1471 = vmatprep.subr.mxu0 0.0
        %1472 = vmatpush1.msra.mxu0 0.0
        %1473 = vmatprep.subr.mxu0 0.0
        %1474 = vmatpush1.msra.mxu0 0.0
        %1475 = vmatprep.subr.mxu0 0.0
        %1476 = vmatpush1.msra.mxu0 0.0
        %1477 = vmatprep.subr.mxu0 0.0
        %1478 = vmatpush1.msra.mxu0 0.0
        %1479 = vmatprep.subr.mxu0 0.0
        %1480 = vmatpush1.msra.mxu0 0.0
        %1481 = vmatprep.subr.mxu0 0.0
        %1482 = vmatpush1.msra.mxu0 0.0
        %1483 = vmatprep.subr.mxu0 0.0
        %1484 = vmatpush1.msra.mxu0 0.0
        %1485 = vmatprep.subr.mxu0 0.0
        %1486 = vmatpush1.msra.mxu0 0.0
        %1487 = vmatprep.subr.mxu0 0.0
        %1488 = vmatpush1.msra.mxu0 0.0
        %1489 = vmatprep.subr.mxu0 0.0
        %1490 = vmatpush1.msra.mxu0 0.0
        %1491 = vmatprep.subr.mxu0 0.0
        %1492 = vmatpush1.msra.mxu0 0.0
        %1493 = vmatprep.subr.mxu0 0.0
        %1494 = vmatpush1.msra.mxu0 0.0
        %1495 = vmatprep.subr.mxu0 0.0
        %1496 = vmatpush1.msra.mxu0 0.0
        %1497 = vmatprep.subr.mxu0 0.0
        %1498 = vmatpush1.msra.mxu0 0.0
        %1499 = vmatprep.subr.mxu0 0.0
        %1500 = vmatpush1.msra.mxu0 0.0
        %1501 = vmatprep.subr.mxu0 0.0
        %1502 = vmatpush1.msra.mxu0 0.0
        %1503 = vmatprep.subr.mxu0 0.0
        %1504 = vmatpush1.msra.mxu0 0.0
        %1505 = vmatprep.subr.mxu0 0.0
        %1506 = vmatpush1.msra.mxu0 0.0
        %1507 = vmatprep.subr.mxu0 0.0
        %1508 = vmatpush1.msra.mxu0 0.0
        %1509 = vmatprep.subr.mxu0 0.0
        %1510 = vmatpush1.msra.mxu0 0.0
        %1511 = vmatprep.subr.mxu0 0.0
        %1512 = vmatpush1.msra.mxu0 0.0
        %1513 = vmatprep.subr.mxu0 0.0
        %1514 = vmatpush1.msra.mxu0 0.0
        %1515 = vmatprep.mubr.f32.mxu0 0.0
        %1516 = vmatmul.mubr.f32.gmra.mrb[0].mxu0 %v1449
        %v1517 = vpop.f32.mrb[0].mxu0
        %v1518 = vadd.f32 0.0, %v1517
        %v1519 = vpop.f32.mrb[0].mxu0
        %1520 = vdwg.mxu0
        %v1522 = vsel %vm643, %v1518, 0
        %1524 = vmatprep.subr.mxu0 0.0
        %1525 = vmatpush1.msra.mxu0 %v633
        %1526 = vmatprep.subr.mxu0 0.0
        %1527 = vmatpush1.msra.mxu0 0.0
        %1528 = vmatprep.subr.mxu0 0.0
        %1529 = vmatpush1.msra.mxu0 0.0
        %1530 = vmatprep.subr.mxu0 0.0
        %1531 = vmatpush1.msra.mxu0 0.0
        %1532 = vmatprep.subr.mxu0 0.0
        %1533 = vmatpush1.msra.mxu0 0.0
        %1534 = vmatprep.subr.mxu0 0.0
        %1535 = vmatpush1.msra.mxu0 0.0
        %1536 = vmatprep.subr.mxu0 0.0
        %1537 = vmatpush1.msra.mxu0 0.0
        %1538 = vmatprep.subr.mxu0 0.0
        %1539 = vmatpush1.msra.mxu0 0.0
        %1540 = vmatprep.subr.mxu0 0.0
        %1541 = vmatpush1.msra.mxu0 0.0
        %1542 = vmatprep.subr.mxu0 0.0
        %1543 = vmatpush1.msra.mxu0 0.0
        %1544 = vmatprep.subr.mxu0 0.0
        %1545 = vmatpush1.msra.mxu0 0.0
        %1546 = vmatprep.subr.mxu0 0.0
        %1547 = vmatpush1.msra.mxu0 0.0
        %1548 = vmatprep.subr.mxu0 0.0
        %1549 = vmatpush1.msra.mxu0 0.0
        %1550 = vmatprep.subr.mxu0 0.0
        %1551 = vmatpush1.msra.mxu0 0.0
        %1552 = vmatprep.subr.mxu0 0.0
        %1553 = vmatpush1.msra.mxu0 0.0
        %1554 = vmatprep.subr.mxu0 0.0
        %1555 = vmatpush1.msra.mxu0 0.0
        %1556 = vmatprep.subr.mxu0 0.0
        %1557 = vmatpush1.msra.mxu0 0.0
        %1558 = vmatprep.subr.mxu0 0.0
        %1559 = vmatpush1.msra.mxu0 0.0
        %1560 = vmatprep.subr.mxu0 0.0
        %1561 = vmatpush1.msra.mxu0 0.0
        %1562 = vmatprep.subr.mxu0 0.0
        %1563 = vmatpush1.msra.mxu0 0.0
        %1564 = vmatprep.subr.mxu0 0.0
        %1565 = vmatpush1.msra.mxu0 0.0
        %1566 = vmatprep.subr.mxu0 0.0
        %1567 = vmatpush1.msra.mxu0 0.0
        %1568 = vmatprep.subr.mxu0 0.0
        %1569 = vmatpush1.msra.mxu0 0.0
        %1570 = vmatprep.subr.mxu0 0.0
        %1571 = vmatpush1.msra.mxu0 0.0
        %1572 = vmatprep.subr.mxu0 0.0
        %1573 = vmatpush1.msra.mxu0 0.0
        %1574 = vmatprep.subr.mxu0 0.0
        %1575 = vmatpush1.msra.mxu0 0.0
        %1576 = vmatprep.subr.mxu0 0.0
        %1577 = vmatpush1.msra.mxu0 0.0
        %1578 = vmatprep.subr.mxu0 0.0
        %1579 = vmatpush1.msra.mxu0 0.0
        %1580 = vmatprep.subr.mxu0 0.0
        %1581 = vmatpush1.msra.mxu0 0.0
        %1582 = vmatprep.subr.mxu0 0.0
        %1583 = vmatpush1.msra.mxu0 0.0
        %1584 = vmatprep.subr.mxu0 0.0
        %1585 = vmatpush1.msra.mxu0 0.0
        %1586 = vmatprep.subr.mxu0 0.0
        %1587 = vmatpush1.msra.mxu0 0.0
        %1588 = vmatprep.mubr.f32.mxu0 0.0
        %1589 = vmatmul.mubr.f32.gmra.mrb[0].mxu0 %v1522
        %v1590 = vpop.f32.mrb[0].mxu0
        %v1591 = vadd.f32 0.0, %v1590
        %v1592 = vpop.f32.mrb[0].mxu0
        %1593 = vdwg.mxu0
        %v1594 = vadd.f32 %v1355, %v1591
        %v1595 = vld [vmem:[%s5] sm:$0x1]
        %v1597 = vlaneseq
        %v1598 = vshrl.u32 %v1597, 7
        %v1599 = vsub.s32 0, %v1598
        %v1600 = vrot.slane %v1595, %v1599
        %v1602 = vadd.f32 %v1594, %v1600
        %v1603 = vadd.f32 %v1602, %v542
        %v1604 = vld [vmem:[%s6] sm:$0x1]
        %v1605 = vld [vmem:[%s7] sm:$0x1]
        %v1606 = vsel %vm555, %v1603, 0.0
        %1607 = vadd.xlane.f32.xlu0 %v1606
        %v1608 = vpop.xlane.xlu0 %1607
        %v1609 = vrcp.pop 32.0
        %v1610 = vmul.f32 %v1608, %v1609
        %v1611 = vsub.f32 %v1603, %v1610
        %v1612 = vmul.f32 %v1611, %v1611
        %v1613 = vsel %vm555, %v1612, 0.0
        %1614 = vadd.xlane.f32.xlu0 %v1613
        %v1615 = vpop.xlane.xlu0 %1614
        %v1616 = vmul.f32 %v1615, %v1609
        %v1617 = vadd.f32 %v1616, 1e-05
        %v1618 = vrsqrt.pop %v1617
        %v1619 = vmul.f32 %v1611, %v1618
        %v1621 = vlaneseq
        %v1622 = vshrl.u32 %v1621, 7
        %v1623 = vsub.s32 0, %v1622
        %v1624 = vrot.slane %v1604, %v1623
        %v1626 = vmul.f32 %v1619, %v1624
        %v1628 = vlaneseq
        %v1629 = vshrl.u32 %v1628, 7
        %v1630 = vsub.s32 0, %v1629
        %v1631 = vrot.slane %v1605, %v1630
        %v1633 = vadd.f32 %v1626, %v1631
        %v1634 = vld [vmem:[%s8] sm:$0xff]
        %v1635 = vld [vmem:[%s8 + $0x8] sm:$0xff]
        %v1636 = vld [vmem:[%s8 + $0x10] sm:$0xff]
        %v1637 = vld [vmem:[%s8 + $0x18] sm:$0xff]
        %v1638 = vld [vmem:[%s9] sm:$0x1]
        %v1640 = vlaneseq
        %v1641 = vshrl.u32 %v1640, 7
        %v1642 = vsub.s32 0, %v1641
        %v1643 = vrot.slane %v1638, %v1642
        %v1646 = vsel %vm555, %v1633, 0
        %1648 = vmatprep.subr.mxu0 0.0
        %1649 = vmatpush1.msra.mxu0 %v1634
        %1650 = vmatprep.subr.mxu0 0.0
        %1651 = vmatpush1.msra.mxu0 %v1635
        %1652 = vmatprep.subr.mxu0 0.0
        %1653 = vmatpush1.msra.mxu0 %v1636
        %1654 = vmatprep.subr.mxu0 0.0
        %1655 = vmatpush1.msra.mxu0 %v1637
        %1656 = vmatprep.subr.mxu0 0.0
        %1657 = vmatpush1.msra.mxu0 0.0
        %1658 = vmatprep.subr.mxu0 0.0
        %1659 = vmatpush1.msra.mxu0 0.0
        %1660 = vmatprep.subr.mxu0 0.0
        %1661 = vmatpush1.msra.mxu0 0.0
        %1662 = vmatprep.subr.mxu0 0.0
        %1663 = vmatpush1.msra.mxu0 0.0
        %1664 = vmatprep.subr.mxu0 0.0
        %1665 = vmatpush1.msra.mxu0 0.0
        %1666 = vmatprep.subr.mxu0 0.0
        %1667 = vmatpush1.msra.mxu0 0.0
        %1668 = vmatprep.subr.mxu0 0.0
        %1669 = vmatpush1.msra.mxu0 0.0
        %1670 = vmatprep.subr.mxu0 0.0
        %1671 = vmatpush1.msra.mxu0 0.0
        %1672 = vmatprep.subr.mxu0 0.0
        %1673 = vmatpush1.msra.mxu0 0.0
        %1674 = vmatprep.subr.mxu0 0.0
        %1675 = vmatpush1.msra.mxu0 0.0
        %1676 = vmatprep.subr.mxu0 0.0
        %1677 = vmatpush1.msra.mxu0 0.0
        %1678 = vmatprep.subr.mxu0 0.0
        %1679 = vmatpush1.msra.mxu0 0.0
        %1680 = vmatprep.subr.mxu0 0.0
        %1681 = vmatpush1.msra.mxu0 0.0
        %1682 = vmatprep.subr.mxu0 0.0
        %1683 = vmatpush1.msra.mxu0 0.0
        %1684 = vmatprep.subr.mxu0 0.0
        %1685 = vmatpush1.msra.mxu0 0.0
        %1686 = vmatprep.subr.mxu0 0.0
        %1687 = vmatpush1.msra.mxu0 0.0
        %1688 = vmatprep.subr.mxu0 0.0
        %1689 = vmatpush1.msra.mxu0 0.0
        %1690 = vmatprep.subr.mxu0 0.0
        %1691 = vmatpush1.msra.mxu0 0.0
        %1692 = vmatprep.subr.mxu0 0.0
        %1693 = vmatpush1.msra.mxu0 0.0
        %1694 = vmatprep.subr.mxu0 0.0
        %1695 = vmatpush1.msra.mxu0 0.0
        %1696 = vmatprep.subr.mxu0 0.0
        %1697 = vmatpush1.msra.mxu0 0.0
        %1698 = vmatprep.subr.mxu0 0.0
        %1699 = vmatpush1.msra.mxu0 0.0
        %1700 = vmatprep.subr.mxu0 0.0
        %1701 = vmatpush1.msra.mxu0 0.0
        %1702 = vmatprep.subr.mxu0 0.0
        %1703 = vmatpush1.msra.mxu0 0.0
        %1704 = vmatprep.subr.mxu0 0.0
        %1705 = vmatpush1.msra.mxu0 0.0
        %1706 = vmatprep.subr.mxu0 0.0
        %1707 = vmatpush1.msra.mxu0 0.0
        %1708 = vmatprep.subr.mxu0 0.0
        %1709 = vmatpush1.msra.mxu0 0.0
        %1710 = vmatprep.subr.mxu0 0.0
        %1711 = vmatpush1.msra.mxu0 0.0
        %1712 = vmatprep.mubr.f32.mxu0 0.0
        %1713 = vmatmul.mubr.f32.gmra.mrb[0].mxu0 %v1646
        %v1714 = vpop.f32.mrb[0].mxu0
        %v1715 = vadd.f32 %v1643, %v1714
        %v1716 = vpop.f32.mrb[0].mxu0
        %1717 = vdwg.mxu0
        %v1718 = vmax.f32 %v1715, 0.0
        %v1719 = vld [vmem:[%s10] sm:$0xff]
        %v1720 = vld [vmem:[%s10 + $0x8] sm:$0xff]
        %v1721 = vld [vmem:[%s10 + $0x10] sm:$0xff]
        %v1722 = vld [vmem:[%s10 + $0x18] sm:$0xff]
        %v1723 = vld [vmem:[%s10 + $0x20] sm:$0xff]
        %v1724 = vld [vmem:[%s10 + $0x28] sm:$0xff]
        %v1725 = vld [vmem:[%s10 + $0x30] sm:$0xff]
        %v1726 = vld [vmem:[%s10 + $0x38] sm:$0xff]
        %v1727 = vld [vmem:[%s11] sm:$0x1]
        %v1729 = vlaneseq
        %v1730 = vshrl.u32 %v1729, 7
        %v1731 = vsub.s32 0, %v1730
        %v1732 = vrot.slane %v1727, %v1731
        %vm1734 = vcmask 523264
        %v1736 = vsel %vm1734, %v1718, 0
        %1738 = vmatprep.subr.mxu0 0.0
        %1739 = vmatpush1.msra.mxu0 %v1719
        %1740 = vmatprep.subr.mxu0 0.0
        %1741 = vmatpush1.msra.mxu0 %v1720
        %1742 = vmatprep.subr.mxu0 0.0
        %1743 = vmatpush1.msra.mxu0 %v1721
        %1744 = vmatprep.subr.mxu0 0.0
        %1745 = vmatpush1.msra.mxu0 %v1722
        %1746 = vmatprep.subr.mxu0 0.0
        %1747 = vmatpush1.msra.mxu0 %v1723
        %1748 = vmatprep.subr.mxu0 0.0
        %1749 = vmatpush1.msra.mxu0 %v1724
        %1750 = vmatprep.subr.mxu0 0.0
        %1751 = vmatpush1.msra.mxu0 %v1725
        %1752 = vmatprep.subr.mxu0 0.0
        %1753 = vmatpush1.msra.mxu0 %v1726
        %1754 = vmatprep.subr.mxu0 0.0
        %1755 = vmatpush1.msra.mxu0 0.0
        %1756 = vmatprep.subr.mxu0 0.0
        %1757 = vmatpush1.msra.mxu0 0.0
        %1758 = vmatprep.subr.mxu0 0.0
        %1759 = vmatpush1.msra.mxu0 0.0
        %1760 = vmatprep.subr.mxu0 0.0
        %1761 = vmatpush1.msra.mxu0 0.0
        %1762 = vmatprep.subr.mxu0 0.0
        %1763 = vmatpush1.msra.mxu0 0.0
        %1764 = vmatprep.subr.mxu0 0.0
        %1765 = vmatpush1.msra.mxu0 0.0
        %1766 = vmatprep.subr.mxu0 0.0
        %1767 = vmatpush1.msra.mxu0 0.0
        %1768 = vmatprep.subr.mxu0 0.0
        %1769 = vmatpush1.msra.mxu0 0.0
        %1770 = vmatprep.subr.mxu0 0.0
        %1771 = vmatpush1.msra.mxu0 0.0
        %1772 = vmatprep.subr.mxu0 0.0
        %1773 = vmatpush1.msra.mxu0 0.0
        %1774 = vmatprep.subr.mxu0 0.0
        %1775 = vmatpush1.msra.mxu0 0.0
        %1776 = vmatprep.subr.mxu0 0.0
        %1777 = vmatpush1.msra.mxu0 0.0
        %1778 = vmatprep.subr.mxu0 0.0
        %1779 = vmatpush1.msra.mxu0 0.0
        %1780 = vmatprep.subr.mxu0 0.0
        %1781 = vmatpush1.msra.mxu0 0.0
        %1782 = vmatprep.subr.mxu0 0.0
        %1783 = vmatpush1.msra.mxu0 0.0
        %1784 = vmatprep.subr.mxu0 0.0
        %1785 = vmatpush1.msra.mxu0 0.0
        %1786 = vmatprep.subr.mxu0 0.0
        %1787 = vmatpush1.msra.mxu0 0.0
        %1788 = vmatprep.subr.mxu0 0.0
        %1789 = vmatpush1.msra.mxu0 0.0
        %1790 = vmatprep.subr.mxu0 0.0
        %1791 = vmatpush1.msra.mxu0 0.0
        %1792 = vmatprep.subr.mxu0 0.0
        %1793 = vmatpush1.msra.mxu0 0.0
        %1794 = vmatprep.subr.mxu0 0.0
        %1795 = vmatpush1.msra.mxu0 0.0
        %1796 = vmatprep.subr.mxu0 0.0
        %1797 = vmatpush1.msra.mxu0 0.0
        %1798 = vmatprep.subr.mxu0 0.0
        %1799 = vmatpush1.msra.mxu0 0.0
        %1800 = vmatprep.subr.mxu0 0.0
        %1801 = vmatpush1.msra.mxu0 0.0
        %1802 = vmatprep.mubr.f32.mxu0 0.0
        %1803 = vmatmul.mubr.f32.gmra.mrb[0].mxu0 %v1736
        %v1804 = vpop.f32.mrb[0].mxu0
        %v1805 = vadd.f32 %v1732, %v1804
        %v1806 = vpop.f32.mrb[0].mxu0
        %1807 = vdwg.mxu0
        %v1808 = vadd.f32 %v1805, %v1633
        %v1809 = vld [vmem:[%s12] sm:$0x1]
        %v1810 = vld [vmem:[%s13] sm:$0x1]
        %v1811 = vsel %vm555, %v1808, 0.0
        %1812 = vadd.xlane.f32.xlu0 %v1811
        %v1813 = vpop.xlane.xlu0 %1812
        %v1814 = vmul.f32 %v1813, %v1609
        %v1815 = vsub.f32 %v1808, %v1814
        %v1816 = vmul.f32 %v1815, %v1815
        %v1817 = vsel %vm555, %v1816, 0.0
        %1818 = vadd.xlane.f32.xlu0 %v1817
        %v1819 = vpop.xlane.xlu0 %1818
        %v1820 = vmul.f32 %v1819, %v1609
        %v1821 = vadd.f32 %v1820, 1e-05
        %v1822 = vrsqrt.pop %v1821
        %v1823 = vmul.f32 %v1815, %v1822
        %v1825 = vlaneseq
        %v1826 = vshrl.u32 %v1825, 7
        %v1827 = vsub.s32 0, %v1826
        %v1828 = vrot.slane %v1809, %v1827
        %v1830 = vmul.f32 %v1823, %v1828
        %v1832 = vlaneseq
        %v1833 = vshrl.u32 %v1832, 7
        %v1834 = vsub.s32 0, %v1833
        %v1835 = vrot.slane %v1810, %v1834
        %v1837 = vadd.f32 %v1830, %v1835
        %s1838 = scalar_lea.vmem %s2, 32
        %v1839 = vld [vmem:[%s1838] sm:$0xff]
        %v1840 = vld [vmem:[%s1838 + $0x8] sm:$0xff]
        %v1841 = vld [vmem:[%s1838 + $0x10] sm:$0xff]
        %v1842 = vld [vmem:[%s1838 + $0x18] sm:$0xff]
        %s1843 = scalar_lea.vmem %s3, 1
        %v1844 = vld [vmem:[%s1843] sm:$0x1]
        %v1846 = vlaneseq
        %v1847 = vshrl.u32 %v1846, 7
        %v1848 = vsub.s32 0, %v1847
        %v1849 = vrot.slane %v1844, %v1848
        %v1852 = vsel %vm555, %v1837, 0
        %1854 = vmatprep.subr.mxu0 0.0
        %1855 = vmatpush1.msra.mxu0 %v1839
        %1856 = vmatprep.subr.mxu0 0.0
        %1857 = vmatpush1.msra.mxu0 %v1840
        %1858 = vmatprep.subr.mxu0 0.0
        %1859 = vmatpush1.msra.mxu0 %v1841
        %1860 = vmatprep.subr.mxu0 0.0
        %1861 = vmatpush1.msra.mxu0 %v1842
        %1862 = vmatprep.subr.mxu0 0.0
        %1863 = vmatpush1.msra.mxu0 0.0
        %1864 = vmatprep.subr.mxu0 0.0
        %1865 = vmatpush1.msra.mxu0 0.0
        %1866 = vmatprep.subr.mxu0 0.0
        %1867 = vmatpush1.msra.mxu0 0.0
        %1868 = vmatprep.subr.mxu0 0.0
        %1869 = vmatpush1.msra.mxu0 0.0
        %1870 = vmatprep.subr.mxu0 0.0
        %1871 = vmatpush1.msra.mxu0 0.0
        %1872 = vmatprep.subr.mxu0 0.0
        %1873 = vmatpush1.msra.mxu0 0.0
        %1874 = vmatprep.subr.mxu0 0.0
        %1875 = vmatpush1.msra.mxu0 0.0
        %1876 = vmatprep.subr.mxu0 0.0
        %1877 = vmatpush1.msra.mxu0 0.0
        %1878 = vmatprep.subr.mxu0 0.0
        %1879 = vmatpush1.msra.mxu0 0.0
        %1880 = vmatprep.subr.mxu0 0.0
        %1881 = vmatpush1.msra.mxu0 0.0
        %1882 = vmatprep.subr.mxu0 0.0
        %1883 = vmatpush1.msra.mxu0 0.0
        %1884 = vmatprep.subr.mxu0 0.0
        %1885 = vmatpush1.msra.mxu0 0.0
        %1886 = vmatprep.subr.mxu0 0.0
        %1887 = vmatpush1.msra.mxu0 0.0
        %1888 = vmatprep.subr.mxu0 0.0
        %1889 = vmatpush1.msra.mxu0 0.0
        %1890 = vmatprep.subr.mxu0 0.0
        %1891 = vmatpush1.msra.mxu0 0.0
        %1892 = vmatprep.subr.mxu0 0.0
        %1893 = vmatpush1.msra.mxu0 0.0
        %1894 = vmatprep.subr.mxu0 0.0
        %1895 = vmatpush1.msra.mxu0 0.0
        %1896 = vmatprep.subr.mxu0 0.0
        %1897 = vmatpush1.msra.mxu0 0.0
        %1898 = vmatprep.subr.mxu0 0.0
        %1899 = vmatpush1.msra.mxu0 0.0
        %1900 = vmatprep.subr.mxu0 0.0
        %1901 = vmatpush1.msra.mxu0 0.0
        %1902 = vmatprep.subr.mxu0 0.0
        %1903 = vmatpush1.msra.mxu0 0.0
        %1904 = vmatprep.subr.mxu0 0.0
        %1905 = vmatpush1.msra.mxu0 0.0
        %1906 = vmatprep.subr.mxu0 0.0
        %1907 = vmatpush1.msra.mxu0 0.0
        %1908 = vmatprep.subr.mxu0 0.0
        %1909 = vmatpush1.msra.mxu0 0.0
        %1910 = vmatprep.subr.mxu0 0.0
        %1911 = vmatpush1.msra.mxu0 0.0
        %1912 = vmatprep.subr.mxu0 0.0
        %1913 = vmatpush1.msra.mxu0 0.0
        %1914 = vmatprep.subr.mxu0 0.0
        %1915 = vmatpush1.msra.mxu0 0.0
        %1916 = vmatprep.subr.mxu0 0.0
        %1917 = vmatpush1.msra.mxu0 0.0
        %1918 = vmatprep.mubr.f32.mxu0 0.0
        %1919 = vmatmul.mubr.f32.gmra.mrb[0].mxu0 %v1852
        %v1920 = vpop.f32.mrb[0].mxu0
        %v1921 = vadd.f32 %v1849, %v1920
        %v1922 = vpop.f32.mrb[0].mxu0
        %1923 = vdwg.mxu0
        %v1924 = vmul.f32 %v1921, 0.35355338
        %s1925 = scalar_lea.vmem %s4, 32
        %v1926 = vld [vmem:[%s1925] sm:$0xff]
        %v1927 = vld [vmem:[%s1925 + $0x8] sm:$0xff]
        %v1928 = vld [vmem:[%s1925 + $0x10] sm:$0xff]
        %v1929 = vld [vmem:[%s1925 + $0x18] sm:$0xff]
        %1931 = vrot.lane.b32.xlu0 %v1921, 96
        %v1932 = vpop.permute.xlu0 %1931
        %v1934 = vsel %vm643, %v1924, 0
        %v1936 = vsel %vm643, %v1932, 0
        %1938 = vmatprep.subr.mxu0 0.0
        %1939 = vmatpush1.xpose.msra.mxu0 %v1936
        %1940 = vmatprep.subr.mxu0 0.0
        %1941 = vmatpush1.xpose.msra.mxu0 0.0
        %1942 = vmatprep.subr.mxu0 0.0
        %1943 = vmatpush1.xpose.msra.mxu0 0.0
        %1944 = vmatprep.subr.mxu0 0.0
        %1945 = vmatpush1.xpose.msra.mxu0 0.0
        %1946 = vmatprep.subr.mxu0 0.0
        %1947 = vmatpush1.xpose.msra.mxu0 0.0
        %1948 = vmatprep.subr.mxu0 0.0
        %1949 = vmatpush1.xpose.msra.mxu0 0.0
        %1950 = vmatprep.subr.mxu0 0.0
        %1951 = vmatpush1.xpose.msra.mxu0 0.0
        %1952 = vmatprep.subr.mxu0 0.0
        %1953 = vmatpush1.xpose.msra.mxu0 0.0
        %1954 = vmatprep.subr.mxu0 0.0
        %1955 = vmatpush1.xpose.msra.mxu0 0.0
        %1956 = vmatprep.subr.mxu0 0.0
        %1957 = vmatpush1.xpose.msra.mxu0 0.0
        %1958 = vmatprep.subr.mxu0 0.0
        %1959 = vmatpush1.xpose.msra.mxu0 0.0
        %1960 = vmatprep.subr.mxu0 0.0
        %1961 = vmatpush1.xpose.msra.mxu0 0.0
        %1962 = vmatprep.subr.mxu0 0.0
        %1963 = vmatpush1.xpose.msra.mxu0 0.0
        %1964 = vmatprep.subr.mxu0 0.0
        %1965 = vmatpush1.xpose.msra.mxu0 0.0
        %1966 = vmatprep.subr.mxu0 0.0
        %1967 = vmatpush1.xpose.msra.mxu0 0.0
        %1968 = vmatprep.subr.mxu0 0.0
        %1969 = vmatpush1.xpose.msra.mxu0 0.0
        %1970 = vmatprep.subr.mxu0 0.0
        %1971 = vmatpush1.xpose.msra.mxu0 0.0
        %1972 = vmatprep.subr.mxu0 0.0
        %1973 = vmatpush1.xpose.msra.mxu0 0.0
        %1974 = vmatprep.subr.mxu0 0.0
        %1975 = vmatpush1.xpose.msra.mxu0 0.0
        %1976 = vmatprep.subr.mxu0 0.0
        %1977 = vmatpush1.xpose.msra.mxu0 0.0
        %1978 = vmatprep.subr.mxu0 0.0
        %1979 = vmatpush1.xpose.msra.mxu0 0.0
        %1980 = vmatprep.subr.mxu0 0.0
        %1981 = vmatpush1.xpose.msra.mxu0 0.0
        %1982 = vmatprep.subr.mxu0 0.0
        %1983 = vmatpush1.xpose.msra.mxu0 0.0
        %1984 = vmatprep.subr.mxu0 0.0
        %1985 = vmatpush1.xpose.msra.mxu0 0.0
        %1986 = vmatprep.subr.mxu0 0.0
        %1987 = vmatpush1.xpose.msra.mxu0 0.0
        %1988 = vmatprep.subr.mxu0 0.0
        %1989 = vmatpush1.xpose.msra.mxu0 0.0
        %1990 = vmatprep.subr.mxu0 0.0
        %1991 = vmatpush1.xpose.msra.mxu0 0.0
        %1992 = vmatprep.subr.mxu0 0.0
        %1993 = vmatpush1.xpose.msra.mxu0 0.0
        %1994 = vmatprep.subr.mxu0 0.0
        %1995 = vmatpush1.xpose.msra.mxu0 0.0
        %1996 = vmatprep.subr.mxu0 0.0
        %1997 = vmatpush1.xpose.msra.mxu0 0.0
        %1998 = vmatprep.subr.mxu0 0.0
        %1999 = vmatpush1.xpose.msra.mxu0 0.0
        %2000 = vmatprep.subr.mxu0 0.0
        %2001 = vmatpush1.xpose.msra.mxu0 0.0
        %2002 = vmatprep.mubr.f32.mxu0 0.0
        %2003 = vmatmul.mubr.f32.gmra.mrb[0].mxu0 %v1934
        %v2004 = vpop.f32.mrb[0].mxu0
        %v2005 = vadd.f32 %v638, %v2004
        %v2006 = vpop.f32.mrb[0].mxu0
        %2007 = vdwg.mxu0
        %v2008 = vsel %vm643, %v2005, -inf
        %2009 = vmax.xlane.f32.xlu0 %v2008
        %v2010 = vpop.xlane.xlu0 %2009
        %v2011 = vsub.f32 %v2005, %v2010
        %v2012 = vmul.f32 %v2011, 1.442695
        %v2013 = vpow.pop %v2012
        %v2014 = vsel %vm643, %v2013, 0.0
        %2015 = vadd.xlane.f32.xlu0 %v2014
        %v2016 = vpop.xlane.xlu0 %2015
        %v2017 = vrcp.pop %v2016
        %v2018 = vmul.f32 %v2013, %v2017
        %2019 = vrot.lane.b32.xlu0 %v1921, 64
        %v2020 = vpop.permute.xlu0 %2019
        %v2023 = vsel %vm643, %v2018, 0
        %2025 = vmatprep.subr.mxu0 0.0
        %2026 = vmatpush1.msra.mxu0 %v2020
        %2027 = vmatprep.subr.mxu0 0.0
        %2028 = vmatpush1.msra.mxu0 0.0
        %2029 = vmatprep.subr.mxu0 0.0
        %2030 = vmatpush1.msra.mxu0 0.0
        %2031 = vmatprep.subr.mxu0 0.0
        %2032 = vmatpush1.msra.mxu0 0.0
        %2033 = vmatprep.subr.mxu0 0.0
        %2034 = vmatpush1.msra.mxu0 0.0
        %2035 = vmatprep.subr.mxu0 0.0
        %2036 = vmatpush1.msra.mxu0 0.0
        %2037 = vmatprep.subr.mxu0 0.0
        %2038 = vmatpush1.msra.mxu0 0.0
        %2039 = vmatprep.subr.mxu0 0.0
        %2040 = vmatpush1.msra.mxu0 0.0
        %2041 = vmatprep.subr.mxu0 0.0
        %2042 = vmatpush1.msra.mxu0 0.0
        %2043 = vmatprep.subr.mxu0 0.0
        %2044 = vmatpush1.msra.mxu0 0.0
        %2045 = vmatprep.subr.mxu0 0.0
        %2046 = vmatpush1.msra.mxu0 0.0
        %2047 = vmatprep.subr.mxu0 0.0
        %2048 = vmatpush1.msra.mxu0 0.0
        %2049 = vmatprep.subr.mxu0 0.0
        %2050 = vmatpush1.msra.mxu0 0.0
        %2051 = vmatprep.subr.mxu0 0.0
        %2052 = vmatpush1.msra.mxu0 0.0
        %2053 = vmatprep.subr.mxu0 0.0
        %2054 = vmatpush1.msra.mxu0 0.0
        %2055 = vmatprep.subr.mxu0 0.0
        %2056 = vmatpush1.msra.mxu0 0.0
        %2057 = vmatprep.subr.mxu0 0.0
        %2058 = vmatpush1.msra.mxu0 0.0
        %2059 = vmatprep.subr.mxu0 0.0
        %2060 = vmatpush1.msra.mxu0 0.0
        %2061 = vmatprep.subr.mxu0 0.0
        %2062 = vmatpush1.msra.mxu0 0.0
        %2063 = vmatprep.subr.mxu0 0.0
        %2064 = vmatpush1.msra.mxu0 0.0
        %2065 = vmatprep.subr.mxu0 0.0
        %2066 = vmatpush1.msra.mxu0 0.0
        %2067 = vmatprep.subr.mxu0 0.0
        %2068 = vmatpush1.msra.mxu0 0.0
        %2069 = vmatprep.subr.mxu0 0.0
        %2070 = vmatpush1.msra.mxu0 0.0
        %2071 = vmatprep.subr.mxu0 0.0
        %2072 = vmatpush1.msra.mxu0 0.0
        %2073 = vmatprep.subr.mxu0 0.0
        %2074 = vmatpush1.msra.mxu0 0.0
        %2075 = vmatprep.subr.mxu0 0.0
        %2076 = vmatpush1.msra.mxu0 0.0
        %2077 = vmatprep.subr.mxu0 0.0
        %2078 = vmatpush1.msra.mxu0 0.0
        %2079 = vmatprep.subr.mxu0 0.0
        %2080 = vmatpush1.msra.mxu0 0.0
        %2081 = vmatprep.subr.mxu0 0.0
        %2082 = vmatpush1.msra.mxu0 0.0
        %2083 = vmatprep.subr.mxu0 0.0
        %2084 = vmatpush1.msra.mxu0 0.0
        %2085 = vmatprep.subr.mxu0 0.0
        %2086 = vmatpush1.msra.mxu0 0.0
        %2087 = vmatprep.subr.mxu0 0.0
        %2088 = vmatpush1.msra.mxu0 0.0
        %2089 = vmatprep.mubr.f32.mxu0 0.0
        %2090 = vmatmul.mubr.f32.gmra.mrb[0].mxu0 %v2023
        %v2091 = vpop.f32.mrb[0].mxu0
        %v2092 = vadd.f32 0.0, %v2091
        %v2093 = vpop.f32.mrb[0].mxu0
        %2094 = vdwg.mxu0
        %2095 = vrot.lane.b32.xlu0 %v1924, 120
        %v2096 = vpop.permute.xlu0 %2095
        %2097 = vrot.lane.b32.xlu0 %v1921, 88
        %v2098 = vpop.permute.xlu0 %2097
        %v2099 = vsel %vm643, %v2096, 0
        %v2101 = vsel %vm643, %v2098, 0
        %2103 = vmatprep.subr.mxu0 0.0
        %2104 = vmatpush1.xpose.msra.mxu0 %v2101
        %2105 = vmatprep.subr.mxu0 0.0
        %2106 = vmatpush1.xpose.msra.mxu0 0.0
        %2107 = vmatprep.subr.mxu0 0.0
        %2108 = vmatpush1.xpose.msra.mxu0 0.0
        %2109 = vmatprep.subr.mxu0 0.0
        %2110 = vmatpush1.xpose.msra.mxu0 0.0
        %2111 = vmatprep.subr.mxu0 0.0
        %2112 = vmatpush1.xpose.msra.mxu0 0.0
        %2113 = vmatprep.subr.mxu0 0.0
        %2114 = vmatpush1.xpose.msra.mxu0 0.0
        %2115 = vmatprep.subr.mxu0 0.0
        %2116 = vmatpush1.xpose.msra.mxu0 0.0
        %2117 = vmatprep.subr.mxu0 0.0
        %2118 = vmatpush1.xpose.msra.mxu0 0.0
        %2119 = vmatprep.subr.mxu0 0.0
        %2120 = vmatpush1.xpose.msra.mxu0 0.0
        %2121 = vmatprep.subr.mxu0 0.0
        %2122 = vmatpush1.xpose.msra.mxu0 0.0
        %2123 = vmatprep.subr.mxu0 0.0
        %2124 = vmatpush1.xpose.msra.mxu0 0.0
        %2125 = vmatprep.subr.mxu0 0.0
        %2126 = vmatpush1.xpose.msra.mxu0 0.0
        %2127 = vmatprep.subr.mxu0 0.0
        %2128 = vmatpush1.xpose.msra.mxu0 0.0
        %2129 = vmatprep.subr.mxu0 0.0
        %2130 = vmatpush1.xpose.msra.mxu0 0.0
        %2131 = vmatprep.subr.mxu0 0.0
        %2132 = vmatpush1.xpose.msra.mxu0 0.0
        %2133 = vmatprep.subr.mxu0 0.0
        %2134 = vmatpush1.xpose.msra.mxu0 0.0
        %2135 = vmatprep.subr.mxu0 0.0
        %2136 = vmatpush1.xpose.msra.mxu0 0.0
        %2137 = vmatprep.subr.mxu0 0.0
        %2138 = vmatpush1.xpose.msra.mxu0 0.0
        %2139 = vmatprep.subr.mxu0 0.0
        %2140 = vmatpush1.xpose.msra.mxu0 0.0
        %2141 = vmatprep.subr.mxu0 0.0
        %2142 = vmatpush1.xpose.msra.mxu0 0.0
        %2143 = vmatprep.subr.mxu0 0.0
        %2144 = vmatpush1.xpose.msra.mxu0 0.0
        %2145 = vmatprep.subr.mxu0 0.0
        %2146 = vmatpush1.xpose.msra.mxu0 0.0
        %2147 = vmatprep.subr.mxu0 0.0
        %2148 = vmatpush1.xpose.msra.mxu0 0.0
        %2149 = vmatprep.subr.mxu0 0.0
        %2150 = vmatpush1.xpose.msra.mxu0 0.0
        %2151 = vmatprep.subr.mxu0 0.0
        %2152 = vmatpush1.xpose.msra.mxu0 0.0
        %2153 = vmatprep.subr.mxu0 0.0
        %2154 = vmatpush1.xpose.msra.mxu0 0.0
        %2155 = vmatprep.subr.mxu0 0.0
        %2156 = vmatpush1.xpose.msra.mxu0 0.0
        %2157 = vmatprep.subr.mxu0 0.0
        %2158 = vmatpush1.xpose.msra.mxu0 0.0
        %2159 = vmatprep.subr.mxu0 0.0
        %2160 = vmatpush1.xpose.msra.mxu0 0.0
        %2161 = vmatprep.subr.mxu0 0.0
        %2162 = vmatpush1.xpose.msra.mxu0 0.0
        %2163 = vmatprep.subr.mxu0 0.0
        %2164 = vmatpush1.xpose.msra.mxu0 0.0
        %2165 = vmatprep.subr.mxu0 0.0
        %2166 = vmatpush1.xpose.msra.mxu0 0.0
        %2167 = vmatprep.mubr.f32.mxu0 0.0
        %2168 = vmatmul.mubr.f32.gmra.mrb[0].mxu0 %v2099
        %v2169 = vpop.f32.mrb[0].mxu0
        %v2170 = vadd.f32 %v638, %v2169
        %v2171 = vpop.f32.mrb[0].mxu0
        %2172 = vdwg.mxu0
        %v2173 = vsel %vm643, %v2170, -inf
        %2174 = vmax.xlane.f32.xlu0 %v2173
        %v2175 = vpop.xlane.xlu0 %2174
        %v2176 = vsub.f32 %v2170, %v2175
        %v2177 = vmul.f32 %v2176, 1.442695
        %v2178 = vpow.pop %v2177
        %v2179 = vsel %vm643, %v2178, 0.0
        %2180 = vadd.xlane.f32.xlu0 %v2179
        %v2181 = vpop.xlane.xlu0 %2180
        %v2182 = vrcp.pop %v2181
        %v2183 = vmul.f32 %v2178, %v2182
        %2184 = vrot.lane.b32.xlu0 %v1921, 56
        %v2185 = vpop.permute.xlu0 %2184
        %v2188 = vsel %vm643, %v2183, 0
        %2190 = vmatprep.subr.mxu0 0.0
        %2191 = vmatpush1.msra.mxu0 %v2185
        %2192 = vmatprep.subr.mxu0 0.0
        %2193 = vmatpush1.msra.mxu0 0.0
        %2194 = vmatprep.subr.mxu0 0.0
        %2195 = vmatpush1.msra.mxu0 0.0
        %2196 = vmatprep.subr.mxu0 0.0
        %2197 = vmatpush1.msra.mxu0 0.0
        %2198 = vmatprep.subr.mxu0 0.0
        %2199 = vmatpush1.msra.mxu0 0.0
        %2200 = vmatprep.subr.mxu0 0.0
        %2201 = vmatpush1.msra.mxu0 0.0
        %2202 = vmatprep.subr.mxu0 0.0
        %2203 = vmatpush1.msra.mxu0 0.0
        %2204 = vmatprep.subr.mxu0 0.0
        %2205 = vmatpush1.msra.mxu0 0.0
        %2206 = vmatprep.subr.mxu0 0.0
        %2207 = vmatpush1.msra.mxu0 0.0
        %2208 = vmatprep.subr.mxu0 0.0
        %2209 = vmatpush1.msra.mxu0 0.0
        %2210 = vmatprep.subr.mxu0 0.0
        %2211 = vmatpush1.msra.mxu0 0.0
        %2212 = vmatprep.subr.mxu0 0.0
        %2213 = vmatpush1.msra.mxu0 0.0
        %2214 = vmatprep.subr.mxu0 0.0
        %2215 = vmatpush1.msra.mxu0 0.0
        %2216 = vmatprep.subr.mxu0 0.0
        %2217 = vmatpush1.msra.mxu0 0.0
        %2218 = vmatprep.subr.mxu0 0.0
        %2219 = vmatpush1.msra.mxu0 0.0
        %2220 = vmatprep.subr.mxu0 0.0
        %2221 = vmatpush1.msra.mxu0 0.0
        %2222 = vmatprep.subr.mxu0 0.0
        %2223 = vmatpush1.msra.mxu0 0.0
        %2224 = vmatprep.subr.mxu0 0.0
        %2225 = vmatpush1.msra.mxu0 0.0
        %2226 = vmatprep.subr.mxu0 0.0
        %2227 = vmatpush1.msra.mxu0 0.0
        %2228 = vmatprep.subr.mxu0 0.0
        %2229 = vmatpush1.msra.mxu0 0.0
        %2230 = vmatprep.subr.mxu0 0.0
        %2231 = vmatpush1.msra.mxu0 0.0
        %2232 = vmatprep.subr.mxu0 0.0
        %2233 = vmatpush1.msra.mxu0 0.0
        %2234 = vmatprep.subr.mxu0 0.0
        %2235 = vmatpush1.msra.mxu0 0.0
        %2236 = vmatprep.subr.mxu0 0.0
        %2237 = vmatpush1.msra.mxu0 0.0
        %2238 = vmatprep.subr.mxu0 0.0
        %2239 = vmatpush1.msra.mxu0 0.0
        %2240 = vmatprep.subr.mxu0 0.0
        %2241 = vmatpush1.msra.mxu0 0.0
        %2242 = vmatprep.subr.mxu0 0.0
        %2243 = vmatpush1.msra.mxu0 0.0
        %2244 = vmatprep.subr.mxu0 0.0
        %2245 = vmatpush1.msra.mxu0 0.0
        %2246 = vmatprep.subr.mxu0 0.0
        %2247 = vmatpush1.msra.mxu0 0.0
        %2248 = vmatprep.subr.mxu0 0.0
        %2249 = vmatpush1.msra.mxu0 0.0
        %2250 = vmatprep.subr.mxu0 0.0
        %2251 = vmatpush1.msra.mxu0 0.0
        %2252 = vmatprep.subr.mxu0 0.0
        %2253 = vmatpush1.msra.mxu0 0.0
        %2254 = vmatprep.mubr.f32.mxu0 0.0
        %2255 = vmatmul.mubr.f32.gmra.mrb[0].mxu0 %v2188
        %v2256 = vpop.f32.mrb[0].mxu0
        %v2257 = vadd.f32 0.0, %v2256
        %v2258 = vpop.f32.mrb[0].mxu0
        %2259 = vdwg.mxu0
        %v2261 = vsel %vm643, %v2257, 0
        %2263 = vmatprep.subr.mxu0 0.0
        %2264 = vmatpush1.msra.mxu0 %v1927
        %2265 = vmatprep.subr.mxu0 0.0
        %2266 = vmatpush1.msra.mxu0 0.0
        %2267 = vmatprep.subr.mxu0 0.0
        %2268 = vmatpush1.msra.mxu0 0.0
        %2269 = vmatprep.subr.mxu0 0.0
        %2270 = vmatpush1.msra.mxu0 0.0
        %2271 = vmatprep.subr.mxu0 0.0
        %2272 = vmatpush1.msra.mxu0 0.0
        %2273 = vmatprep.subr.mxu0 0.0
        %2274 = vmatpush1.msra.mxu0 0.0
        %2275 = vmatprep.subr.mxu0 0.0
        %2276 = vmatpush1.msra.mxu0 0.0
        %2277 = vmatprep.subr.mxu0 0.0
        %2278 = vmatpush1.msra.mxu0 0.0
        %2279 = vmatprep.subr.mxu0 0.0
        %2280 = vmatpush1.msra.mxu0 0.0
        %2281 = vmatprep.subr.mxu0 0.0
        %2282 = vmatpush1.msra.mxu0 0.0
        %2283 = vmatprep.subr.mxu0 0.0
        %2284 = vmatpush1.msra.mxu0 0.0
        %2285 = vmatprep.subr.mxu0 0.0
        %2286 = vmatpush1.msra.mxu0 0.0
        %2287 = vmatprep.subr.mxu0 0.0
        %2288 = vmatpush1.msra.mxu0 0.0
        %2289 = vmatprep.subr.mxu0 0.0
        %2290 = vmatpush1.msra.mxu0 0.0
        %2291 = vmatprep.subr.mxu0 0.0
        %2292 = vmatpush1.msra.mxu0 0.0
        %2293 = vmatprep.subr.mxu0 0.0
        %2294 = vmatpush1.msra.mxu0 0.0
        %2295 = vmatprep.subr.mxu0 0.0
        %2296 = vmatpush1.msra.mxu0 0.0
        %2297 = vmatprep.subr.mxu0 0.0
        %2298 = vmatpush1.msra.mxu0 0.0
        %2299 = vmatprep.subr.mxu0 0.0
        %2300 = vmatpush1.msra.mxu0 0.0
        %2301 = vmatprep.subr.mxu0 0.0
        %2302 = vmatpush1.msra.mxu0 0.0
        %2303 = vmatprep.subr.mxu0 0.0
        %2304 = vmatpush1.msra.mxu0 0.0
        %2305 = vmatprep.subr.mxu0 0.0
        %2306 = vmatpush1.msra.mxu0 0.0
        %2307 = vmatprep.subr.mxu0 0.0
        %2308 = vmatpush1.msra.mxu0 0.0
        %2309 = vmatprep.subr.mxu0 0.0
        %2310 = vmatpush1.msra.mxu0 0.0
        %2311 = vmatprep.subr.mxu0 0.0
        %2312 = vmatpush1.msra.mxu0 0.0
        %2313 = vmatprep.subr.mxu0 0.0
        %2314 = vmatpush1.msra.mxu0 0.0
        %2315 = vmatprep.subr.mxu0 0.0
        %2316 = vmatpush1.msra.mxu0 0.0
        %2317 = vmatprep.subr.mxu0 0.0
        %2318 = vmatpush1.msra.mxu0 0.0
        %2319 = vmatprep.subr.mxu0 0.0
        %2320 = vmatpush1.msra.mxu0 0.0
        %2321 = vmatprep.subr.mxu0 0.0
        %2322 = vmatpush1.msra.mxu0 0.0
        %2323 = vmatprep.subr.mxu0 0.0
        %2324 = vmatpush1.msra.mxu0 0.0
        %2325 = vmatprep.subr.mxu0 0.0
        %2326 = vmatpush1.msra.mxu0 0.0
        %2327 = vmatprep.mubr.f32.mxu0 0.0
        %2328 = vmatmul.mubr.f32.gmra.mrb[0].mxu0 %v2261
        %v2329 = vpop.f32.mrb[0].mxu0
        %v2330 = vadd.f32 0.0, %v2329
        %v2331 = vpop.f32.mrb[0].mxu0
        %2332 = vdwg.mxu0
        %v2334 = vsel %vm643, %v2092, 0
        %2336 = vmatprep.subr.mxu0 0.0
        %2337 = vmatpush1.msra.mxu0 %v1926
        %2338 = vmatprep.subr.mxu0 0.0
        %2339 = vmatpush1.msra.mxu0 0.0
        %2340 = vmatprep.subr.mxu0 0.0
        %2341 = vmatpush1.msra.mxu0 0.0
        %2342 = vmatprep.subr.mxu0 0.0
        %2343 = vmatpush1.msra.mxu0 0.0
        %2344 = vmatprep.subr.mxu0 0.0
        %2345 = vmatpush1.msra.mxu0 0.0
        %2346 = vmatprep.subr.mxu0 0.0
        %2347 = vmatpush1.msra.mxu0 0.0
        %2348 = vmatprep.subr.mxu0 0.0
        %2349 = vmatpush1.msra.mxu0 0.0
        %2350 = vmatprep.subr.mxu0 0.0
        %2351 = vmatpush1.msra.mxu0 0.0
        %2352 = vmatprep.subr.mxu0 0.0
        %2353 = vmatpush1.msra.mxu0 0.0
        %2354 = vmatprep.subr.mxu0 0.0
        %2355 = vmatpush1.msra.mxu0 0.0
        %2356 = vmatprep.subr.mxu0 0.0
        %2357 = vmatpush1.msra.mxu0 0.0
        %2358 = vmatprep.subr.mxu0 0.0
        %2359 = vmatpush1.msra.mxu0 0.0
        %2360 = vmatprep.subr.mxu0 0.0
        %2361 = vmatpush1.msra.mxu0 0.0
        %2362 = vmatprep.subr.mxu0 0.0
        %2363 = vmatpush1.msra.mxu0 0.0
        %2364 = vmatprep.subr.mxu0 0.0
        %2365 = vmatpush1.msra.mxu0 0.0
        %2366 = vmatprep.subr.mxu0 0.0
        %2367 = vmatpush1.msra.mxu0 0.0
        %2368 = vmatprep.subr.mxu0 0.0
        %2369 = vmatpush1.msra.mxu0 0.0
        %2370 = vmatprep.subr.mxu0 0.0
        %2371 = vmatpush1.msra.mxu0 0.0
        %2372 = vmatprep.subr.mxu0 0.0
        %2373 = vmatpush1.msra.mxu0 0.0
        %2374 = vmatprep.subr.mxu0 0.0
        %2375 = vmatpush1.msra.mxu0 0.0
        %2376 = vmatprep.subr.mxu0 0.0
        %2377 = vmatpush1.msra.mxu0 0.0
        %2378 = vmatprep.subr.mxu0 0.0
        %2379 = vmatpush1.msra.mxu0 0.0
        %2380 = vmatprep.subr.mxu0 0.0
        %2381 = vmatpush1.msra.mxu0 0.0
        %2382 = vmatprep.subr.mxu0 0.0
        %2383 = vmatpush1.msra.mxu0 0.0
        %2384 = vmatprep.subr.mxu0 0.0
        %2385 = vmatpush1.msra.mxu0 0.0
        %2386 = vmatprep.subr.mxu0 0.0
        %2387 = vmatpush1.msra.mxu0 0.0
        %2388 = vmatprep.subr.mxu0 0.0
        %2389 = vmatpush1.msra.mxu0 0.0
        %2390 = vmatprep.subr.mxu0 0.0
        %2391 = vmatpush1.msra.mxu0 0.0
        %2392 = vmatprep.subr.mxu0 0.0
        %2393 = vmatpush1.msra.mxu0 0.0
        %2394 = vmatprep.subr.mxu0 0.0
        %2395 = vmatpush1.msra.mxu0 0.0
        %2396 = vmatprep.subr.mxu0 0.0
        %2397 = vmatpush1.msra.mxu0 0.0
        %2398 = vmatprep.subr.mxu0 0.0
        %2399 = vmatpush1.msra.mxu0 0.0
        %2400 = vmatprep.mubr.f32.mxu0 0.0
        %2401 = vmatmul.mubr.f32.gmra.mrb[0].mxu0 %v2334
        %v2402 = vpop.f32.mrb[0].mxu0
        %v2403 = vadd.f32 %v2330, %v2402
        %v2404 = vpop.f32.mrb[0].mxu0
        %2405 = vdwg.mxu0
        %2406 = vrot.lane.b32.xlu0 %v1924, 112
        %v2407 = vpop.permute.xlu0 %2406
        %2408 = vrot.lane.b32.xlu0 %v1921, 80
        %v2409 = vpop.permute.xlu0 %2408
        %v2410 = vsel %vm643, %v2407, 0
        %v2412 = vsel %vm643, %v2409, 0
        %2414 = vmatprep.subr.mxu0 0.0
        %2415 = vmatpush1.xpose.msra.mxu0 %v2412
        %2416 = vmatprep.subr.mxu0 0.0
        %2417 = vmatpush1.xpose.msra.mxu0 0.0
        %2418 = vmatprep.subr.mxu0 0.0
        %2419 = vmatpush1.xpose.msra.mxu0 0.0
        %2420 = vmatprep.subr.mxu0 0.0
        %2421 = vmatpush1.xpose.msra.mxu0 0.0
        %2422 = vmatprep.subr.mxu0 0.0
        %2423 = vmatpush1.xpose.msra.mxu0 0.0
        %2424 = vmatprep.subr.mxu0 0.0
        %2425 = vmatpush1.xpose.msra.mxu0 0.0
        %2426 = vmatprep.subr.mxu0 0.0
        %2427 = vmatpush1.xpose.msra.mxu0 0.0
        %2428 = vmatprep.subr.mxu0 0.0
        %2429 = vmatpush1.xpose.msra.mxu0 0.0
        %2430 = vmatprep.subr.mxu0 0.0
        %2431 = vmatpush1.xpose.msra.mxu0 0.0
        %2432 = vmatprep.subr.mxu0 0.0
        %2433 = vmatpush1.xpose.msra.mxu0 0.0
        %2434 = vmatprep.subr.mxu0 0.0
        %2435 = vmatpush1.xpose.msra.mxu0 0.0
        %2436 = vmatprep.subr.mxu0 0.0
        %2437 = vmatpush1.xpose.msra.mxu0 0.0
        %2438 = vmatprep.subr.mxu0 0.0
        %2439 = vmatpush1.xpose.msra.mxu0 0.0
        %2440 = vmatprep.subr.mxu0 0.0
        %2441 = vmatpush1.xpose.msra.mxu0 0.0
        %2442 = vmatprep.subr.mxu0 0.0
        %2443 = vmatpush1.xpose.msra.mxu0 0.0
        %2444 = vmatprep.subr.mxu0 0.0
        %2445 = vmatpush1.xpose.msra.mxu0 0.0
        %2446 = vmatprep.subr.mxu0 0.0
        %2447 = vmatpush1.xpose.msra.mxu0 0.0
        %2448 = vmatprep.subr.mxu0 0.0
        %2449 = vmatpush1.xpose.msra.mxu0 0.0
        %2450 = vmatprep.subr.mxu0 0.0
        %2451 = vmatpush1.xpose.msra.mxu0 0.0
        %2452 = vmatprep.subr.mxu0 0.0
        %2453 = vmatpush1.xpose.msra.mxu0 0.0
        %2454 = vmatprep.subr.mxu0 0.0
        %2455 = vmatpush1.xpose.msra.mxu0 0.0
        %2456 = vmatprep.subr.mxu0 0.0
        %2457 = vmatpush1.xpose.msra.mxu0 0.0
        %2458 = vmatprep.subr.mxu0 0.0
        %2459 = vmatpush1.xpose.msra.mxu0 0.0
        %2460 = vmatprep.subr.mxu0 0.0
        %2461 = vmatpush1.xpose.msra.mxu0 0.0
        %2462 = vmatprep.subr.mxu0 0.0
        %2463 = vmatpush1.xpose.msra.mxu0 0.0
        %2464 = vmatprep.subr.mxu0 0.0
        %2465 = vmatpush1.xpose.msra.mxu0 0.0
        %2466 = vmatprep.subr.mxu0 0.0
        %2467 = vmatpush1.xpose.msra.mxu0 0.0
        %2468 = vmatprep.subr.mxu0 0.0
        %2469 = vmatpush1.xpose.msra.mxu0 0.0
        %2470 = vmatprep.subr.mxu0 0.0
        %2471 = vmatpush1.xpose.msra.mxu0 0.0
        %2472 = vmatprep.subr.mxu0 0.0
        %2473 = vmatpush1.xpose.msra.mxu0 0.0
        %2474 = vmatprep.subr.mxu0 0.0
        %2475 = vmatpush1.xpose.msra.mxu0 0.0
        %2476 = vmatprep.subr.mxu0 0.0
        %2477 = vmatpush1.xpose.msra.mxu0 0.0
        %2478 = vmatprep.mubr.f32.mxu0 0.0
        %2479 = vmatmul.mubr.f32.gmra.mrb[0].mxu0 %v2410
        %v2480 = vpop.f32.mrb[0].mxu0
        %v2481 = vadd.f32 %v638, %v2480
        %v2482 = vpop.f32.mrb[0].mxu0
        %2483 = vdwg.mxu0
        %v2484 = vsel %vm643, %v2481, -inf
        %2485 = vmax.xlane.f32.xlu0 %v2484
        %v2486 = vpop.xlane.xlu0 %2485
        %v2487 = vsub.f32 %v2481, %v2486
        %v2488 = vmul.f32 %v2487, 1.442695
        %v2489 = vpow.pop %v2488
        %v2490 = vsel %vm643, %v2489, 0.0
        %2491 = vadd.xlane.f32.xlu0 %v2490
        %v2492 = vpop.xlane.xlu0 %2491
        %v2493 = vrcp.pop %v2492
        %v2494 = vmul.f32 %v2489, %v2493
        %2495 = vrot.lane.b32.xlu0 %v1921, 48
        %v2496 = vpop.permute.xlu0 %2495
        %v2499 = vsel %vm643, %v2494, 0
        %2501 = vmatprep.subr.mxu0 0.0
        %2502 = vmatpush1.msra.mxu0 %v2496
        %2503 = vmatprep.subr.mxu0 0.0
        %2504 = vmatpush1.msra.mxu0 0.0
        %2505 = vmatprep.subr.mxu0 0.0
        %2506 = vmatpush1.msra.mxu0 0.0
        %2507 = vmatprep.subr.mxu0 0.0
        %2508 = vmatpush1.msra.mxu0 0.0
        %2509 = vmatprep.subr.mxu0 0.0
        %2510 = vmatpush1.msra.mxu0 0.0
        %2511 = vmatprep.subr.mxu0 0.0
        %2512 = vmatpush1.msra.mxu0 0.0
        %2513 = vmatprep.subr.mxu0 0.0
        %2514 = vmatpush1.msra.mxu0 0.0
        %2515 = vmatprep.subr.mxu0 0.0
        %2516 = vmatpush1.msra.mxu0 0.0
        %2517 = vmatprep.subr.mxu0 0.0
        %2518 = vmatpush1.msra.mxu0 0.0
        %2519 = vmatprep.subr.mxu0 0.0
        %2520 = vmatpush1.msra.mxu0 0.0
        %2521 = vmatprep.subr.mxu0 0.0
        %2522 = vmatpush1.msra.mxu0 0.0
        %2523 = vmatprep.subr.mxu0 0.0
        %2524 = vmatpush1.msra.mxu0 0.0
        %2525 = vmatprep.subr.mxu0 0.0
        %2526 = vmatpush1.msra.mxu0 0.0
        %2527 = vmatprep.subr.mxu0 0.0
        %2528 = vmatpush1.msra.mxu0 0.0
        %2529 = vmatprep.subr.mxu0 0.0
        %2530 = vmatpush1.msra.mxu0 0.0
        %2531 = vmatprep.subr.mxu0 0.0
        %2532 = vmatpush1.msra.mxu0 0.0
        %2533 = vmatprep.subr.mxu0 0.0
        %2534 = vmatpush1.msra.mxu0 0.0
        %2535 = vmatprep.subr.mxu0 0.0
        %2536 = vmatpush1.msra.mxu0 0.0
        %2537 = vmatprep.subr.mxu0 0.0
        %2538 = vmatpush1.msra.mxu0 0.0
        %2539 = vmatprep.subr.mxu0 0.0
        %2540 = vmatpush1.msra.mxu0 0.0
        %2541 = vmatprep.subr.mxu0 0.0
        %2542 = vmatpush1.msra.mxu0 0.0
        %2543 = vmatprep.subr.mxu0 0.0
        %2544 = vmatpush1.msra.mxu0 0.0
        %2545 = vmatprep.subr.mxu0 0.0
        %2546 = vmatpush1.msra.mxu0 0.0
        %2547 = vmatprep.subr.mxu0 0.0
        %2548 = vmatpush1.msra.mxu0 0.0
        %2549 = vmatprep.subr.mxu0 0.0
        %2550 = vmatpush1.msra.mxu0 0.0
        %2551 = vmatprep.subr.mxu0 0.0
        %2552 = vmatpush1.msra.mxu0 0.0
        %2553 = vmatprep.subr.mxu0 0.0
        %2554 = vmatpush1.msra.mxu0 0.0
        %2555 = vmatprep.subr.mxu0 0.0
        %2556 = vmatpush1.msra.mxu0 0.0
        %2557 = vmatprep.subr.mxu0 0.0
        %2558 = vmatpush1.msra.mxu0 0.0
        %2559 = vmatprep.subr.mxu0 0.0
        %2560 = vmatpush1.msra.mxu0 0.0
        %2561 = vmatprep.subr.mxu0 0.0
        %2562 = vmatpush1.msra.mxu0 0.0
        %2563 = vmatprep.subr.mxu0 0.0
        %2564 = vmatpush1.msra.mxu0 0.0
        %2565 = vmatprep.mubr.f32.mxu0 0.0
        %2566 = vmatmul.mubr.f32.gmra.mrb[0].mxu0 %v2499
        %v2567 = vpop.f32.mrb[0].mxu0
        %v2568 = vadd.f32 0.0, %v2567
        %v2569 = vpop.f32.mrb[0].mxu0
        %2570 = vdwg.mxu0
        %v2572 = vsel %vm643, %v2568, 0
        %2574 = vmatprep.subr.mxu0 0.0
        %2575 = vmatpush1.msra.mxu0 %v1928
        %2576 = vmatprep.subr.mxu0 0.0
        %2577 = vmatpush1.msra.mxu0 0.0
        %2578 = vmatprep.subr.mxu0 0.0
        %2579 = vmatpush1.msra.mxu0 0.0
        %2580 = vmatprep.subr.mxu0 0.0
        %2581 = vmatpush1.msra.mxu0 0.0
        %2582 = vmatprep.subr.mxu0 0.0
        %2583 = vmatpush1.msra.mxu0 0.0
        %2584 = vmatprep.subr.mxu0 0.0
        %2585 = vmatpush1.msra.mxu0 0.0
        %2586 = vmatprep.subr.mxu0 0.0
        %2587 = vmatpush1.msra.mxu0 0.0
        %2588 = vmatprep.subr.mxu0 0.0
        %2589 = vmatpush1.msra.mxu0 0.0
        %2590 = vmatprep.subr.mxu0 0.0
        %2591 = vmatpush1.msra.mxu0 0.0
        %2592 = vmatprep.subr.mxu0 0.0
        %2593 = vmatpush1.msra.mxu0 0.0
        %2594 = vmatprep.subr.mxu0 0.0
        %2595 = vmatpush1.msra.mxu0 0.0
        %2596 = vmatprep.subr.mxu0 0.0
        %2597 = vmatpush1.msra.mxu0 0.0
        %2598 = vmatprep.subr.mxu0 0.0
        %2599 = vmatpush1.msra.mxu0 0.0
        %2600 = vmatprep.subr.mxu0 0.0
        %2601 = vmatpush1.msra.mxu0 0.0
        %2602 = vmatprep.subr.mxu0 0.0
        %2603 = vmatpush1.msra.mxu0 0.0
        %2604 = vmatprep.subr.mxu0 0.0
        %2605 = vmatpush1.msra.mxu0 0.0
        %2606 = vmatprep.subr.mxu0 0.0
        %2607 = vmatpush1.msra.mxu0 0.0
        %2608 = vmatprep.subr.mxu0 0.0
        %2609 = vmatpush1.msra.mxu0 0.0
        %2610 = vmatprep.subr.mxu0 0.0
        %2611 = vmatpush1.msra.mxu0 0.0
        %2612 = vmatprep.subr.mxu0 0.0
        %2613 = vmatpush1.msra.mxu0 0.0
        %2614 = vmatprep.subr.mxu0 0.0
        %2615 = vmatpush1.msra.mxu0 0.0
        %2616 = vmatprep.subr.mxu0 0.0
        %2617 = vmatpush1.msra.mxu0 0.0
        %2618 = vmatprep.subr.mxu0 0.0
        %2619 = vmatpush1.msra.mxu0 0.0
        %2620 = vmatprep.subr.mxu0 0.0
        %2621 = vmatpush1.msra.mxu0 0.0
        %2622 = vmatprep.subr.mxu0 0.0
        %2623 = vmatpush1.msra.mxu0 0.0
        %2624 = vmatprep.subr.mxu0 0.0
        %2625 = vmatpush1.msra.mxu0 0.0
        %2626 = vmatprep.subr.mxu0 0.0
        %2627 = vmatpush1.msra.mxu0 0.0
        %2628 = vmatprep.subr.mxu0 0.0
        %2629 = vmatpush1.msra.mxu0 0.0
        %2630 = vmatprep.subr.mxu0 0.0
        %2631 = vmatpush1.msra.mxu0 0.0
        %2632 = vmatprep.subr.mxu0 0.0
        %2633 = vmatpush1.msra.mxu0 0.0
        %2634 = vmatprep.subr.mxu0 0.0
        %2635 = vmatpush1.msra.mxu0 0.0
        %2636 = vmatprep.subr.mxu0 0.0
        %2637 = vmatpush1.msra.mxu0 0.0
        %2638 = vmatprep.mubr.f32.mxu0 0.0
        %2639 = vmatmul.mubr.f32.gmra.mrb[0].mxu0 %v2572
        %v2640 = vpop.f32.mrb[0].mxu0
        %v2641 = vadd.f32 0.0, %v2640
        %v2642 = vpop.f32.mrb[0].mxu0
        %2643 = vdwg.mxu0
        %v2644 = vadd.f32 %v2403, %v2641
        %2645 = vrot.lane.b32.xlu0 %v1924, 104
        %v2646 = vpop.permute.xlu0 %2645
        %2647 = vrot.lane.b32.xlu0 %v1921, 72
        %v2648 = vpop.permute.xlu0 %2647
        %v2649 = vsel %vm643, %v2646, 0
        %v2651 = vsel %vm643, %v2648, 0
        %2653 = vmatprep.subr.mxu0 0.0
        %2654 = vmatpush1.xpose.msra.mxu0 %v2651
        %2655 = vmatprep.subr.mxu0 0.0
        %2656 = vmatpush1.xpose.msra.mxu0 0.0
        %2657 = vmatprep.subr.mxu0 0.0
        %2658 = vmatpush1.xpose.msra.mxu0 0.0
        %2659 = vmatprep.subr.mxu0 0.0
        %2660 = vmatpush1.xpose.msra.mxu0 0.0
        %2661 = vmatprep.subr.mxu0 0.0
        %2662 = vmatpush1.xpose.msra.mxu0 0.0
        %2663 = vmatprep.subr.mxu0 0.0
        %2664 = vmatpush1.xpose.msra.mxu0 0.0
        %2665 = vmatprep.subr.mxu0 0.0
        %2666 = vmatpush1.xpose.msra.mxu0 0.0
        %2667 = vmatprep.subr.mxu0 0.0
        %2668 = vmatpush1.xpose.msra.mxu0 0.0
        %2669 = vmatprep.subr.mxu0 0.0
        %2670 = vmatpush1.xpose.msra.mxu0 0.0
        %2671 = vmatprep.subr.mxu0 0.0
        %2672 = vmatpush1.xpose.msra.mxu0 0.0
        %2673 = vmatprep.subr.mxu0 0.0
        %2674 = vmatpush1.xpose.msra.mxu0 0.0
        %2675 = vmatprep.subr.mxu0 0.0
        %2676 = vmatpush1.xpose.msra.mxu0 0.0
        %2677 = vmatprep.subr.mxu0 0.0
        %2678 = vmatpush1.xpose.msra.mxu0 0.0
        %2679 = vmatprep.subr.mxu0 0.0
        %2680 = vmatpush1.xpose.msra.mxu0 0.0
        %2681 = vmatprep.subr.mxu0 0.0
        %2682 = vmatpush1.xpose.msra.mxu0 0.0
        %2683 = vmatprep.subr.mxu0 0.0
        %2684 = vmatpush1.xpose.msra.mxu0 0.0
        %2685 = vmatprep.subr.mxu0 0.0
        %2686 = vmatpush1.xpose.msra.mxu0 0.0
        %2687 = vmatprep.subr.mxu0 0.0
        %2688 = vmatpush1.xpose.msra.mxu0 0.0
        %2689 = vmatprep.subr.mxu0 0.0
        %2690 = vmatpush1.xpose.msra.mxu0 0.0
        %2691 = vmatprep.subr.mxu0 0.0
        %2692 = vmatpush1.xpose.msra.mxu0 0.0
        %2693 = vmatprep.subr.mxu0 0.0
        %2694 = vmatpush1.xpose.msra.mxu0 0.0
        %2695 = vmatprep.subr.mxu0 0.0
        %2696 = vmatpush1.xpose.msra.mxu0 0.0
        %2697 = vmatprep.subr.mxu0 0.0
        %2698 = vmatpush1.xpose.msra.mxu0 0.0
        %2699 = vmatprep.subr.mxu0 0.0
        %2700 = vmatpush1.xpose.msra.mxu0 0.0
        %2701 = vmatprep.subr.mxu0 0.0
        %2702 = vmatpush1.xpose.msra.mxu0 0.0
        %2703 = vmatprep.subr.mxu0 0.0
        %2704 = vmatpush1.xpose.msra.mxu0 0.0
        %2705 = vmatprep.subr.mxu0 0.0
        %2706 = vmatpush1.xpose.msra.mxu0 0.0
        %2707 = vmatprep.subr.mxu0 0.0
        %2708 = vmatpush1.xpose.msra.mxu0 0.0
        %2709 = vmatprep.subr.mxu0 0.0
        %2710 = vmatpush1.xpose.msra.mxu0 0.0
        %2711 = vmatprep.subr.mxu0 0.0
        %2712 = vmatpush1.xpose.msra.mxu0 0.0
        %2713 = vmatprep.subr.mxu0 0.0
        %2714 = vmatpush1.xpose.msra.mxu0 0.0
        %2715 = vmatprep.subr.mxu0 0.0
        %2716 = vmatpush1.xpose.msra.mxu0 0.0
        %2717 = vmatprep.mubr.f32.mxu0 0.0
        %2718 = vmatmul.mubr.f32.gmra.mrb[0].mxu0 %v2649
        %v2719 = vpop.f32.mrb[0].mxu0
        %v2720 = vadd.f32 %v638, %v2719
        %v2721 = vpop.f32.mrb[0].mxu0
        %2722 = vdwg.mxu0
        %v2723 = vsel %vm643, %v2720, -inf
        %2724 = vmax.xlane.f32.xlu0 %v2723
        %v2725 = vpop.xlane.xlu0 %2724
        %v2726 = vsub.f32 %v2720, %v2725
        %v2727 = vmul.f32 %v2726, 1.442695
        %v2728 = vpow.pop %v2727
        %v2729 = vsel %vm643, %v2728, 0.0
        %2730 = vadd.xlane.f32.xlu0 %v2729
        %v2731 = vpop.xlane.xlu0 %2730
        %v2732 = vrcp.pop %v2731
        %v2733 = vmul.f32 %v2728, %v2732
        %2734 = vrot.lane.b32.xlu0 %v1921, 40
        %v2735 = vpop.permute.xlu0 %2734
        %v2738 = vsel %vm643, %v2733, 0
        %2740 = vmatprep.subr.mxu0 0.0
        %2741 = vmatpush1.msra.mxu0 %v2735
        %2742 = vmatprep.subr.mxu0 0.0
        %2743 = vmatpush1.msra.mxu0 0.0
        %2744 = vmatprep.subr.mxu0 0.0
        %2745 = vmatpush1.msra.mxu0 0.0
        %2746 = vmatprep.subr.mxu0 0.0
        %2747 = vmatpush1.msra.mxu0 0.0
        %2748 = vmatprep.subr.mxu0 0.0
        %2749 = vmatpush1.msra.mxu0 0.0
        %2750 = vmatprep.subr.mxu0 0.0
        %2751 = vmatpush1.msra.mxu0 0.0
        %2752 = vmatprep.subr.mxu0 0.0
        %2753 = vmatpush1.msra.mxu0 0.0
        %2754 = vmatprep.subr.mxu0 0.0
        %2755 = vmatpush1.msra.mxu0 0.0
        %2756 = vmatprep.subr.mxu0 0.0
        %2757 = vmatpush1.msra.mxu0 0.0
        %2758 = vmatprep.subr.mxu0 0.0
        %2759 = vmatpush1.msra.mxu0 0.0
        %2760 = vmatprep.subr.mxu0 0.0
        %2761 = vmatpush1.msra.mxu0 0.0
        %2762 = vmatprep.subr.mxu0 0.0
        %2763 = vmatpush1.msra.mxu0 0.0
        %2764 = vmatprep.subr.mxu0 0.0
        %2765 = vmatpush1.msra.mxu0 0.0
        %2766 = vmatprep.subr.mxu0 0.0
        %2767 = vmatpush1.msra.mxu0 0.0
        %2768 = vmatprep.subr.mxu0 0.0
        %2769 = vmatpush1.msra.mxu0 0.0
        %2770 = vmatprep.subr.mxu0 0.0
        %2771 = vmatpush1.msra.mxu0 0.0
        %2772 = vmatprep.subr.mxu0 0.0
        %2773 = vmatpush1.msra.mxu0 0.0
        %2774 = vmatprep.subr.mxu0 0.0
        %2775 = vmatpush1.msra.mxu0 0.0
        %2776 = vmatprep.subr.mxu0 0.0
        %2777 = vmatpush1.msra.mxu0 0.0
        %2778 = vmatprep.subr.mxu0 0.0
        %2779 = vmatpush1.msra.mxu0 0.0
        %2780 = vmatprep.subr.mxu0 0.0
        %2781 = vmatpush1.msra.mxu0 0.0
        %2782 = vmatprep.subr.mxu0 0.0
        %2783 = vmatpush1.msra.mxu0 0.0
        %2784 = vmatprep.subr.mxu0 0.0
        %2785 = vmatpush1.msra.mxu0 0.0
        %2786 = vmatprep.subr.mxu0 0.0
        %2787 = vmatpush1.msra.mxu0 0.0
        %2788 = vmatprep.subr.mxu0 0.0
        %2789 = vmatpush1.msra.mxu0 0.0
        %2790 = vmatprep.subr.mxu0 0.0
        %2791 = vmatpush1.msra.mxu0 0.0
        %2792 = vmatprep.subr.mxu0 0.0
        %2793 = vmatpush1.msra.mxu0 0.0
        %2794 = vmatprep.subr.mxu0 0.0
        %2795 = vmatpush1.msra.mxu0 0.0
        %2796 = vmatprep.subr.mxu0 0.0
        %2797 = vmatpush1.msra.mxu0 0.0
        %2798 = vmatprep.subr.mxu0 0.0
        %2799 = vmatpush1.msra.mxu0 0.0
        %2800 = vmatprep.subr.mxu0 0.0
        %2801 = vmatpush1.msra.mxu0 0.0
        %2802 = vmatprep.subr.mxu0 0.0
        %2803 = vmatpush1.msra.mxu0 0.0
        %2804 = vmatprep.mubr.f32.mxu0 0.0
        %2805 = vmatmul.mubr.f32.gmra.mrb[0].mxu0 %v2738
        %v2806 = vpop.f32.mrb[0].mxu0
        %v2807 = vadd.f32 0.0, %v2806
        %v2808 = vpop.f32.mrb[0].mxu0
        %2809 = vdwg.mxu0
        %v2811 = vsel %vm643, %v2807, 0
        %2813 = vmatprep.subr.mxu0 0.0
        %2814 = vmatpush1.msra.mxu0 %v1929
        %2815 = vmatprep.subr.mxu0 0.0
        %2816 = vmatpush1.msra.mxu0 0.0
        %2817 = vmatprep.subr.mxu0 0.0
        %2818 = vmatpush1.msra.mxu0 0.0
        %2819 = vmatprep.subr.mxu0 0.0
        %2820 = vmatpush1.msra.mxu0 0.0
        %2821 = vmatprep.subr.mxu0 0.0
        %2822 = vmatpush1.msra.mxu0 0.0
        %2823 = vmatprep.subr.mxu0 0.0
        %2824 = vmatpush1.msra.mxu0 0.0
        %2825 = vmatprep.subr.mxu0 0.0
        %2826 = vmatpush1.msra.mxu0 0.0
        %2827 = vmatprep.subr.mxu0 0.0
        %2828 = vmatpush1.msra.mxu0 0.0
        %2829 = vmatprep.subr.mxu0 0.0
        %2830 = vmatpush1.msra.mxu0 0.0
        %2831 = vmatprep.subr.mxu0 0.0
        %2832 = vmatpush1.msra.mxu0 0.0
        %2833 = vmatprep.subr.mxu0 0.0
        %2834 = vmatpush1.msra.mxu0 0.0
        %2835 = vmatprep.subr.mxu0 0.0
        %2836 = vmatpush1.msra.mxu0 0.0
        %2837 = vmatprep.subr.mxu0 0.0
        %2838 = vmatpush1.msra.mxu0 0.0
        %2839 = vmatprep.subr.mxu0 0.0
        %2840 = vmatpush1.msra.mxu0 0.0
        %2841 = vmatprep.subr.mxu0 0.0
        %2842 = vmatpush1.msra.mxu0 0.0
        %2843 = vmatprep.subr.mxu0 0.0
        %2844 = vmatpush1.msra.mxu0 0.0
        %2845 = vmatprep.subr.mxu0 0.0
        %2846 = vmatpush1.msra.mxu0 0.0
        %2847 = vmatprep.subr.mxu0 0.0
        %2848 = vmatpush1.msra.mxu0 0.0
        %2849 = vmatprep.subr.mxu0 0.0
        %2850 = vmatpush1.msra.mxu0 0.0
        %2851 = vmatprep.subr.mxu0 0.0
        %2852 = vmatpush1.msra.mxu0 0.0
        %2853 = vmatprep.subr.mxu0 0.0
        %2854 = vmatpush1.msra.mxu0 0.0
        %2855 = vmatprep.subr.mxu0 0.0
        %2856 = vmatpush1.msra.mxu0 0.0
        %2857 = vmatprep.subr.mxu0 0.0
        %2858 = vmatpush1.msra.mxu0 0.0
        %2859 = vmatprep.subr.mxu0 0.0
        %2860 = vmatpush1.msra.mxu0 0.0
        %2861 = vmatprep.subr.mxu0 0.0
        %2862 = vmatpush1.msra.mxu0 0.0
        %2863 = vmatprep.subr.mxu0 0.0
        %2864 = vmatpush1.msra.mxu0 0.0
        %2865 = vmatprep.subr.mxu0 0.0
        %2866 = vmatpush1.msra.mxu0 0.0
        %2867 = vmatprep.subr.mxu0 0.0
        %2868 = vmatpush1.msra.mxu0 0.0
        %2869 = vmatprep.subr.mxu0 0.0
        %2870 = vmatpush1.msra.mxu0 0.0
        %2871 = vmatprep.subr.mxu0 0.0
        %2872 = vmatpush1.msra.mxu0 0.0
        %2873 = vmatprep.subr.mxu0 0.0
        %2874 = vmatpush1.msra.mxu0 0.0
        %2875 = vmatprep.subr.mxu0 0.0
        %2876 = vmatpush1.msra.mxu0 0.0
        %2877 = vmatprep.mubr.f32.mxu0 0.0
        %2878 = vmatmul.mubr.f32.gmra.mrb[0].mxu0 %v2811
        %v2879 = vpop.f32.mrb[0].mxu0
        %v2880 = vadd.f32 0.0, %v2879
        %v2881 = vpop.f32.mrb[0].mxu0
        %2882 = vdwg.mxu0
        %v2883 = vadd.f32 %v2644, %v2880
        %s2884 = scalar_lea.vmem %s5, 1
        %v2885 = vld [vmem:[%s2884] sm:$0x1]
        %v2887 = vlaneseq
        %v2888 = vshrl.u32 %v2887, 7
        %v2889 = vsub.s32 0, %v2888
        %v2890 = vrot.slane %v2885, %v2889
        %v2892 = vadd.f32 %v2883, %v2890
        %v2893 = vadd.f32 %v2892, %v1837
        %s2894 = scalar_lea.vmem %s6, 1
        %v2895 = vld [vmem:[%s2894] sm:$0x1]
        %s2896 = scalar_lea.vmem %s7, 1
        %v2897 = vld [vmem:[%s2896] sm:$0x1]
        %v2898 = vsel %vm555, %v2893, 0.0
        %2899 = vadd.xlane.f32.xlu0 %v2898
        %v2900 = vpop.xlane.xlu0 %2899
        %v2901 = vmul.f32 %v2900, %v1609
        %v2902 = vsub.f32 %v2893, %v2901
        %v2903 = vmul.f32 %v2902, %v2902
        %v2904 = vsel %vm555, %v2903, 0.0
        %2905 = vadd.xlane.f32.xlu0 %v2904
        %v2906 = vpop.xlane.xlu0 %2905
        %v2907 = vmul.f32 %v2906, %v1609
        %v2908 = vadd.f32 %v2907, 1e-05
        %v2909 = vrsqrt.pop %v2908
        %v2910 = vmul.f32 %v2902, %v2909
        %v2912 = vlaneseq
        %v2913 = vshrl.u32 %v2912, 7
        %v2914 = vsub.s32 0, %v2913
        %v2915 = vrot.slane %v2895, %v2914
        %v2917 = vmul.f32 %v2910, %v2915
        %v2919 = vlaneseq
        %v2920 = vshrl.u32 %v2919, 7
        %v2921 = vsub.s32 0, %v2920
        %v2922 = vrot.slane %v2897, %v2921
        %v2924 = vadd.f32 %v2917, %v2922
        %s2925 = scalar_lea.vmem %s8, 32
        %v2926 = vld [vmem:[%s2925] sm:$0xff]
        %v2927 = vld [vmem:[%s2925 + $0x8] sm:$0xff]
        %v2928 = vld [vmem:[%s2925 + $0x10] sm:$0xff]
        %v2929 = vld [vmem:[%s2925 + $0x18] sm:$0xff]
        %s2930 = scalar_lea.vmem %s9, 1
        %v2931 = vld [vmem:[%s2930] sm:$0x1]
        %v2933 = vlaneseq
        %v2934 = vshrl.u32 %v2933, 7
        %v2935 = vsub.s32 0, %v2934
        %v2936 = vrot.slane %v2931, %v2935
        %v2939 = vsel %vm555, %v2924, 0
        %2941 = vmatprep.subr.mxu0 0.0
        %2942 = vmatpush1.msra.mxu0 %v2926
        %2943 = vmatprep.subr.mxu0 0.0
        %2944 = vmatpush1.msra.mxu0 %v2927
        %2945 = vmatprep.subr.mxu0 0.0
        %2946 = vmatpush1.msra.mxu0 %v2928
        %2947 = vmatprep.subr.mxu0 0.0
        %2948 = vmatpush1.msra.mxu0 %v2929
        %2949 = vmatprep.subr.mxu0 0.0
        %2950 = vmatpush1.msra.mxu0 0.0
        %2951 = vmatprep.subr.mxu0 0.0
        %2952 = vmatpush1.msra.mxu0 0.0
        %2953 = vmatprep.subr.mxu0 0.0
        %2954 = vmatpush1.msra.mxu0 0.0
        %2955 = vmatprep.subr.mxu0 0.0
        %2956 = vmatpush1.msra.mxu0 0.0
        %2957 = vmatprep.subr.mxu0 0.0
        %2958 = vmatpush1.msra.mxu0 0.0
        %2959 = vmatprep.subr.mxu0 0.0
        %2960 = vmatpush1.msra.mxu0 0.0
        %2961 = vmatprep.subr.mxu0 0.0
        %2962 = vmatpush1.msra.mxu0 0.0
        %2963 = vmatprep.subr.mxu0 0.0
        %2964 = vmatpush1.msra.mxu0 0.0
        %2965 = vmatprep.subr.mxu0 0.0
        %2966 = vmatpush1.msra.mxu0 0.0
        %2967 = vmatprep.subr.mxu0 0.0
        %2968 = vmatpush1.msra.mxu0 0.0
        %2969 = vmatprep.subr.mxu0 0.0
        %2970 = vmatpush1.msra.mxu0 0.0
        %2971 = vmatprep.subr.mxu0 0.0
        %2972 = vmatpush1.msra.mxu0 0.0
        %2973 = vmatprep.subr.mxu0 0.0
        %2974 = vmatpush1.msra.mxu0 0.0
        %2975 = vmatprep.subr.mxu0 0.0
        %2976 = vmatpush1.msra.mxu0 0.0
        %2977 = vmatprep.subr.mxu0 0.0
        %2978 = vmatpush1.msra.mxu0 0.0
        %2979 = vmatprep.subr.mxu0 0.0
        %2980 = vmatpush1.msra.mxu0 0.0
        %2981 = vmatprep.subr.mxu0 0.0
        %2982 = vmatpush1.msra.mxu0 0.0
        %2983 = vmatprep.subr.mxu0 0.0
        %2984 = vmatpush1.msra.mxu0 0.0
        %2985 = vmatprep.subr.mxu0 0.0
        %2986 = vmatpush1.msra.mxu0 0.0
        %2987 = vmatprep.subr.mxu0 0.0
        %2988 = vmatpush1.msra.mxu0 0.0
        %2989 = vmatprep.subr.mxu0 0.0
        %2990 = vmatpush1.msra.mxu0 0.0
        %2991 = vmatprep.subr.mxu0 0.0
        %2992 = vmatpush1.msra.mxu0 0.0
        %2993 = vmatprep.subr.mxu0 0.0
        %2994 = vmatpush1.msra.mxu0 0.0
        %2995 = vmatprep.subr.mxu0 0.0
        %2996 = vmatpush1.msra.mxu0 0.0
        %2997 = vmatprep.subr.mxu0 0.0
        %2998 = vmatpush1.msra.mxu0 0.0
        %2999 = vmatprep.subr.mxu0 0.0
        %3000 = vmatpush1.msra.mxu0 0.0
        %3001 = vmatprep.subr.mxu0 0.0
        %3002 = vmatpush1.msra.mxu0 0.0
        %3003 = vmatprep.subr.mxu0 0.0
        %3004 = vmatpush1.msra.mxu0 0.0
        %3005 = vmatprep.mubr.f32.mxu0 0.0
        %3006 = vmatmul.mubr.f32.gmra.mrb[0].mxu0 %v2939
        %v3007 = vpop.f32.mrb[0].mxu0
        %v3008 = vadd.f32 %v2936, %v3007
        %v3009 = vpop.f32.mrb[0].mxu0
        %3010 = vdwg.mxu0
        %v3011 = vmax.f32 %v3008, 0.0
        %s3012 = scalar_lea.vmem %s10, 64
        %v3013 = vld [vmem:[%s3012] sm:$0xff]
        %v3014 = vld [vmem:[%s3012 + $0x8] sm:$0xff]
        %v3015 = vld [vmem:[%s3012 + $0x10] sm:$0xff]
        %v3016 = vld [vmem:[%s3012 + $0x18] sm:$0xff]
        %v3017 = vld [vmem:[%s3012 + $0x20] sm:$0xff]
        %v3018 = vld [vmem:[%s3012 + $0x28] sm:$0xff]
        %v3019 = vld [vmem:[%s3012 + $0x30] sm:$0xff]
        %v3020 = vld [vmem:[%s3012 + $0x38] sm:$0xff]
        %s3021 = scalar_lea.vmem %s11, 1
        %v3022 = vld [vmem:[%s3021] sm:$0x1]
        %v3024 = vlaneseq
        %v3025 = vshrl.u32 %v3024, 7
        %v3026 = vsub.s32 0, %v3025
        %v3027 = vrot.slane %v3022, %v3026
        %v3030 = vsel %vm1734, %v3011, 0
        %3032 = vmatprep.subr.mxu0 0.0
        %3033 = vmatpush1.msra.mxu0 %v3013
        %3034 = vmatprep.subr.mxu0 0.0
        %3035 = vmatpush1.msra.mxu0 %v3014
        %3036 = vmatprep.subr.mxu0 0.0
        %3037 = vmatpush1.msra.mxu0 %v3015
        %3038 = vmatprep.subr.mxu0 0.0
        %3039 = vmatpush1.msra.mxu0 %v3016
        %3040 = vmatprep.subr.mxu0 0.0
        %3041 = vmatpush1.msra.mxu0 %v3017
        %3042 = vmatprep.subr.mxu0 0.0
        %3043 = vmatpush1.msra.mxu0 %v3018
        %3044 = vmatprep.subr.mxu0 0.0
        %3045 = vmatpush1.msra.mxu0 %v3019
        %3046 = vmatprep.subr.mxu0 0.0
        %3047 = vmatpush1.msra.mxu0 %v3020
        %3048 = vmatprep.subr.mxu0 0.0
        %3049 = vmatpush1.msra.mxu0 0.0
        %3050 = vmatprep.subr.mxu0 0.0
        %3051 = vmatpush1.msra.mxu0 0.0
        %3052 = vmatprep.subr.mxu0 0.0
        %3053 = vmatpush1.msra.mxu0 0.0
        %3054 = vmatprep.subr.mxu0 0.0
        %3055 = vmatpush1.msra.mxu0 0.0
        %3056 = vmatprep.subr.mxu0 0.0
        %3057 = vmatpush1.msra.mxu0 0.0
        %3058 = vmatprep.subr.mxu0 0.0
        %3059 = vmatpush1.msra.mxu0 0.0
        %3060 = vmatprep.subr.mxu0 0.0
        %3061 = vmatpush1.msra.mxu0 0.0
        %3062 = vmatprep.subr.mxu0 0.0
        %3063 = vmatpush1.msra.mxu0 0.0
        %3064 = vmatprep.subr.mxu0 0.0
        %3065 = vmatpush1.msra.mxu0 0.0
        %3066 = vmatprep.subr.mxu0 0.0
        %3067 = vmatpush1.msra.mxu0 0.0
        %3068 = vmatprep.subr.mxu0 0.0
        %3069 = vmatpush1.msra.mxu0 0.0
        %3070 = vmatprep.subr.mxu0 0.0
        %3071 = vmatpush1.msra.mxu0 0.0
        %3072 = vmatprep.subr.mxu0 0.0
        %3073 = vmatpush1.msra.mxu0 0.0
        %3074 = vmatprep.subr.mxu0 0.0
        %3075 = vmatpush1.msra.mxu0 0.0
        %3076 = vmatprep.subr.mxu0 0.0
        %3077 = vmatpush1.msra.mxu0 0.0
        %3078 = vmatprep.subr.mxu0 0.0
        %3079 = vmatpush1.msra.mxu0 0.0
        %3080 = vmatprep.subr.mxu0 0.0
        %3081 = vmatpush1.msra.mxu0 0.0
        %3082 = vmatprep.subr.mxu0 0.0
        %3083 = vmatpush1.msra.mxu0 0.0
        %3084 = vmatprep.subr.mxu0 0.0
        %3085 = vmatpush1.msra.mxu0 0.0
        %3086 = vmatprep.subr.mxu0 0.0
        %3087 = vmatpush1.msra.mxu0 0.0
        %3088 = vmatprep.subr.mxu0 0.0
        %3089 = vmatpush1.msra.mxu0 0.0
        %3090 = vmatprep.subr.mxu0 0.0
        %3091 = vmatpush1.msra.mxu0 0.0
        %3092 = vmatprep.subr.mxu0 0.0
        %3093 = vmatpush1.msra.mxu0 0.0
        %3094 = vmatprep.subr.mxu0 0.0
        %3095 = vmatpush1.msra.mxu0 0.0
        %3096 = vmatprep.mubr.f32.mxu0 0.0
        %3097 = vmatmul.mubr.f32.gmra.mrb[0].mxu0 %v3030
        %v3098 = vpop.f32.mrb[0].mxu0
        %v3099 = vadd.f32 %v3027, %v3098
        %v3100 = vpop.f32.mrb[0].mxu0
        %3101 = vdwg.mxu0
        %v3102 = vadd.f32 %v3099, %v2924
        %s3103 = scalar_lea.vmem %s12, 1
        %v3104 = vld [vmem:[%s3103] sm:$0x1]
        %s3105 = scalar_lea.vmem %s13, 1
        %v3106 = vld [vmem:[%s3105] sm:$0x1]
        %v3107 = vsel %vm555, %v3102, 0.0
        %3108 = vadd.xlane.f32.xlu0 %v3107
        %v3109 = vpop.xlane.xlu0 %3108
        %v3110 = vmul.f32 %v3109, %v1609
        %v3111 = vsub.f32 %v3102, %v3110
        %v3112 = vmul.f32 %v3111, %v3111
        %v3113 = vsel %vm555, %v3112, 0.0
        %3114 = vadd.xlane.f32.xlu0 %v3113
        %v3115 = vpop.xlane.xlu0 %3114
        %v3116 = vmul.f32 %v3115, %v1609
        %v3117 = vadd.f32 %v3116, 1e-05
        %v3118 = vrsqrt.pop %v3117
        %v3119 = vmul.f32 %v3111, %v3118
        %v3121 = vlaneseq
        %v3122 = vshrl.u32 %v3121, 7
        %v3123 = vsub.s32 0, %v3122
        %v3124 = vrot.slane %v3104, %v3123
        %v3126 = vmul.f32 %v3119, %v3124
        %v3128 = vlaneseq
        %v3129 = vshrl.u32 %v3128, 7
        %v3130 = vsub.s32 0, %v3129
        %v3131 = vrot.slane %v3106, %v3130
        %v3133 = vadd.f32 %v3126, %v3131
        %3134 = vst.msk [vmem:[%s527] sm:$0xff] %vm555, %v3133
        %v3135 = vld [vmem:[%s14] sm:$0xff]
        %v3136 = vld [vmem:[%s14 + $0x8] sm:$0xff]
        %v3137 = vld [vmem:[%s14 + $0x10] sm:$0xff]
        %v3138 = vld [vmem:[%s14 + $0x18] sm:$0xff]
        %v3140 = vsel %vm555, %v3133, 0
        %3142 = vmatprep.subr.mxu0 0.0
        %3143 = vmatpush1.msra.mxu0 %v3135
        %3144 = vmatprep.subr.mxu0 0.0
        %3145 = vmatpush1.msra.mxu0 %v3136
        %3146 = vmatprep.subr.mxu0 0.0
        %3147 = vmatpush1.msra.mxu0 %v3137
        %3148 = vmatprep.subr.mxu0 0.0
        %3149 = vmatpush1.msra.mxu0 %v3138
        %3150 = vmatprep.subr.mxu0 0.0
        %3151 = vmatpush1.msra.mxu0 0.0
        %3152 = vmatprep.subr.mxu0 0.0
        %3153 = vmatpush1.msra.mxu0 0.0
        %3154 = vmatprep.subr.mxu0 0.0
        %3155 = vmatpush1.msra.mxu0 0.0
        %3156 = vmatprep.subr.mxu0 0.0
        %3157 = vmatpush1.msra.mxu0 0.0
        %3158 = vmatprep.subr.mxu0 0.0
        %3159 = vmatpush1.msra.mxu0 0.0
        %3160 = vmatprep.subr.mxu0 0.0
        %3161 = vmatpush1.msra.mxu0 0.0
        %3162 = vmatprep.subr.mxu0 0.0
        %3163 = vmatpush1.msra.mxu0 0.0
        %3164 = vmatprep.subr.mxu0 0.0
        %3165 = vmatpush1.msra.mxu0 0.0
        %3166 = vmatprep.subr.mxu0 0.0
        %3167 = vmatpush1.msra.mxu0 0.0
        %3168 = vmatprep.subr.mxu0 0.0
        %3169 = vmatpush1.msra.mxu0 0.0
        %3170 = vmatprep.subr.mxu0 0.0
        %3171 = vmatpush1.msra.mxu0 0.0
        %3172 = vmatprep.subr.mxu0 0.0
        %3173 = vmatpush1.msra.mxu0 0.0
        %3174 = vmatprep.subr.mxu0 0.0
        %3175 = vmatpush1.msra.mxu0 0.0
        %3176 = vmatprep.subr.mxu0 0.0
        %3177 = vmatpush1.msra.mxu0 0.0
        %3178 = vmatprep.subr.mxu0 0.0
        %3179 = vmatpush1.msra.mxu0 0.0
        %3180 = vmatprep.subr.mxu0 0.0
        %3181 = vmatpush1.msra.mxu0 0.0
        %3182 = vmatprep.subr.mxu0 0.0
        %3183 = vmatpush1.msra.mxu0 0.0
        %3184 = vmatprep.subr.mxu0 0.0
        %3185 = vmatpush1.msra.mxu0 0.0
        %3186 = vmatprep.subr.mxu0 0.0
        %3187 = vmatpush1.msra.mxu0 0.0
        %3188 = vmatprep.subr.mxu0 0.0
        %3189 = vmatpush1.msra.mxu0 0.0
        %3190 = vmatprep.subr.mxu0 0.0
        %3191 = vmatpush1.msra.mxu0 0.0
        %3192 = vmatprep.subr.mxu0 0.0
        %3193 = vmatpush1.msra.mxu0 0.0
        %3194 = vmatprep.subr.mxu0 0.0
        %3195 = vmatpush1.msra.mxu0 0.0
        %3196 = vmatprep.subr.mxu0 0.0
        %3197 = vmatpush1.msra.mxu0 0.0
        %3198 = vmatprep.subr.mxu0 0.0
        %3199 = vmatpush1.msra.mxu0 0.0
        %3200 = vmatprep.subr.mxu0 0.0
        %3201 = vmatpush1.msra.mxu0 0.0
        %3202 = vmatprep.subr.mxu0 0.0
        %3203 = vmatpush1.msra.mxu0 0.0
        %3204 = vmatprep.subr.mxu0 0.0
        %3205 = vmatpush1.msra.mxu0 0.0
        %3206 = vmatprep.mubr.f32.mxu0 0.0
        %3207 = vmatmul.mubr.f32.gmra.mrb[0].mxu0 %v3140
        %v3208 = vpop.f32.mrb[0].mxu0
        %v3209 = vadd.f32 0.0, %v3208
        %v3210 = vpop.f32.mrb[0].mxu0
        %3211 = vdwg.mxu0
        %3212 = vst.msk [vmem:[%s534] sm:$0xff] %vm555, %v3209
        %s3213 = sand.u32 %s367, 1
        %s3214 = scalar_lea.sflag [#allocation3], %s3213
        %s3215 = sand.u32 %s367, 1
        %s3216 = smul.addr %s3215, 8
        %s3217 = scalar_lea.vmem [#allocation2], %s3216
        %s3218 = sand.u32 %s393, 1
        %s3219 = scalar_lea.sflag [#allocation5], %s3218
        %s3220 = sand.u32 %s393, 1
        %s3221 = smul.addr %s3220, 8
        %s3222 = scalar_lea.vmem [#allocation4], %s3221
        // Predicated region
        $region81: #{pointer_encoder_forward.1} parent=79 // pred_check
          %p3223 = pneg %p377
        $region82: #{pointer_encoder_forward.1} parent=79 // pred_check_branch
          %3225 = sbr.rel (%p3223) target = $region84
        $region83: #{pointer_encoder_forward.1} parent=79 // pred_region
          %s3227 = ssub.s32 128, 128
          %3228 = vsyncadd %s3214, %s3227
          %s3229 = smul.addr %s34, 128
          %s3230 = scalar_lea.hbm %s15, %s3229
          %s3232 = sshll.u32 %s3217, 4
          %s3233 = int_to_ptr.vmem [resolvable:$true] %s3232
          %3235 = dma.vmem_to_hbm [thread:$0]  %s3233, 128, %s3230, %s3214
        $region84: #{pointer_encoder_forward.1} parent=79 // pred_fallthru
          _
        // Predicated region
        $region85: #{pointer_encoder_forward.1} parent=79 // pred_check
          %p3236 = pneg %p403
        $region86: #{pointer_encoder_forward.1} parent=79 // pred_check_branch
          %3238 = sbr.rel (%p3236) target = $region88
        $region87: #{pointer_encoder_forward.1} parent=79 // pred_region
          %s3240 = ssub.s32 128, 128
          %3241 = vsyncadd %s3219, %s3240
          %s3242 = smul.addr %s34, 128
          %s3243 = scalar_lea.hbm %s16, %s3242
          %s3245 = sshll.u32 %s3222, 4
          %s3246 = int_to_ptr.vmem [resolvable:$true] %s3245
          %3248 = dma.vmem_to_hbm [thread:$0]  %s3246, 128, %s3243, %s3219
        $region88: #{pointer_encoder_forward.1} parent=79 // pred_fallthru
          _
      $region80: #{pointer_encoder_forward.1} parent=5 // pred_fallthru
        _
      %p3249 = scmp.le.s32.totalorder 2, %s29
      // Predicated region
      $region89: #{pointer_encoder_forward.1} parent=5 // pred_check
        %p3250 = pneg %p3249
      $region90: #{pointer_encoder_forward.1} parent=5 // pred_check_branch
        %3252 = sbr.rel (%p3250) target = $region92
      $region91: #{pointer_encoder_forward.1} parent=5 // pred_region
        %s3253 = ssub.s32 %s29, 2
        // Predicated region
        $region93: #{pointer_encoder_forward.1} parent=91 // pred_check
          %p3254 = pneg %p383
        $region94: #{pointer_encoder_forward.1} parent=91 // pred_check_branch
          %3256 = sbr.rel (%p3254) target = $region96
        $region95: #{pointer_encoder_forward.1} parent=91 // pred_region
          %s3257 = sand.u32 %s368, 1
          %s3258 = scalar_lea.sflag [#allocation3], %s3257
          %s3259 = sand.u32 %s368, 1
          %s3260 = smul.addr %s3259, 8
          %s3261 = scalar_lea.vmem [#allocation2], %s3260
          %3262 = dma.done %s3258, 128
        $region96: #{pointer_encoder_forward.1} parent=91 // pred_fallthru
          _
        // Predicated region
        $region97: #{pointer_encoder_forward.1} parent=91 // pred_check
          %p3263 = pneg %p409
        $region98: #{pointer_encoder_forward.1} parent=91 // pred_check_branch
          %3265 = sbr.rel (%p3263) target = $region100
        $region99: #{pointer_encoder_forward.1} parent=91 // pred_region
          %s3266 = sand.u32 %s394, 1
          %s3267 = scalar_lea.sflag [#allocation5], %s3266
          %s3268 = sand.u32 %s394, 1
          %s3269 = smul.addr %s3268, 8
          %s3270 = scalar_lea.vmem [#allocation4], %s3269
          %3271 = dma.done %s3267, 128
        $region100: #{pointer_encoder_forward.1} parent=91 // pred_fallthru
          _
      $region92: #{pointer_encoder_forward.1} parent=5 // pred_fallthru
        _
    $region6: #{pointer_encoder_forward.1} parent=1 // loop_footer
      %s33 = sadd.s32 1, %s29
    $region7: #{pointer_encoder_forward.1} parent=1 // loop_footer_branch
      %28 = sbr.rel target = $region3
    $region8: #{pointer_encoder_forward.1} parent=1 // loop_exit
      _
    %3272 = vsyncpa [#allocation3], 1
    %s3273 = scalar_lea.sflag [#allocation3], 1
    %3274 = vsyncpa %s3273, 1
    %3275 = vsyncpa [#allocation5], 1
    %s3276 = scalar_lea.sflag [#allocation5], 1
    %3277 = vsyncpa %s3276, 1

</llo_original>
